<compile_context>
chip_gen: v7x
topology: tpu7x:2x2x1
jax: 0.10.0
libtpu: 0.0.40
codegen_flags: <defaults>
</compile_context>

<pallas_src>
import functools

import jax
import jax.numpy as jnp
from jax.experimental import pallas as pl
from jax.experimental.pallas import tpu as pltpu

_LANE = 128
_SUBLANE = 8


def _round_up(x, m):
    return (x + m - 1) // m * m


# -----------------------------------------------------------------------------
# Fused kernel: all GRU layers + ReLU + Linear
# -----------------------------------------------------------------------------
def fused_gru_fc_kernel(*args, num_layers, hidden_pad):
    """Fully fused GRU stack + final ReLU + Linear.

    Positional refs (from pallas_call):
      x_ref                     (T, Bp, D)     time-major, batch-padded, bf16
      per layer l in [0, L):
        wih_ref                 (D_l, 3Hp)     bf16, gate cols [r|z|n], 128-aligned
        whh_ref                 (Hp, 3Hp)      bf16
        bi_ref                  (1, 3Hp)       f32, bih + [bhh_r, bhh_z, 0] folded
        bhn_ref                 (1, Hp)        f32, bhh_n (scaled by r inside tanh)
      fc_w_ref                  (Hp, O)        bf16
      fc_b_ref                  (1, O)         f32
      o_ref                     (Bp, O)        f32 output logits
      gi_scratch                (T, Bp, 3Hp)   VMEM bf16: precomputed gate inputs
      seq_scratch               (T, Bp, Hp)    VMEM bf16: current layer's output seq
    """
    Hp = hidden_pad
    L = num_layers

    x_ref = args[0]
    layer_refs = args[1:1 + 4 * L]
    fc_w_ref = args[1 + 4 * L]
    fc_b_ref = args[2 + 4 * L]
    o_ref = args[3 + 4 * L]
    gi_scratch = args[4 + 4 * L]
    seq_scratch = args[5 + 4 * L]

    T, Bp, _ = x_ref.shape

    h_last = jnp.zeros((Bp, Hp), jnp.float32)
    for l in range(L):
        wih_ref, whh_ref, bi_ref, bhn_ref = layer_refs[4 * l:4 * l + 4]

        # Layer input: original x for layer 0, previous layer's output
        # (VMEM resident, bf16) for later layers.
        seq_in = x_ref[...] if l == 0 else seq_scratch[...]
        d_in = seq_in.shape[-1]

        # Hoisted input projection: one bf16 MXU matmul covering all timesteps,
        # f32 accumulation; result stored bf16 (only feeds adds into sigmoid/tanh).
        gi = jnp.dot(seq_in.reshape(T * Bp, d_in), wih_ref[...],
                     preferred_element_type=jnp.float32) + bi_ref[...]
        gi_scratch[...] = gi.reshape(T, Bp, 3 * Hp).astype(gi_scratch.dtype)

        whh = whh_ref[...]          # bf16 (Hp, 3Hp)
        b_hn = bhn_ref[...]         # f32  (1, Hp)
        write_seq = (l < L - 1)     # last layer's per-step outputs never read

        def step(t, h, _whh=whh, _b_hn=b_hn, _write_seq=write_seq):
            gh = jnp.dot(h.astype(_whh.dtype), _whh,
                         preferred_element_type=jnp.float32)       # (Bp, 3Hp)
            gi_t = gi_scratch[t].astype(jnp.float32)                # (Bp, 3Hp)
            # Gate slices are 128-lane aligned (whole-vreg slices).
            r = jax.nn.sigmoid(gi_t[:, :Hp] + gh[:, :Hp])
            z = jax.nn.sigmoid(gi_t[:, Hp:2 * Hp] + gh[:, Hp:2 * Hp])
            n = jnp.tanh(gi_t[:, 2 * Hp:] + r * (gh[:, 2 * Hp:] + _b_hn))
            h_new = (1.0 - z) * n + z * h
            if _write_seq:
                seq_scratch[t] = h_new.astype(seq_scratch.dtype)
            return h_new

        unroll = True if T <= 16 else 8
        h_last = jax.lax.fori_loop(0, T, step,
                                   jnp.zeros((Bp, Hp), jnp.float32),
                                   unroll=unroll)

    # Final ReLU + Linear on the last timestep's hidden state (fused in).
    hr = jnp.maximum(h_last, 0.0).astype(fc_w_ref.dtype)
    o_ref[...] = (jnp.dot(hr, fc_w_ref[...],
                          preferred_element_type=jnp.float32)
                  + fc_b_ref[...]).astype(o_ref.dtype)


# -----------------------------------------------------------------------------
# Wrapper
# -----------------------------------------------------------------------------
def _full_block_spec(shape):
    # Full-array block; index_map ignores (non-existent) grid indices.
    return pl.BlockSpec(shape, lambda *_: (0,) * len(shape))


@jax.jit
def gru_model_forward(x, packed):
    """Equivalent of GRUModel.forward (inference, no dropout)."""
    B, T, _ = x.shape
    layers = packed["layers"]
    L = len(layers)
    Hp = layers[0]["whh_t"].shape[0]
    O = packed["fc_w_t"].shape[-1]
    Bp = _round_up(B, _SUBLANE)

    # Pad batch to 8 sublanes, go time-major, feed the MXU bf16.
    # TODO(synk): for large T*B*D fold this reorder/cast into a T-chunked DMA
    # pipeline instead of an extra XLA pass over HBM.
    x_p = jnp.pad(x, ((0, Bp - B), (0, 0), (0, 0)))
    x_tm = jnp.transpose(x_p, (1, 0, 2)).astype(jnp.bfloat16)

    operands = [x_tm]
    for lyr in layers:
        operands += [lyr["wih_t"], lyr["whh_t"], lyr["b_i"], lyr["b_hn"]]
    operands += [packed["fc_w_t"], packed["fc_b"]]

    in_specs = [_full_block_spec(op.shape) for op in operands]

    # VMEM budget: resident operands + bf16 scratches + headroom (no grid, so
    # no input double-buffering).
    scratch_bytes = T * Bp * 3 * Hp * 2 + T * Bp * Hp * 2
    operand_bytes = sum(op.size * op.dtype.itemsize for op in operands)
    vmem_limit = max(32 * 1024 * 1024,
                     min(2 * (operand_bytes + scratch_bytes) + (4 << 20),
                         96 * 1024 * 1024))

    kernel = functools.partial(fused_gru_fc_kernel,
                               num_layers=L, hidden_pad=Hp)

    out = pl.pallas_call(
        kernel,
        out_shape=jax.ShapeDtypeStruct((Bp, O), jnp.float32),
        in_specs=in_specs,
        out_specs=_full_block_spec((Bp, O)),
        scratch_shapes=[
            pltpu.VMEM((T, Bp, 3 * Hp), jnp.bfloat16),  # precomputed gate inputs
            pltpu.VMEM((T, Bp, Hp), jnp.bfloat16),      # layer output sequence
        ],
        compiler_params=pltpu.CompilerParams(vmem_limit_bytes=vmem_limit),
    )(*operands)
    return out[:B]


# -----------------------------------------------------------------------------
# Deterministic parameter init (mirrors nn.GRU / nn.Linear shapes, f32)
# -----------------------------------------------------------------------------
def init_params(key, input_size, hidden_size, num_layers, output_size):
    H = hidden_size
    params = {"gru_layers": []}
    for l in range(num_layers):
        D = input_size if l == 0 else H
        key, k1, k2, k3, k4 = jax.random.split(key, 5)
        scale = 1.0 / jnp.sqrt(H)
        # PyTorch layout: weight_ih_l{l}: (3H, D), weight_hh_l{l}: (3H, H),
        # biases (3H,), gate row-block order [r, z, n].
        wih = jax.random.uniform(k1, (3 * H, D), jnp.float32, -scale, scale)
        whh = jax.random.uniform(k2, (3 * H, H), jnp.float32, -scale, scale)
        bih = jax.random.uniform(k3, (3 * H,), jnp.float32, -scale, scale)
        bhh = jax.random.uniform(k4, (3 * H,), jnp.float32, -scale, scale)
        # Fold bhh_r / bhh_z into the input-side bias; keep b_hn separate
        # since it is multiplied by r inside tanh.
        b_i = bih + jnp.concatenate(
            [bhh[:H], bhh[H:2 * H], jnp.zeros((H,), jnp.float32)])
        params["gru_layers"].append({
            "wih_t": wih.T,                       # (D, 3H), gate cols [r|z|n]
            "whh_t": whh.T,                       # (H, 3H)
            "b_i": b_i.reshape(1, 3 * H),
            "b_hn": bhh[2 * H:].reshape(1, H),
        })
    key, k1, k2 = jax.random.split(key, 3)
    scale = 1.0 / jnp.sqrt(H)
    fc_w = jax.random.uniform(k1, (output_size, H), jnp.float32, -scale, scale)
    fc_b = jax.random.uniform(k2, (output_size,), jnp.float32, -scale, scale)
    params["fc_w_t"] = fc_w.T                     # (H, O)
    params["fc_b"] = fc_b.reshape(1, output_size)
    return params


# -----------------------------------------------------------------------------
# Pack params for the kernel: 128-lane-aligned gates, Hp rows, bf16 MXU weights
# -----------------------------------------------------------------------------
def _pad_gate_cols(w, H, Hp):
    # w: (rows, 3H) gate cols [r|z|n] -> (rows, 3Hp), each gate block starts on
    # a 128-lane boundary, zero-padded.
    rows = w.shape[0]
    out = jnp.zeros((rows, 3 * Hp), w.dtype)
    for g in range(3):
        out = out.at[:, g * Hp:g * Hp + H].set(w[:, g * H:(g + 1) * H])
    return out


def _pad_rows(w, rows_p):
    return jnp.pad(w, ((0, rows_p - w.shape[0]), (0, 0)))


def pack_params(params):
    layers = params["gru_layers"]
    H = layers[0]["whh_t"].shape[0]
    Hp = _round_up(H, _LANE)
    packed = {"layers": []}
    for l, lyr in enumerate(layers):
        wih = _pad_gate_cols(lyr["wih_t"], H, Hp)
        if l > 0:
            wih = _pad_rows(wih, Hp)   # layer input (prev output) has Hp lanes
        whh = _pad_rows(_pad_gate_cols(lyr["whh_t"], H, Hp), Hp)
        b_i = _pad_gate_cols(lyr["b_i"], H, Hp)
        b_hn = jnp.pad(lyr["b_hn"], ((0, 0), (0, Hp - H)))
        packed["layers"].append({
            "wih_t": wih.astype(jnp.bfloat16),
            "whh_t": whh.astype(jnp.bfloat16),
            "b_i": b_i.astype(jnp.float32),
            "b_hn": b_hn.astype(jnp.float32),
        })
    packed["fc_w_t"] = _pad_rows(params["fc_w_t"], Hp).astype(jnp.bfloat16)
    packed["fc_b"] = params["fc_b"].astype(jnp.float32)
    return packed


# -----------------------------------------------------------------------------
# Pure-JAX f32 reference (unpadded params) for validation
# -----------------------------------------------------------------------------
def gru_model_reference(x, params):
    B = x.shape[0]
    seq = jnp.transpose(x, (1, 0, 2))             # (T, B, D)
    for lyr in params["gru_layers"]:
        H = lyr["whh_t"].shape[0]
        h = jnp.zeros((B, H), jnp.float32)
        outs = []
        for t in range(seq.shape[0]):
            gi = seq[t] @ lyr["wih_t"] + lyr["b_i"]
            gh = h @ lyr["whh_t"]
            r = jax.nn.sigmoid(gi[:, :H] + gh[:, :H])
            z = jax.nn.sigmoid(gi[:, H:2 * H] + gh[:, H:2 * H])
            n = jnp.tanh(gi[:, 2 * H:] + r * (gh[:, 2 * H:] + lyr["b_hn"]))
            h = (1.0 - z) * n + z * h
            outs.append(h)
        seq = jnp.stack(outs, axis=0)
    hr = jnp.maximum(seq[-1], 0.0)
    return hr @ params["fc_w_t"] + params["fc_b"]


# -----------------------------------------------------------------------------
if __name__ == "__main__":
    B, T = 2, 8
    input_size, hidden_size, num_layers, output_size = 16, 32, 2, 4

    key = jax.random.PRNGKey(0)
    kx, kp = jax.random.split(key)
    x = jax.random.normal(kx, (B, T, input_size), jnp.float32)
    params = init_params(kp, input_size, hidden_size, num_layers, output_size)
    packed = pack_params(params)

    out = gru_model_forward(x, packed)
    jax.block_until_ready(out)
    assert out.shape == (B, output_size), out.shape

    ref = gru_model_reference(x, params)
    max_diff = float(jnp.max(jnp.abs(out - ref)))
    # bf16 MXU inputs (f32 accumulation) -> widened tolerance vs. f32 reference.
    assert jnp.allclose(out, ref, atol=2e-2, rtol=2e-2), ("max abs diff", max_diff)
    print("KERNEL_OK")
</pallas_src>

<mosaic_0001>
module attributes {stable_mosaic.version = 11 : i64} {
  func.func @fused_gru_fc_kernel(%arg0: memref<8x8x16xbf16, #tpu.memory_space<vmem>>, %arg1: memref<16x384xbf16, #tpu.memory_space<vmem>>, %arg2: memref<128x384xbf16, #tpu.memory_space<vmem>>, %arg3: memref<1x384xf32, #tpu.memory_space<vmem>>, %arg4: memref<1x128xf32, #tpu.memory_space<vmem>>, %arg5: memref<128x384xbf16, #tpu.memory_space<vmem>>, %arg6: memref<128x384xbf16, #tpu.memory_space<vmem>>, %arg7: memref<1x384xf32, #tpu.memory_space<vmem>>, %arg8: memref<1x128xf32, #tpu.memory_space<vmem>>, %arg9: memref<128x4xbf16, #tpu.memory_space<vmem>>, %arg10: memref<1x4xf32, #tpu.memory_space<vmem>>, %arg11: memref<8x4xf32, #tpu.memory_space<vmem>>, %arg12: memref<8x8x384xbf16, #tpu.memory_space<vmem>>, %arg13: memref<8x8x128xbf16, #tpu.memory_space<vmem>>) attributes {dimension_semantics = [], scalar_prefetch = 0 : i64, scratch_operands = 2 : i64, tpu.core_type = #tpu.core_type<tc>} {
    %c0 = arith.constant 0 : index
    %c0_0 = arith.constant 0 : index
    %c0_1 = arith.constant 0 : index
    %0 = vector.load %arg0[%c0, %c0_0, %c0_1] : memref<8x8x16xbf16, #tpu.memory_space<vmem>>, vector<8x8x16xbf16>
    %1 = vector.shape_cast %0 : vector<8x8x16xbf16> to vector<64x16xbf16>
    %c0_2 = arith.constant 0 : index
    %c0_3 = arith.constant 0 : index
    %2 = vector.load %arg1[%c0_2, %c0_3] : memref<16x384xbf16, #tpu.memory_space<vmem>>, vector<16x384xbf16>
    %cst = arith.constant dense<0.000000e+00> : vector<64x384xf32>
    %3 = tpu.matmul %1, %2, %cst {dimension_numbers = #tpu.dot_dimension_numbers<[1], [0], [0], [1], [0, 0, 1, 1], [], []>} : vector<64x16xbf16>, vector<16x384xbf16>, vector<64x384xf32> -> vector<64x384xf32>
    %c0_4 = arith.constant 0 : index
    %c0_5 = arith.constant 0 : index
    %4 = vector.load %arg3[%c0_4, %c0_5] : memref<1x384xf32, #tpu.memory_space<vmem>>, vector<1x384xf32>
    %5 = vector.broadcast %4 : vector<1x384xf32> to vector<64x384xf32>
    %6 = arith.addf %3, %5 : vector<64x384xf32>
    %7 = vector.shape_cast %6 : vector<64x384xf32> to vector<8x8x384xf32>
    %8 = arith.truncf %7 : vector<8x8x384xf32> to vector<8x8x384xbf16>
    %c0_6 = arith.constant 0 : index
    %c0_7 = arith.constant 0 : index
    %c0_8 = arith.constant 0 : index
    %9 = vector.load %arg12[%c0_6, %c0_7, %c0_8] : memref<8x8x384xbf16, #tpu.memory_space<vmem>>, vector<8x8x384xbf16>
    tpu.vector_store %arg12[%c0_6, %c0_7, %c0_8], %8 {strides = array<i32>} : memref<8x8x384xbf16, #tpu.memory_space<vmem>>, vector<8x8x384xbf16>,
    %c0_9 = arith.constant 0 : index
    %c0_10 = arith.constant 0 : index
    %10 = vector.load %arg2[%c0_9, %c0_10] : memref<128x384xbf16, #tpu.memory_space<vmem>>, vector<128x384xbf16>
    %c0_11 = arith.constant 0 : index
    %c0_12 = arith.constant 0 : index
    %11 = vector.load %arg4[%c0_11, %c0_12] : memref<1x128xf32, #tpu.memory_space<vmem>>, vector<1x128xf32>
    %cst_13 = arith.constant 0.000000e+00 : f32
    %12 = vector.broadcast %cst_13 : f32 to vector<8x128xf32>
    %c0_i32 = arith.constant 0 : i32
    %13 = arith.truncf %12 : vector<8x128xf32> to vector<8x128xbf16>
    %cst_14 = arith.constant dense<0.000000e+00> : vector<8x384xf32>
    %14 = tpu.matmul %13, %10, %cst_14 {dimension_numbers = #tpu.dot_dimension_numbers<[1], [0], [0], [1], [0, 0, 1, 1], [], []>} : vector<8x128xbf16>, vector<128x384xbf16>, vector<8x384xf32> -> vector<8x384xf32>
    %15 = arith.index_cast %c0_i32 : i32 to index
    %c0_15 = arith.constant 0 : index
    %c0_16 = arith.constant 0 : index
    %16 = vector.load %arg12[%15, %c0_15, %c0_16] : memref<8x8x384xbf16, #tpu.memory_space<vmem>>, vector<1x8x384xbf16>
    %17 = vector.shape_cast %16 : vector<1x8x384xbf16> to vector<8x384xbf16>
    %18 = arith.extf %17 : vector<8x384xbf16> to vector<8x384xf32>
    %19 = vector.extract_strided_slice %18 {offsets = [0, 0], sizes = [8, 128], strides = [1, 1]} : vector<8x384xf32> to vector<8x128xf32>
    %20 = vector.extract_strided_slice %14 {offsets = [0, 0], sizes = [8, 128], strides = [1, 1]} : vector<8x384xf32> to vector<8x128xf32>
    %21 = arith.addf %19, %20 : vector<8x128xf32>
    %22 = arith.negf %21 : vector<8x128xf32>
    %23 = math.exp %22 : vector<8x128xf32>
    %cst_17 = arith.constant 1.000000e+00 : f32
    %24 = vector.broadcast %cst_17 : f32 to vector<8x128xf32>
    %25 = arith.addf %24, %23 : vector<8x128xf32>
    %26 = arith.divf %24, %25 : vector<8x128xf32>
    %27 = vector.extract_strided_slice %18 {offsets = [0, 128], sizes = [8, 128], strides = [1, 1]} : vector<8x384xf32> to vector<8x128xf32>
    %28 = vector.extract_strided_slice %14 {offsets = [0, 128], sizes = [8, 128], strides = [1, 1]} : vector<8x384xf32> to vector<8x128xf32>
    %29 = arith.addf %27, %28 : vector<8x128xf32>
    %30 = arith.negf %29 : vector<8x128xf32>
    %31 = math.exp %30 : vector<8x128xf32>
    %cst_18 = arith.constant 1.000000e+00 : f32
    %32 = vector.broadcast %cst_18 : f32 to vector<8x128xf32>
    %33 = arith.addf %32, %31 : vector<8x128xf32>
    %34 = arith.divf %32, %33 : vector<8x128xf32>
    %35 = vector.extract_strided_slice %18 {offsets = [0, 256], sizes = [8, 128], strides = [1, 1]} : vector<8x384xf32> to vector<8x128xf32>
    %36 = vector.extract_strided_slice %14 {offsets = [0, 256], sizes = [8, 128], strides = [1, 1]} : vector<8x384xf32> to vector<8x128xf32>
    %37 = vector.broadcast %11 : vector<1x128xf32> to vector<8x128xf32>
    %38 = arith.addf %36, %37 : vector<8x128xf32>
    %39 = arith.mulf %26, %38 : vector<8x128xf32>
    %40 = arith.addf %35, %39 : vector<8x128xf32>
    %41 = math.tanh %40 : vector<8x128xf32>
    %cst_19 = arith.constant 1.000000e+00 : f32
    %42 = vector.broadcast %cst_19 : f32 to vector<8x128xf32>
    %43 = arith.subf %42, %34 : vector<8x128xf32>
    %44 = arith.mulf %43, %41 : vector<8x128xf32>
    %45 = arith.mulf %34, %12 : vector<8x128xf32>
    %46 = arith.addf %44, %45 : vector<8x128xf32>
    %47 = arith.truncf %46 : vector<8x128xf32> to vector<8x128xbf16>
    %48 = arith.index_cast %c0_i32 : i32 to index
    %c0_20 = arith.constant 0 : index
    %c0_21 = arith.constant 0 : index
    %49 = vector.load %arg13[%48, %c0_20, %c0_21] : memref<8x8x128xbf16, #tpu.memory_space<vmem>>, vector<1x8x128xbf16>
    %50 = vector.shape_cast %49 : vector<1x8x128xbf16> to vector<8x128xbf16>
    %51 = vector.shape_cast %47 : vector<8x128xbf16> to vector<1x8x128xbf16>
    tpu.vector_store %arg13[%48, %c0_20, %c0_21], %51 {strides = array<i32>} : memref<8x8x128xbf16, #tpu.memory_space<vmem>>, vector<1x8x128xbf16>,
    %c1_i32 = arith.constant 1 : i32
    %52 = arith.truncf %46 : vector<8x128xf32> to vector<8x128xbf16>
    %cst_22 = arith.constant dense<0.000000e+00> : vector<8x384xf32>
    %53 = tpu.matmul %52, %10, %cst_22 {dimension_numbers = #tpu.dot_dimension_numbers<[1], [0], [0], [1], [0, 0, 1, 1], [], []>} : vector<8x128xbf16>, vector<128x384xbf16>, vector<8x384xf32> -> vector<8x384xf32>
    %54 = arith.index_cast %c1_i32 : i32 to index
    %c0_23 = arith.constant 0 : index
    %c0_24 = arith.constant 0 : index
    %55 = vector.load %arg12[%54, %c0_23, %c0_24] : memref<8x8x384xbf16, #tpu.memory_space<vmem>>, vector<1x8x384xbf16>
    %56 = vector.shape_cast %55 : vector<1x8x384xbf16> to vector<8x384xbf16>
    %57 = arith.extf %56 : vector<8x384xbf16> to vector<8x384xf32>
    %58 = vector.extract_strided_slice %57 {offsets = [0, 0], sizes = [8, 128], strides = [1, 1]} : vector<8x384xf32> to vector<8x128xf32>
    %59 = vector.extract_strided_slice %53 {offsets = [0, 0], sizes = [8, 128], strides = [1, 1]} : vector<8x384xf32> to vector<8x128xf32>
    %60 = arith.addf %58, %59 : vector<8x128xf32>
    %61 = arith.negf %60 : vector<8x128xf32>
    %62 = math.exp %61 : vector<8x128xf32>
    %cst_25 = arith.constant 1.000000e+00 : f32
    %63 = vector.broadcast %cst_25 : f32 to vector<8x128xf32>
    %64 = arith.addf %63, %62 : vector<8x128xf32>
    %65 = arith.divf %63, %64 : vector<8x128xf32>
    %66 = vector.extract_strided_slice %57 {offsets = [0, 128], sizes = [8, 128], strides = [1, 1]} : vector<8x384xf32> to vector<8x128xf32>
    %67 = vector.extract_strided_slice %53 {offsets = [0, 128], sizes = [8, 128], strides = [1, 1]} : vector<8x384xf32> to vector<8x128xf32>
    %68 = arith.addf %66, %67 : vector<8x128xf32>
    %69 = arith.negf %68 : vector<8x128xf32>
    %70 = math.exp %69 : vector<8x128xf32>
    %cst_26 = arith.constant 1.000000e+00 : f32
    %71 = vector.broadcast %cst_26 : f32 to vector<8x128xf32>
    %72 = arith.addf %71, %70 : vector<8x128xf32>
    %73 = arith.divf %71, %72 : vector<8x128xf32>
    %74 = vector.extract_strided_slice %57 {offsets = [0, 256], sizes = [8, 128], strides = [1, 1]} : vector<8x384xf32> to vector<8x128xf32>
    %75 = vector.extract_strided_slice %53 {offsets = [0, 256], sizes = [8, 128], strides = [1, 1]} : vector<8x384xf32> to vector<8x128xf32>
    %76 = vector.broadcast %11 : vector<1x128xf32> to vector<8x128xf32>
    %77 = arith.addf %75, %76 : vector<8x128xf32>
    %78 = arith.mulf %65, %77 : vector<8x128xf32>
    %79 = arith.addf %74, %78 : vector<8x128xf32>
    %80 = math.tanh %79 : vector<8x128xf32>
    %cst_27 = arith.constant 1.000000e+00 : f32
    %81 = vector.broadcast %cst_27 : f32 to vector<8x128xf32>
    %82 = arith.subf %81, %73 : vector<8x128xf32>
    %83 = arith.mulf %82, %80 : vector<8x128xf32>
    %84 = arith.mulf %73, %46 : vector<8x128xf32>
    %85 = arith.addf %83, %84 : vector<8x128xf32>
    %86 = arith.truncf %85 : vector<8x128xf32> to vector<8x128xbf16>
    %87 = arith.index_cast %c1_i32 : i32 to index
    %c0_28 = arith.constant 0 : index
    %c0_29 = arith.constant 0 : index
    %88 = vector.load %arg13[%87, %c0_28, %c0_29] : memref<8x8x128xbf16, #tpu.memory_space<vmem>>, vector<1x8x128xbf16>
    %89 = vector.shape_cast %88 : vector<1x8x128xbf16> to vector<8x128xbf16>
    %90 = vector.shape_cast %86 : vector<8x128xbf16> to vector<1x8x128xbf16>
    tpu.vector_store %arg13[%87, %c0_28, %c0_29], %90 {strides = array<i32>} : memref<8x8x128xbf16, #tpu.memory_space<vmem>>, vector<1x8x128xbf16>,
    %c2_i32 = arith.constant 2 : i32
    %91 = arith.truncf %85 : vector<8x128xf32> to vector<8x128xbf16>
    %cst_30 = arith.constant dense<0.000000e+00> : vector<8x384xf32>
    %92 = tpu.matmul %91, %10, %cst_30 {dimension_numbers = #tpu.dot_dimension_numbers<[1], [0], [0], [1], [0, 0, 1, 1], [], []>} : vector<8x128xbf16>, vector<128x384xbf16>, vector<8x384xf32> -> vector<8x384xf32>
    %93 = arith.index_cast %c2_i32 : i32 to index
    %c0_31 = arith.constant 0 : index
    %c0_32 = arith.constant 0 : index
    %94 = vector.load %arg12[%93, %c0_31, %c0_32] : memref<8x8x384xbf16, #tpu.memory_space<vmem>>, vector<1x8x384xbf16>
    %95 = vector.shape_cast %94 : vector<1x8x384xbf16> to vector<8x384xbf16>
    %96 = arith.extf %95 : vector<8x384xbf16> to vector<8x384xf32>
    %97 = vector.extract_strided_slice %96 {offsets = [0, 0], sizes = [8, 128], strides = [1, 1]} : vector<8x384xf32> to vector<8x128xf32>
    %98 = vector.extract_strided_slice %92 {offsets = [0, 0], sizes = [8, 128], strides = [1, 1]} : vector<8x384xf32> to vector<8x128xf32>
    %99 = arith.addf %97, %98 : vector<8x128xf32>
    %100 = arith.negf %99 : vector<8x128xf32>
    %101 = math.exp %100 : vector<8x128xf32>
    %cst_33 = arith.constant 1.000000e+00 : f32
    %102 = vector.broadcast %cst_33 : f32 to vector<8x128xf32>
    %103 = arith.addf %102, %101 : vector<8x128xf32>
    %104 = arith.divf %102, %103 : vector<8x128xf32>
    %105 = vector.extract_strided_slice %96 {offsets = [0, 128], sizes = [8, 128], strides = [1, 1]} : vector<8x384xf32> to vector<8x128xf32>
    %106 = vector.extract_strided_slice %92 {offsets = [0, 128], sizes = [8, 128], strides = [1, 1]} : vector<8x384xf32> to vector<8x128xf32>
    %107 = arith.addf %105, %106 : vector<8x128xf32>
    %108 = arith.negf %107 : vector<8x128xf32>
    %109 = math.exp %108 : vector<8x128xf32>
    %cst_34 = arith.constant 1.000000e+00 : f32
    %110 = vector.broadcast %cst_34 : f32 to vector<8x128xf32>
    %111 = arith.addf %110, %109 : vector<8x128xf32>
    %112 = arith.divf %110, %111 : vector<8x128xf32>
    %113 = vector.extract_strided_slice %96 {offsets = [0, 256], sizes = [8, 128], strides = [1, 1]} : vector<8x384xf32> to vector<8x128xf32>
    %114 = vector.extract_strided_slice %92 {offsets = [0, 256], sizes = [8, 128], strides = [1, 1]} : vector<8x384xf32> to vector<8x128xf32>
    %115 = vector.broadcast %11 : vector<1x128xf32> to vector<8x128xf32>
    %116 = arith.addf %114, %115 : vector<8x128xf32>
    %117 = arith.mulf %104, %116 : vector<8x128xf32>
    %118 = arith.addf %113, %117 : vector<8x128xf32>
    %119 = math.tanh %118 : vector<8x128xf32>
    %cst_35 = arith.constant 1.000000e+00 : f32
    %120 = vector.broadcast %cst_35 : f32 to vector<8x128xf32>
    %121 = arith.subf %120, %112 : vector<8x128xf32>
    %122 = arith.mulf %121, %119 : vector<8x128xf32>
    %123 = arith.mulf %112, %85 : vector<8x128xf32>
    %124 = arith.addf %122, %123 : vector<8x128xf32>
    %125 = arith.truncf %124 : vector<8x128xf32> to vector<8x128xbf16>
    %126 = arith.index_cast %c2_i32 : i32 to index
    %c0_36 = arith.constant 0 : index
    %c0_37 = arith.constant 0 : index
    %127 = vector.load %arg13[%126, %c0_36, %c0_37] : memref<8x8x128xbf16, #tpu.memory_space<vmem>>, vector<1x8x128xbf16>
    %128 = vector.shape_cast %127 : vector<1x8x128xbf16> to vector<8x128xbf16>
    %129 = vector.shape_cast %125 : vector<8x128xbf16> to vector<1x8x128xbf16>
    tpu.vector_store %arg13[%126, %c0_36, %c0_37], %129 {strides = array<i32>} : memref<8x8x128xbf16, #tpu.memory_space<vmem>>, vector<1x8x128xbf16>,
    %c3_i32 = arith.constant 3 : i32
    %130 = arith.truncf %124 : vector<8x128xf32> to vector<8x128xbf16>
    %cst_38 = arith.constant dense<0.000000e+00> : vector<8x384xf32>
    %131 = tpu.matmul %130, %10, %cst_38 {dimension_numbers = #tpu.dot_dimension_numbers<[1], [0], [0], [1], [0, 0, 1, 1], [], []>} : vector<8x128xbf16>, vector<128x384xbf16>, vector<8x384xf32> -> vector<8x384xf32>
    %132 = arith.index_cast %c3_i32 : i32 to index
    %c0_39 = arith.constant 0 : index
    %c0_40 = arith.constant 0 : index
    %133 = vector.load %arg12[%132, %c0_39, %c0_40] : memref<8x8x384xbf16, #tpu.memory_space<vmem>>, vector<1x8x384xbf16>
    %134 = vector.shape_cast %133 : vector<1x8x384xbf16> to vector<8x384xbf16>
    %135 = arith.extf %134 : vector<8x384xbf16> to vector<8x384xf32>
    %136 = vector.extract_strided_slice %135 {offsets = [0, 0], sizes = [8, 128], strides = [1, 1]} : vector<8x384xf32> to vector<8x128xf32>
    %137 = vector.extract_strided_slice %131 {offsets = [0, 0], sizes = [8, 128], strides = [1, 1]} : vector<8x384xf32> to vector<8x128xf32>
    %138 = arith.addf %136, %137 : vector<8x128xf32>
    %139 = arith.negf %138 : vector<8x128xf32>
    %140 = math.exp %139 : vector<8x128xf32>
    %cst_41 = arith.constant 1.000000e+00 : f32
    %141 = vector.broadcast %cst_41 : f32 to vector<8x128xf32>
    %142 = arith.addf %141, %140 : vector<8x128xf32>
    %143 = arith.divf %141, %142 : vector<8x128xf32>
    %144 = vector.extract_strided_slice %135 {offsets = [0, 128], sizes = [8, 128], strides = [1, 1]} : vector<8x384xf32> to vector<8x128xf32>
    %145 = vector.extract_strided_slice %131 {offsets = [0, 128], sizes = [8, 128], strides = [1, 1]} : vector<8x384xf32> to vector<8x128xf32>
    %146 = arith.addf %144, %145 : vector<8x128xf32>
    %147 = arith.negf %146 : vector<8x128xf32>
    %148 = math.exp %147 : vector<8x128xf32>
    %cst_42 = arith.constant 1.000000e+00 : f32
    %149 = vector.broadcast %cst_42 : f32 to vector<8x128xf32>
    %150 = arith.addf %149, %148 : vector<8x128xf32>
    %151 = arith.divf %149, %150 : vector<8x128xf32>
    %152 = vector.extract_strided_slice %135 {offsets = [0, 256], sizes = [8, 128], strides = [1, 1]} : vector<8x384xf32> to vector<8x128xf32>
    %153 = vector.extract_strided_slice %131 {offsets = [0, 256], sizes = [8, 128], strides = [1, 1]} : vector<8x384xf32> to vector<8x128xf32>
    %154 = vector.broadcast %11 : vector<1x128xf32> to vector<8x128xf32>
    %155 = arith.addf %153, %154 : vector<8x128xf32>
    %156 = arith.mulf %143, %155 : vector<8x128xf32>
    %157 = arith.addf %152, %156 : vector<8x128xf32>
    %158 = math.tanh %157 : vector<8x128xf32>
    %cst_43 = arith.constant 1.000000e+00 : f32
    %159 = vector.broadcast %cst_43 : f32 to vector<8x128xf32>
    %160 = arith.subf %159, %151 : vector<8x128xf32>
    %161 = arith.mulf %160, %158 : vector<8x128xf32>
    %162 = arith.mulf %151, %124 : vector<8x128xf32>
    %163 = arith.addf %161, %162 : vector<8x128xf32>
    %164 = arith.truncf %163 : vector<8x128xf32> to vector<8x128xbf16>
    %165 = arith.index_cast %c3_i32 : i32 to index
    %c0_44 = arith.constant 0 : index
    %c0_45 = arith.constant 0 : index
    %166 = vector.load %arg13[%165, %c0_44, %c0_45] : memref<8x8x128xbf16, #tpu.memory_space<vmem>>, vector<1x8x128xbf16>
    %167 = vector.shape_cast %166 : vector<1x8x128xbf16> to vector<8x128xbf16>
    %168 = vector.shape_cast %164 : vector<8x128xbf16> to vector<1x8x128xbf16>
    tpu.vector_store %arg13[%165, %c0_44, %c0_45], %168 {strides = array<i32>} : memref<8x8x128xbf16, #tpu.memory_space<vmem>>, vector<1x8x128xbf16>,
    %c4_i32 = arith.constant 4 : i32
    %169 = arith.truncf %163 : vector<8x128xf32> to vector<8x128xbf16>
    %cst_46 = arith.constant dense<0.000000e+00> : vector<8x384xf32>
    %170 = tpu.matmul %169, %10, %cst_46 {dimension_numbers = #tpu.dot_dimension_numbers<[1], [0], [0], [1], [0, 0, 1, 1], [], []>} : vector<8x128xbf16>, vector<128x384xbf16>, vector<8x384xf32> -> vector<8x384xf32>
    %171 = arith.index_cast %c4_i32 : i32 to index
    %c0_47 = arith.constant 0 : index
    %c0_48 = arith.constant 0 : index
    %172 = vector.load %arg12[%171, %c0_47, %c0_48] : memref<8x8x384xbf16, #tpu.memory_space<vmem>>, vector<1x8x384xbf16>
    %173 = vector.shape_cast %172 : vector<1x8x384xbf16> to vector<8x384xbf16>
    %174 = arith.extf %173 : vector<8x384xbf16> to vector<8x384xf32>
    %175 = vector.extract_strided_slice %174 {offsets = [0, 0], sizes = [8, 128], strides = [1, 1]} : vector<8x384xf32> to vector<8x128xf32>
    %176 = vector.extract_strided_slice %170 {offsets = [0, 0], sizes = [8, 128], strides = [1, 1]} : vector<8x384xf32> to vector<8x128xf32>
    %177 = arith.addf %175, %176 : vector<8x128xf32>
    %178 = arith.negf %177 : vector<8x128xf32>
    %179 = math.exp %178 : vector<8x128xf32>
    %cst_49 = arith.constant 1.000000e+00 : f32
    %180 = vector.broadcast %cst_49 : f32 to vector<8x128xf32>
    %181 = arith.addf %180, %179 : vector<8x128xf32>
    %182 = arith.divf %180, %181 : vector<8x128xf32>
    %183 = vector.extract_strided_slice %174 {offsets = [0, 128], sizes = [8, 128], strides = [1, 1]} : vector<8x384xf32> to vector<8x128xf32>
    %184 = vector.extract_strided_slice %170 {offsets = [0, 128], sizes = [8, 128], strides = [1, 1]} : vector<8x384xf32> to vector<8x128xf32>
    %185 = arith.addf %183, %184 : vector<8x128xf32>
    %186 = arith.negf %185 : vector<8x128xf32>
    %187 = math.exp %186 : vector<8x128xf32>
    %cst_50 = arith.constant 1.000000e+00 : f32
    %188 = vector.broadcast %cst_50 : f32 to vector<8x128xf32>
    %189 = arith.addf %188, %187 : vector<8x128xf32>
    %190 = arith.divf %188, %189 : vector<8x128xf32>
    %191 = vector.extract_strided_slice %174 {offsets = [0, 256], sizes = [8, 128], strides = [1, 1]} : vector<8x384xf32> to vector<8x128xf32>
    %192 = vector.extract_strided_slice %170 {offsets = [0, 256], sizes = [8, 128], strides = [1, 1]} : vector<8x384xf32> to vector<8x128xf32>
    %193 = vector.broadcast %11 : vector<1x128xf32> to vector<8x128xf32>
    %194 = arith.addf %192, %193 : vector<8x128xf32>
    %195 = arith.mulf %182, %194 : vector<8x128xf32>
    %196 = arith.addf %191, %195 : vector<8x128xf32>
    %197 = math.tanh %196 : vector<8x128xf32>
    %cst_51 = arith.constant 1.000000e+00 : f32
    %198 = vector.broadcast %cst_51 : f32 to vector<8x128xf32>
    %199 = arith.subf %198, %190 : vector<8x128xf32>
    %200 = arith.mulf %199, %197 : vector<8x128xf32>
    %201 = arith.mulf %190, %163 : vector<8x128xf32>
    %202 = arith.addf %200, %201 : vector<8x128xf32>
    %203 = arith.truncf %202 : vector<8x128xf32> to vector<8x128xbf16>
    %204 = arith.index_cast %c4_i32 : i32 to index
    %c0_52 = arith.constant 0 : index
    %c0_53 = arith.constant 0 : index
    %205 = vector.load %arg13[%204, %c0_52, %c0_53] : memref<8x8x128xbf16, #tpu.memory_space<vmem>>, vector<1x8x128xbf16>
    %206 = vector.shape_cast %205 : vector<1x8x128xbf16> to vector<8x128xbf16>
    %207 = vector.shape_cast %203 : vector<8x128xbf16> to vector<1x8x128xbf16>
    tpu.vector_store %arg13[%204, %c0_52, %c0_53], %207 {strides = array<i32>} : memref<8x8x128xbf16, #tpu.memory_space<vmem>>, vector<1x8x128xbf16>,
    %c5_i32 = arith.constant 5 : i32
    %208 = arith.truncf %202 : vector<8x128xf32> to vector<8x128xbf16>
    %cst_54 = arith.constant dense<0.000000e+00> : vector<8x384xf32>
    %209 = tpu.matmul %208, %10, %cst_54 {dimension_numbers = #tpu.dot_dimension_numbers<[1], [0], [0], [1], [0, 0, 1, 1], [], []>} : vector<8x128xbf16>, vector<128x384xbf16>, vector<8x384xf32> -> vector<8x384xf32>
    %210 = arith.index_cast %c5_i32 : i32 to index
    %c0_55 = arith.constant 0 : index
    %c0_56 = arith.constant 0 : index
    %211 = vector.load %arg12[%210, %c0_55, %c0_56] : memref<8x8x384xbf16, #tpu.memory_space<vmem>>, vector<1x8x384xbf16>
    %212 = vector.shape_cast %211 : vector<1x8x384xbf16> to vector<8x384xbf16>
    %213 = arith.extf %212 : vector<8x384xbf16> to vector<8x384xf32>
    %214 = vector.extract_strided_slice %213 {offsets = [0, 0], sizes = [8, 128], strides = [1, 1]} : vector<8x384xf32> to vector<8x128xf32>
    %215 = vector.extract_strided_slice %209 {offsets = [0, 0], sizes = [8, 128], strides = [1, 1]} : vector<8x384xf32> to vector<8x128xf32>
    %216 = arith.addf %214, %215 : vector<8x128xf32>
    %217 = arith.negf %216 : vector<8x128xf32>
    %218 = math.exp %217 : vector<8x128xf32>
    %cst_57 = arith.constant 1.000000e+00 : f32
    %219 = vector.broadcast %cst_57 : f32 to vector<8x128xf32>
    %220 = arith.addf %219, %218 : vector<8x128xf32>
    %221 = arith.divf %219, %220 : vector<8x128xf32>
    %222 = vector.extract_strided_slice %213 {offsets = [0, 128], sizes = [8, 128], strides = [1, 1]} : vector<8x384xf32> to vector<8x128xf32>
    %223 = vector.extract_strided_slice %209 {offsets = [0, 128], sizes = [8, 128], strides = [1, 1]} : vector<8x384xf32> to vector<8x128xf32>
    %224 = arith.addf %222, %223 : vector<8x128xf32>
    %225 = arith.negf %224 : vector<8x128xf32>
    %226 = math.exp %225 : vector<8x128xf32>
    %cst_58 = arith.constant 1.000000e+00 : f32
    %227 = vector.broadcast %cst_58 : f32 to vector<8x128xf32>
    %228 = arith.addf %227, %226 : vector<8x128xf32>
    %229 = arith.divf %227, %228 : vector<8x128xf32>
    %230 = vector.extract_strided_slice %213 {offsets = [0, 256], sizes = [8, 128], strides = [1, 1]} : vector<8x384xf32> to vector<8x128xf32>
    %231 = vector.extract_strided_slice %209 {offsets = [0, 256], sizes = [8, 128], strides = [1, 1]} : vector<8x384xf32> to vector<8x128xf32>
    %232 = vector.broadcast %11 : vector<1x128xf32> to vector<8x128xf32>
    %233 = arith.addf %231, %232 : vector<8x128xf32>
    %234 = arith.mulf %221, %233 : vector<8x128xf32>
    %235 = arith.addf %230, %234 : vector<8x128xf32>
    %236 = math.tanh %235 : vector<8x128xf32>
    %cst_59 = arith.constant 1.000000e+00 : f32
    %237 = vector.broadcast %cst_59 : f32 to vector<8x128xf32>
    %238 = arith.subf %237, %229 : vector<8x128xf32>
    %239 = arith.mulf %238, %236 : vector<8x128xf32>
    %240 = arith.mulf %229, %202 : vector<8x128xf32>
    %241 = arith.addf %239, %240 : vector<8x128xf32>
    %242 = arith.truncf %241 : vector<8x128xf32> to vector<8x128xbf16>
    %243 = arith.index_cast %c5_i32 : i32 to index
    %c0_60 = arith.constant 0 : index
    %c0_61 = arith.constant 0 : index
    %244 = vector.load %arg13[%243, %c0_60, %c0_61] : memref<8x8x128xbf16, #tpu.memory_space<vmem>>, vector<1x8x128xbf16>
    %245 = vector.shape_cast %244 : vector<1x8x128xbf16> to vector<8x128xbf16>
    %246 = vector.shape_cast %242 : vector<8x128xbf16> to vector<1x8x128xbf16>
    tpu.vector_store %arg13[%243, %c0_60, %c0_61], %246 {strides = array<i32>} : memref<8x8x128xbf16, #tpu.memory_space<vmem>>, vector<1x8x128xbf16>,
    %c6_i32 = arith.constant 6 : i32
    %247 = arith.truncf %241 : vector<8x128xf32> to vector<8x128xbf16>
    %cst_62 = arith.constant dense<0.000000e+00> : vector<8x384xf32>
    %248 = tpu.matmul %247, %10, %cst_62 {dimension_numbers = #tpu.dot_dimension_numbers<[1], [0], [0], [1], [0, 0, 1, 1], [], []>} : vector<8x128xbf16>, vector<128x384xbf16>, vector<8x384xf32> -> vector<8x384xf32>
    %249 = arith.index_cast %c6_i32 : i32 to index
    %c0_63 = arith.constant 0 : index
    %c0_64 = arith.constant 0 : index
    %250 = vector.load %arg12[%249, %c0_63, %c0_64] : memref<8x8x384xbf16, #tpu.memory_space<vmem>>, vector<1x8x384xbf16>
    %251 = vector.shape_cast %250 : vector<1x8x384xbf16> to vector<8x384xbf16>
    %252 = arith.extf %251 : vector<8x384xbf16> to vector<8x384xf32>
    %253 = vector.extract_strided_slice %252 {offsets = [0, 0], sizes = [8, 128], strides = [1, 1]} : vector<8x384xf32> to vector<8x128xf32>
    %254 = vector.extract_strided_slice %248 {offsets = [0, 0], sizes = [8, 128], strides = [1, 1]} : vector<8x384xf32> to vector<8x128xf32>
    %255 = arith.addf %253, %254 : vector<8x128xf32>
    %256 = arith.negf %255 : vector<8x128xf32>
    %257 = math.exp %256 : vector<8x128xf32>
    %cst_65 = arith.constant 1.000000e+00 : f32
    %258 = vector.broadcast %cst_65 : f32 to vector<8x128xf32>
    %259 = arith.addf %258, %257 : vector<8x128xf32>
    %260 = arith.divf %258, %259 : vector<8x128xf32>
    %261 = vector.extract_strided_slice %252 {offsets = [0, 128], sizes = [8, 128], strides = [1, 1]} : vector<8x384xf32> to vector<8x128xf32>
    %262 = vector.extract_strided_slice %248 {offsets = [0, 128], sizes = [8, 128], strides = [1, 1]} : vector<8x384xf32> to vector<8x128xf32>
    %263 = arith.addf %261, %262 : vector<8x128xf32>
    %264 = arith.negf %263 : vector<8x128xf32>
    %265 = math.exp %264 : vector<8x128xf32>
    %cst_66 = arith.constant 1.000000e+00 : f32
    %266 = vector.broadcast %cst_66 : f32 to vector<8x128xf32>
    %267 = arith.addf %266, %265 : vector<8x128xf32>
    %268 = arith.divf %266, %267 : vector<8x128xf32>
    %269 = vector.extract_strided_slice %252 {offsets = [0, 256], sizes = [8, 128], strides = [1, 1]} : vector<8x384xf32> to vector<8x128xf32>
    %270 = vector.extract_strided_slice %248 {offsets = [0, 256], sizes = [8, 128], strides = [1, 1]} : vector<8x384xf32> to vector<8x128xf32>
    %271 = vector.broadcast %11 : vector<1x128xf32> to vector<8x128xf32>
    %272 = arith.addf %270, %271 : vector<8x128xf32>
    %273 = arith.mulf %260, %272 : vector<8x128xf32>
    %274 = arith.addf %269, %273 : vector<8x128xf32>
    %275 = math.tanh %274 : vector<8x128xf32>
    %cst_67 = arith.constant 1.000000e+00 : f32
    %276 = vector.broadcast %cst_67 : f32 to vector<8x128xf32>
    %277 = arith.subf %276, %268 : vector<8x128xf32>
    %278 = arith.mulf %277, %275 : vector<8x128xf32>
    %279 = arith.mulf %268, %241 : vector<8x128xf32>
    %280 = arith.addf %278, %279 : vector<8x128xf32>
    %281 = arith.truncf %280 : vector<8x128xf32> to vector<8x128xbf16>
    %282 = arith.index_cast %c6_i32 : i32 to index
    %c0_68 = arith.constant 0 : index
    %c0_69 = arith.constant 0 : index
    %283 = vector.load %arg13[%282, %c0_68, %c0_69] : memref<8x8x128xbf16, #tpu.memory_space<vmem>>, vector<1x8x128xbf16>
    %284 = vector.shape_cast %283 : vector<1x8x128xbf16> to vector<8x128xbf16>
    %285 = vector.shape_cast %281 : vector<8x128xbf16> to vector<1x8x128xbf16>
    tpu.vector_store %arg13[%282, %c0_68, %c0_69], %285 {strides = array<i32>} : memref<8x8x128xbf16, #tpu.memory_space<vmem>>, vector<1x8x128xbf16>,
    %c7_i32 = arith.constant 7 : i32
    %286 = arith.truncf %280 : vector<8x128xf32> to vector<8x128xbf16>
    %cst_70 = arith.constant dense<0.000000e+00> : vector<8x384xf32>
    %287 = tpu.matmul %286, %10, %cst_70 {dimension_numbers = #tpu.dot_dimension_numbers<[1], [0], [0], [1], [0, 0, 1, 1], [], []>} : vector<8x128xbf16>, vector<128x384xbf16>, vector<8x384xf32> -> vector<8x384xf32>
    %288 = arith.index_cast %c7_i32 : i32 to index
    %c0_71 = arith.constant 0 : index
    %c0_72 = arith.constant 0 : index
    %289 = vector.load %arg12[%288, %c0_71, %c0_72] : memref<8x8x384xbf16, #tpu.memory_space<vmem>>, vector<1x8x384xbf16>
    %290 = vector.shape_cast %289 : vector<1x8x384xbf16> to vector<8x384xbf16>
    %291 = arith.extf %290 : vector<8x384xbf16> to vector<8x384xf32>
    %292 = vector.extract_strided_slice %291 {offsets = [0, 0], sizes = [8, 128], strides = [1, 1]} : vector<8x384xf32> to vector<8x128xf32>
    %293 = vector.extract_strided_slice %287 {offsets = [0, 0], sizes = [8, 128], strides = [1, 1]} : vector<8x384xf32> to vector<8x128xf32>
    %294 = arith.addf %292, %293 : vector<8x128xf32>
    %295 = arith.negf %294 : vector<8x128xf32>
    %296 = math.exp %295 : vector<8x128xf32>
    %cst_73 = arith.constant 1.000000e+00 : f32
    %297 = vector.broadcast %cst_73 : f32 to vector<8x128xf32>
    %298 = arith.addf %297, %296 : vector<8x128xf32>
    %299 = arith.divf %297, %298 : vector<8x128xf32>
    %300 = vector.extract_strided_slice %291 {offsets = [0, 128], sizes = [8, 128], strides = [1, 1]} : vector<8x384xf32> to vector<8x128xf32>
    %301 = vector.extract_strided_slice %287 {offsets = [0, 128], sizes = [8, 128], strides = [1, 1]} : vector<8x384xf32> to vector<8x128xf32>
    %302 = arith.addf %300, %301 : vector<8x128xf32>
    %303 = arith.negf %302 : vector<8x128xf32>
    %304 = math.exp %303 : vector<8x128xf32>
    %cst_74 = arith.constant 1.000000e+00 : f32
    %305 = vector.broadcast %cst_74 : f32 to vector<8x128xf32>
    %306 = arith.addf %305, %304 : vector<8x128xf32>
    %307 = arith.divf %305, %306 : vector<8x128xf32>
    %308 = vector.extract_strided_slice %291 {offsets = [0, 256], sizes = [8, 128], strides = [1, 1]} : vector<8x384xf32> to vector<8x128xf32>
    %309 = vector.extract_strided_slice %287 {offsets = [0, 256], sizes = [8, 128], strides = [1, 1]} : vector<8x384xf32> to vector<8x128xf32>
    %310 = vector.broadcast %11 : vector<1x128xf32> to vector<8x128xf32>
    %311 = arith.addf %309, %310 : vector<8x128xf32>
    %312 = arith.mulf %299, %311 : vector<8x128xf32>
    %313 = arith.addf %308, %312 : vector<8x128xf32>
    %314 = math.tanh %313 : vector<8x128xf32>
    %cst_75 = arith.constant 1.000000e+00 : f32
    %315 = vector.broadcast %cst_75 : f32 to vector<8x128xf32>
    %316 = arith.subf %315, %307 : vector<8x128xf32>
    %317 = arith.mulf %316, %314 : vector<8x128xf32>
    %318 = arith.mulf %307, %280 : vector<8x128xf32>
    %319 = arith.addf %317, %318 : vector<8x128xf32>
    %320 = arith.truncf %319 : vector<8x128xf32> to vector<8x128xbf16>
    %321 = arith.index_cast %c7_i32 : i32 to index
    %c0_76 = arith.constant 0 : index
    %c0_77 = arith.constant 0 : index
    %322 = vector.load %arg13[%321, %c0_76, %c0_77] : memref<8x8x128xbf16, #tpu.memory_space<vmem>>, vector<1x8x128xbf16>
    %323 = vector.shape_cast %322 : vector<1x8x128xbf16> to vector<8x128xbf16>
    %324 = vector.shape_cast %320 : vector<8x128xbf16> to vector<1x8x128xbf16>
    tpu.vector_store %arg13[%321, %c0_76, %c0_77], %324 {strides = array<i32>} : memref<8x8x128xbf16, #tpu.memory_space<vmem>>, vector<1x8x128xbf16>,
    %c8_i32 = arith.constant 8 : i32
    %c0_78 = arith.constant 0 : index
    %c0_79 = arith.constant 0 : index
    %c0_80 = arith.constant 0 : index
    %325 = vector.load %arg13[%c0_78, %c0_79, %c0_80] : memref<8x8x128xbf16, #tpu.memory_space<vmem>>, vector<8x8x128xbf16>
    %326 = vector.shape_cast %325 : vector<8x8x128xbf16> to vector<64x128xbf16>
    %c0_81 = arith.constant 0 : index
    %c0_82 = arith.constant 0 : index
    %327 = vector.load %arg5[%c0_81, %c0_82] : memref<128x384xbf16, #tpu.memory_space<vmem>>, vector<128x384xbf16>
    %cst_83 = arith.constant dense<0.000000e+00> : vector<64x384xf32>
    %328 = tpu.matmul %326, %327, %cst_83 {dimension_numbers = #tpu.dot_dimension_numbers<[1], [0], [0], [1], [0, 0, 1, 1], [], []>} : vector<64x128xbf16>, vector<128x384xbf16>, vector<64x384xf32> -> vector<64x384xf32>
    %c0_84 = arith.constant 0 : index
    %c0_85 = arith.constant 0 : index
    %329 = vector.load %arg7[%c0_84, %c0_85] : memref<1x384xf32, #tpu.memory_space<vmem>>, vector<1x384xf32>
    %330 = vector.broadcast %329 : vector<1x384xf32> to vector<64x384xf32>
    %331 = arith.addf %328, %330 : vector<64x384xf32>
    %332 = vector.shape_cast %331 : vector<64x384xf32> to vector<8x8x384xf32>
    %333 = arith.truncf %332 : vector<8x8x384xf32> to vector<8x8x384xbf16>
    %c0_86 = arith.constant 0 : index
    %c0_87 = arith.constant 0 : index
    %c0_88 = arith.constant 0 : index
    %334 = vector.load %arg12[%c0_86, %c0_87, %c0_88] : memref<8x8x384xbf16, #tpu.memory_space<vmem>>, vector<8x8x384xbf16>
    tpu.vector_store %arg12[%c0_86, %c0_87, %c0_88], %333 {strides = array<i32>} : memref<8x8x384xbf16, #tpu.memory_space<vmem>>, vector<8x8x384xbf16>,
    %c0_89 = arith.constant 0 : index
    %c0_90 = arith.constant 0 : index
    %335 = vector.load %arg6[%c0_89, %c0_90] : memref<128x384xbf16, #tpu.memory_space<vmem>>, vector<128x384xbf16>
    %c0_91 = arith.constant 0 : index
    %c0_92 = arith.constant 0 : index
    %336 = vector.load %arg8[%c0_91, %c0_92] : memref<1x128xf32, #tpu.memory_space<vmem>>, vector<1x128xf32>
    %cst_93 = arith.constant 0.000000e+00 : f32
    %337 = vector.broadcast %cst_93 : f32 to vector<8x128xf32>
    %c0_i32_94 = arith.constant 0 : i32
    %338 = arith.truncf %337 : vector<8x128xf32> to vector<8x128xbf16>
    %cst_95 = arith.constant dense<0.000000e+00> : vector<8x384xf32>
    %339 = tpu.matmul %338, %335, %cst_95 {dimension_numbers = #tpu.dot_dimension_numbers<[1], [0], [0], [1], [0, 0, 1, 1], [], []>} : vector<8x128xbf16>, vector<128x384xbf16>, vector<8x384xf32> -> vector<8x384xf32>
    %340 = arith.index_cast %c0_i32_94 : i32 to index
    %c0_96 = arith.constant 0 : index
    %c0_97 = arith.constant 0 : index
    %341 = vector.load %arg12[%340, %c0_96, %c0_97] : memref<8x8x384xbf16, #tpu.memory_space<vmem>>, vector<1x8x384xbf16>
    %342 = vector.shape_cast %341 : vector<1x8x384xbf16> to vector<8x384xbf16>
    %343 = arith.extf %342 : vector<8x384xbf16> to vector<8x384xf32>
    %344 = vector.extract_strided_slice %343 {offsets = [0, 0], sizes = [8, 128], strides = [1, 1]} : vector<8x384xf32> to vector<8x128xf32>
    %345 = vector.extract_strided_slice %339 {offsets = [0, 0], sizes = [8, 128], strides = [1, 1]} : vector<8x384xf32> to vector<8x128xf32>
    %346 = arith.addf %344, %345 : vector<8x128xf32>
    %347 = arith.negf %346 : vector<8x128xf32>
    %348 = math.exp %347 : vector<8x128xf32>
    %cst_98 = arith.constant 1.000000e+00 : f32
    %349 = vector.broadcast %cst_98 : f32 to vector<8x128xf32>
    %350 = arith.addf %349, %348 : vector<8x128xf32>
    %351 = arith.divf %349, %350 : vector<8x128xf32>
    %352 = vector.extract_strided_slice %343 {offsets = [0, 128], sizes = [8, 128], strides = [1, 1]} : vector<8x384xf32> to vector<8x128xf32>
    %353 = vector.extract_strided_slice %339 {offsets = [0, 128], sizes = [8, 128], strides = [1, 1]} : vector<8x384xf32> to vector<8x128xf32>
    %354 = arith.addf %352, %353 : vector<8x128xf32>
    %355 = arith.negf %354 : vector<8x128xf32>
    %356 = math.exp %355 : vector<8x128xf32>
    %cst_99 = arith.constant 1.000000e+00 : f32
    %357 = vector.broadcast %cst_99 : f32 to vector<8x128xf32>
    %358 = arith.addf %357, %356 : vector<8x128xf32>
    %359 = arith.divf %357, %358 : vector<8x128xf32>
    %360 = vector.extract_strided_slice %343 {offsets = [0, 256], sizes = [8, 128], strides = [1, 1]} : vector<8x384xf32> to vector<8x128xf32>
    %361 = vector.extract_strided_slice %339 {offsets = [0, 256], sizes = [8, 128], strides = [1, 1]} : vector<8x384xf32> to vector<8x128xf32>
    %362 = vector.broadcast %336 : vector<1x128xf32> to vector<8x128xf32>
    %363 = arith.addf %361, %362 : vector<8x128xf32>
    %364 = arith.mulf %351, %363 : vector<8x128xf32>
    %365 = arith.addf %360, %364 : vector<8x128xf32>
    %366 = math.tanh %365 : vector<8x128xf32>
    %cst_100 = arith.constant 1.000000e+00 : f32
    %367 = vector.broadcast %cst_100 : f32 to vector<8x128xf32>
    %368 = arith.subf %367, %359 : vector<8x128xf32>
    %369 = arith.mulf %368, %366 : vector<8x128xf32>
    %370 = arith.mulf %359, %337 : vector<8x128xf32>
    %371 = arith.addf %369, %370 : vector<8x128xf32>
    %c1_i32_101 = arith.constant 1 : i32
    %372 = arith.truncf %371 : vector<8x128xf32> to vector<8x128xbf16>
    %cst_102 = arith.constant dense<0.000000e+00> : vector<8x384xf32>
    %373 = tpu.matmul %372, %335, %cst_102 {dimension_numbers = #tpu.dot_dimension_numbers<[1], [0], [0], [1], [0, 0, 1, 1], [], []>} : vector<8x128xbf16>, vector<128x384xbf16>, vector<8x384xf32> -> vector<8x384xf32>
    %374 = arith.index_cast %c1_i32_101 : i32 to index
    %c0_103 = arith.constant 0 : index
    %c0_104 = arith.constant 0 : index
    %375 = vector.load %arg12[%374, %c0_103, %c0_104] : memref<8x8x384xbf16, #tpu.memory_space<vmem>>, vector<1x8x384xbf16>
    %376 = vector.shape_cast %375 : vector<1x8x384xbf16> to vector<8x384xbf16>
    %377 = arith.extf %376 : vector<8x384xbf16> to vector<8x384xf32>
    %378 = vector.extract_strided_slice %377 {offsets = [0, 0], sizes = [8, 128], strides = [1, 1]} : vector<8x384xf32> to vector<8x128xf32>
    %379 = vector.extract_strided_slice %373 {offsets = [0, 0], sizes = [8, 128], strides = [1, 1]} : vector<8x384xf32> to vector<8x128xf32>
    %380 = arith.addf %378, %379 : vector<8x128xf32>
    %381 = arith.negf %380 : vector<8x128xf32>
    %382 = math.exp %381 : vector<8x128xf32>
    %cst_105 = arith.constant 1.000000e+00 : f32
    %383 = vector.broadcast %cst_105 : f32 to vector<8x128xf32>
    %384 = arith.addf %383, %382 : vector<8x128xf32>
    %385 = arith.divf %383, %384 : vector<8x128xf32>
    %386 = vector.extract_strided_slice %377 {offsets = [0, 128], sizes = [8, 128], strides = [1, 1]} : vector<8x384xf32> to vector<8x128xf32>
    %387 = vector.extract_strided_slice %373 {offsets = [0, 128], sizes = [8, 128], strides = [1, 1]} : vector<8x384xf32> to vector<8x128xf32>
    %388 = arith.addf %386, %387 : vector<8x128xf32>
    %389 = arith.negf %388 : vector<8x128xf32>
    %390 = math.exp %389 : vector<8x128xf32>
    %cst_106 = arith.constant 1.000000e+00 : f32
    %391 = vector.broadcast %cst_106 : f32 to vector<8x128xf32>
    %392 = arith.addf %391, %390 : vector<8x128xf32>
    %393 = arith.divf %391, %392 : vector<8x128xf32>
    %394 = vector.extract_strided_slice %377 {offsets = [0, 256], sizes = [8, 128], strides = [1, 1]} : vector<8x384xf32> to vector<8x128xf32>
    %395 = vector.extract_strided_slice %373 {offsets = [0, 256], sizes = [8, 128], strides = [1, 1]} : vector<8x384xf32> to vector<8x128xf32>
    %396 = vector.broadcast %336 : vector<1x128xf32> to vector<8x128xf32>
    %397 = arith.addf %395, %396 : vector<8x128xf32>
    %398 = arith.mulf %385, %397 : vector<8x128xf32>
    %399 = arith.addf %394, %398 : vector<8x128xf32>
    %400 = math.tanh %399 : vector<8x128xf32>
    %cst_107 = arith.constant 1.000000e+00 : f32
    %401 = vector.broadcast %cst_107 : f32 to vector<8x128xf32>
    %402 = arith.subf %401, %393 : vector<8x128xf32>
    %403 = arith.mulf %402, %400 : vector<8x128xf32>
    %404 = arith.mulf %393, %371 : vector<8x128xf32>
    %405 = arith.addf %403, %404 : vector<8x128xf32>
    %c2_i32_108 = arith.constant 2 : i32
    %406 = arith.truncf %405 : vector<8x128xf32> to vector<8x128xbf16>
    %cst_109 = arith.constant dense<0.000000e+00> : vector<8x384xf32>
    %407 = tpu.matmul %406, %335, %cst_109 {dimension_numbers = #tpu.dot_dimension_numbers<[1], [0], [0], [1], [0, 0, 1, 1], [], []>} : vector<8x128xbf16>, vector<128x384xbf16>, vector<8x384xf32> -> vector<8x384xf32>
    %408 = arith.index_cast %c2_i32_108 : i32 to index
    %c0_110 = arith.constant 0 : index
    %c0_111 = arith.constant 0 : index
    %409 = vector.load %arg12[%408, %c0_110, %c0_111] : memref<8x8x384xbf16, #tpu.memory_space<vmem>>, vector<1x8x384xbf16>
    %410 = vector.shape_cast %409 : vector<1x8x384xbf16> to vector<8x384xbf16>
    %411 = arith.extf %410 : vector<8x384xbf16> to vector<8x384xf32>
    %412 = vector.extract_strided_slice %411 {offsets = [0, 0], sizes = [8, 128], strides = [1, 1]} : vector<8x384xf32> to vector<8x128xf32>
    %413 = vector.extract_strided_slice %407 {offsets = [0, 0], sizes = [8, 128], strides = [1, 1]} : vector<8x384xf32> to vector<8x128xf32>
    %414 = arith.addf %412, %413 : vector<8x128xf32>
    %415 = arith.negf %414 : vector<8x128xf32>
    %416 = math.exp %415 : vector<8x128xf32>
    %cst_112 = arith.constant 1.000000e+00 : f32
    %417 = vector.broadcast %cst_112 : f32 to vector<8x128xf32>
    %418 = arith.addf %417, %416 : vector<8x128xf32>
    %419 = arith.divf %417, %418 : vector<8x128xf32>
    %420 = vector.extract_strided_slice %411 {offsets = [0, 128], sizes = [8, 128], strides = [1, 1]} : vector<8x384xf32> to vector<8x128xf32>
    %421 = vector.extract_strided_slice %407 {offsets = [0, 128], sizes = [8, 128], strides = [1, 1]} : vector<8x384xf32> to vector<8x128xf32>
    %422 = arith.addf %420, %421 : vector<8x128xf32>
    %423 = arith.negf %422 : vector<8x128xf32>
    %424 = math.exp %423 : vector<8x128xf32>
    %cst_113 = arith.constant 1.000000e+00 : f32
    %425 = vector.broadcast %cst_113 : f32 to vector<8x128xf32>
    %426 = arith.addf %425, %424 : vector<8x128xf32>
    %427 = arith.divf %425, %426 : vector<8x128xf32>
    %428 = vector.extract_strided_slice %411 {offsets = [0, 256], sizes = [8, 128], strides = [1, 1]} : vector<8x384xf32> to vector<8x128xf32>
    %429 = vector.extract_strided_slice %407 {offsets = [0, 256], sizes = [8, 128], strides = [1, 1]} : vector<8x384xf32> to vector<8x128xf32>
    %430 = vector.broadcast %336 : vector<1x128xf32> to vector<8x128xf32>
    %431 = arith.addf %429, %430 : vector<8x128xf32>
    %432 = arith.mulf %419, %431 : vector<8x128xf32>
    %433 = arith.addf %428, %432 : vector<8x128xf32>
    %434 = math.tanh %433 : vector<8x128xf32>
    %cst_114 = arith.constant 1.000000e+00 : f32
    %435 = vector.broadcast %cst_114 : f32 to vector<8x128xf32>
    %436 = arith.subf %435, %427 : vector<8x128xf32>
    %437 = arith.mulf %436, %434 : vector<8x128xf32>
    %438 = arith.mulf %427, %405 : vector<8x128xf32>
    %439 = arith.addf %437, %438 : vector<8x128xf32>
    %c3_i32_115 = arith.constant 3 : i32
    %440 = arith.truncf %439 : vector<8x128xf32> to vector<8x128xbf16>
    %cst_116 = arith.constant dense<0.000000e+00> : vector<8x384xf32>
    %441 = tpu.matmul %440, %335, %cst_116 {dimension_numbers = #tpu.dot_dimension_numbers<[1], [0], [0], [1], [0, 0, 1, 1], [], []>} : vector<8x128xbf16>, vector<128x384xbf16>, vector<8x384xf32> -> vector<8x384xf32>
    %442 = arith.index_cast %c3_i32_115 : i32 to index
    %c0_117 = arith.constant 0 : index
    %c0_118 = arith.constant 0 : index
    %443 = vector.load %arg12[%442, %c0_117, %c0_118] : memref<8x8x384xbf16, #tpu.memory_space<vmem>>, vector<1x8x384xbf16>
    %444 = vector.shape_cast %443 : vector<1x8x384xbf16> to vector<8x384xbf16>
    %445 = arith.extf %444 : vector<8x384xbf16> to vector<8x384xf32>
    %446 = vector.extract_strided_slice %445 {offsets = [0, 0], sizes = [8, 128], strides = [1, 1]} : vector<8x384xf32> to vector<8x128xf32>
    %447 = vector.extract_strided_slice %441 {offsets = [0, 0], sizes = [8, 128], strides = [1, 1]} : vector<8x384xf32> to vector<8x128xf32>
    %448 = arith.addf %446, %447 : vector<8x128xf32>
    %449 = arith.negf %448 : vector<8x128xf32>
    %450 = math.exp %449 : vector<8x128xf32>
    %cst_119 = arith.constant 1.000000e+00 : f32
    %451 = vector.broadcast %cst_119 : f32 to vector<8x128xf32>
    %452 = arith.addf %451, %450 : vector<8x128xf32>
    %453 = arith.divf %451, %452 : vector<8x128xf32>
    %454 = vector.extract_strided_slice %445 {offsets = [0, 128], sizes = [8, 128], strides = [1, 1]} : vector<8x384xf32> to vector<8x128xf32>
    %455 = vector.extract_strided_slice %441 {offsets = [0, 128], sizes = [8, 128], strides = [1, 1]} : vector<8x384xf32> to vector<8x128xf32>
    %456 = arith.addf %454, %455 : vector<8x128xf32>
    %457 = arith.negf %456 : vector<8x128xf32>
    %458 = math.exp %457 : vector<8x128xf32>
    %cst_120 = arith.constant 1.000000e+00 : f32
    %459 = vector.broadcast %cst_120 : f32 to vector<8x128xf32>
    %460 = arith.addf %459, %458 : vector<8x128xf32>
    %461 = arith.divf %459, %460 : vector<8x128xf32>
    %462 = vector.extract_strided_slice %445 {offsets = [0, 256], sizes = [8, 128], strides = [1, 1]} : vector<8x384xf32> to vector<8x128xf32>
    %463 = vector.extract_strided_slice %441 {offsets = [0, 256], sizes = [8, 128], strides = [1, 1]} : vector<8x384xf32> to vector<8x128xf32>
    %464 = vector.broadcast %336 : vector<1x128xf32> to vector<8x128xf32>
    %465 = arith.addf %463, %464 : vector<8x128xf32>
    %466 = arith.mulf %453, %465 : vector<8x128xf32>
    %467 = arith.addf %462, %466 : vector<8x128xf32>
    %468 = math.tanh %467 : vector<8x128xf32>
    %cst_121 = arith.constant 1.000000e+00 : f32
    %469 = vector.broadcast %cst_121 : f32 to vector<8x128xf32>
    %470 = arith.subf %469, %461 : vector<8x128xf32>
    %471 = arith.mulf %470, %468 : vector<8x128xf32>
    %472 = arith.mulf %461, %439 : vector<8x128xf32>
    %473 = arith.addf %471, %472 : vector<8x128xf32>
    %c4_i32_122 = arith.constant 4 : i32
    %474 = arith.truncf %473 : vector<8x128xf32> to vector<8x128xbf16>
    %cst_123 = arith.constant dense<0.000000e+00> : vector<8x384xf32>
    %475 = tpu.matmul %474, %335, %cst_123 {dimension_numbers = #tpu.dot_dimension_numbers<[1], [0], [0], [1], [0, 0, 1, 1], [], []>} : vector<8x128xbf16>, vector<128x384xbf16>, vector<8x384xf32> -> vector<8x384xf32>
    %476 = arith.index_cast %c4_i32_122 : i32 to index
    %c0_124 = arith.constant 0 : index
    %c0_125 = arith.constant 0 : index
    %477 = vector.load %arg12[%476, %c0_124, %c0_125] : memref<8x8x384xbf16, #tpu.memory_space<vmem>>, vector<1x8x384xbf16>
    %478 = vector.shape_cast %477 : vector<1x8x384xbf16> to vector<8x384xbf16>
    %479 = arith.extf %478 : vector<8x384xbf16> to vector<8x384xf32>
    %480 = vector.extract_strided_slice %479 {offsets = [0, 0], sizes = [8, 128], strides = [1, 1]} : vector<8x384xf32> to vector<8x128xf32>
    %481 = vector.extract_strided_slice %475 {offsets = [0, 0], sizes = [8, 128], strides = [1, 1]} : vector<8x384xf32> to vector<8x128xf32>
    %482 = arith.addf %480, %481 : vector<8x128xf32>
    %483 = arith.negf %482 : vector<8x128xf32>
    %484 = math.exp %483 : vector<8x128xf32>
    %cst_126 = arith.constant 1.000000e+00 : f32
    %485 = vector.broadcast %cst_126 : f32 to vector<8x128xf32>
    %486 = arith.addf %485, %484 : vector<8x128xf32>
    %487 = arith.divf %485, %486 : vector<8x128xf32>
    %488 = vector.extract_strided_slice %479 {offsets = [0, 128], sizes = [8, 128], strides = [1, 1]} : vector<8x384xf32> to vector<8x128xf32>
    %489 = vector.extract_strided_slice %475 {offsets = [0, 128], sizes = [8, 128], strides = [1, 1]} : vector<8x384xf32> to vector<8x128xf32>
    %490 = arith.addf %488, %489 : vector<8x128xf32>
    %491 = arith.negf %490 : vector<8x128xf32>
    %492 = math.exp %491 : vector<8x128xf32>
    %cst_127 = arith.constant 1.000000e+00 : f32
    %493 = vector.broadcast %cst_127 : f32 to vector<8x128xf32>
    %494 = arith.addf %493, %492 : vector<8x128xf32>
    %495 = arith.divf %493, %494 : vector<8x128xf32>
    %496 = vector.extract_strided_slice %479 {offsets = [0, 256], sizes = [8, 128], strides = [1, 1]} : vector<8x384xf32> to vector<8x128xf32>
    %497 = vector.extract_strided_slice %475 {offsets = [0, 256], sizes = [8, 128], strides = [1, 1]} : vector<8x384xf32> to vector<8x128xf32>
    %498 = vector.broadcast %336 : vector<1x128xf32> to vector<8x128xf32>
    %499 = arith.addf %497, %498 : vector<8x128xf32>
    %500 = arith.mulf %487, %499 : vector<8x128xf32>
    %501 = arith.addf %496, %500 : vector<8x128xf32>
    %502 = math.tanh %501 : vector<8x128xf32>
    %cst_128 = arith.constant 1.000000e+00 : f32
    %503 = vector.broadcast %cst_128 : f32 to vector<8x128xf32>
    %504 = arith.subf %503, %495 : vector<8x128xf32>
    %505 = arith.mulf %504, %502 : vector<8x128xf32>
    %506 = arith.mulf %495, %473 : vector<8x128xf32>
    %507 = arith.addf %505, %506 : vector<8x128xf32>
    %c5_i32_129 = arith.constant 5 : i32
    %508 = arith.truncf %507 : vector<8x128xf32> to vector<8x128xbf16>
    %cst_130 = arith.constant dense<0.000000e+00> : vector<8x384xf32>
    %509 = tpu.matmul %508, %335, %cst_130 {dimension_numbers = #tpu.dot_dimension_numbers<[1], [0], [0], [1], [0, 0, 1, 1], [], []>} : vector<8x128xbf16>, vector<128x384xbf16>, vector<8x384xf32> -> vector<8x384xf32>
    %510 = arith.index_cast %c5_i32_129 : i32 to index
    %c0_131 = arith.constant 0 : index
    %c0_132 = arith.constant 0 : index
    %511 = vector.load %arg12[%510, %c0_131, %c0_132] : memref<8x8x384xbf16, #tpu.memory_space<vmem>>, vector<1x8x384xbf16>
    %512 = vector.shape_cast %511 : vector<1x8x384xbf16> to vector<8x384xbf16>
    %513 = arith.extf %512 : vector<8x384xbf16> to vector<8x384xf32>
    %514 = vector.extract_strided_slice %513 {offsets = [0, 0], sizes = [8, 128], strides = [1, 1]} : vector<8x384xf32> to vector<8x128xf32>
    %515 = vector.extract_strided_slice %509 {offsets = [0, 0], sizes = [8, 128], strides = [1, 1]} : vector<8x384xf32> to vector<8x128xf32>
    %516 = arith.addf %514, %515 : vector<8x128xf32>
    %517 = arith.negf %516 : vector<8x128xf32>
    %518 = math.exp %517 : vector<8x128xf32>
    %cst_133 = arith.constant 1.000000e+00 : f32
    %519 = vector.broadcast %cst_133 : f32 to vector<8x128xf32>
    %520 = arith.addf %519, %518 : vector<8x128xf32>
    %521 = arith.divf %519, %520 : vector<8x128xf32>
    %522 = vector.extract_strided_slice %513 {offsets = [0, 128], sizes = [8, 128], strides = [1, 1]} : vector<8x384xf32> to vector<8x128xf32>
    %523 = vector.extract_strided_slice %509 {offsets = [0, 128], sizes = [8, 128], strides = [1, 1]} : vector<8x384xf32> to vector<8x128xf32>
    %524 = arith.addf %522, %523 : vector<8x128xf32>
    %525 = arith.negf %524 : vector<8x128xf32>
    %526 = math.exp %525 : vector<8x128xf32>
    %cst_134 = arith.constant 1.000000e+00 : f32
    %527 = vector.broadcast %cst_134 : f32 to vector<8x128xf32>
    %528 = arith.addf %527, %526 : vector<8x128xf32>
    %529 = arith.divf %527, %528 : vector<8x128xf32>
    %530 = vector.extract_strided_slice %513 {offsets = [0, 256], sizes = [8, 128], strides = [1, 1]} : vector<8x384xf32> to vector<8x128xf32>
    %531 = vector.extract_strided_slice %509 {offsets = [0, 256], sizes = [8, 128], strides = [1, 1]} : vector<8x384xf32> to vector<8x128xf32>
    %532 = vector.broadcast %336 : vector<1x128xf32> to vector<8x128xf32>
    %533 = arith.addf %531, %532 : vector<8x128xf32>
    %534 = arith.mulf %521, %533 : vector<8x128xf32>
    %535 = arith.addf %530, %534 : vector<8x128xf32>
    %536 = math.tanh %535 : vector<8x128xf32>
    %cst_135 = arith.constant 1.000000e+00 : f32
    %537 = vector.broadcast %cst_135 : f32 to vector<8x128xf32>
    %538 = arith.subf %537, %529 : vector<8x128xf32>
    %539 = arith.mulf %538, %536 : vector<8x128xf32>
    %540 = arith.mulf %529, %507 : vector<8x128xf32>
    %541 = arith.addf %539, %540 : vector<8x128xf32>
    %c6_i32_136 = arith.constant 6 : i32
    %542 = arith.truncf %541 : vector<8x128xf32> to vector<8x128xbf16>
    %cst_137 = arith.constant dense<0.000000e+00> : vector<8x384xf32>
    %543 = tpu.matmul %542, %335, %cst_137 {dimension_numbers = #tpu.dot_dimension_numbers<[1], [0], [0], [1], [0, 0, 1, 1], [], []>} : vector<8x128xbf16>, vector<128x384xbf16>, vector<8x384xf32> -> vector<8x384xf32>
    %544 = arith.index_cast %c6_i32_136 : i32 to index
    %c0_138 = arith.constant 0 : index
    %c0_139 = arith.constant 0 : index
    %545 = vector.load %arg12[%544, %c0_138, %c0_139] : memref<8x8x384xbf16, #tpu.memory_space<vmem>>, vector<1x8x384xbf16>
    %546 = vector.shape_cast %545 : vector<1x8x384xbf16> to vector<8x384xbf16>
    %547 = arith.extf %546 : vector<8x384xbf16> to vector<8x384xf32>
    %548 = vector.extract_strided_slice %547 {offsets = [0, 0], sizes = [8, 128], strides = [1, 1]} : vector<8x384xf32> to vector<8x128xf32>
    %549 = vector.extract_strided_slice %543 {offsets = [0, 0], sizes = [8, 128], strides = [1, 1]} : vector<8x384xf32> to vector<8x128xf32>
    %550 = arith.addf %548, %549 : vector<8x128xf32>
    %551 = arith.negf %550 : vector<8x128xf32>
    %552 = math.exp %551 : vector<8x128xf32>
    %cst_140 = arith.constant 1.000000e+00 : f32
    %553 = vector.broadcast %cst_140 : f32 to vector<8x128xf32>
    %554 = arith.addf %553, %552 : vector<8x128xf32>
    %555 = arith.divf %553, %554 : vector<8x128xf32>
    %556 = vector.extract_strided_slice %547 {offsets = [0, 128], sizes = [8, 128], strides = [1, 1]} : vector<8x384xf32> to vector<8x128xf32>
    %557 = vector.extract_strided_slice %543 {offsets = [0, 128], sizes = [8, 128], strides = [1, 1]} : vector<8x384xf32> to vector<8x128xf32>
    %558 = arith.addf %556, %557 : vector<8x128xf32>
    %559 = arith.negf %558 : vector<8x128xf32>
    %560 = math.exp %559 : vector<8x128xf32>
    %cst_141 = arith.constant 1.000000e+00 : f32
    %561 = vector.broadcast %cst_141 : f32 to vector<8x128xf32>
    %562 = arith.addf %561, %560 : vector<8x128xf32>
    %563 = arith.divf %561, %562 : vector<8x128xf32>
    %564 = vector.extract_strided_slice %547 {offsets = [0, 256], sizes = [8, 128], strides = [1, 1]} : vector<8x384xf32> to vector<8x128xf32>
    %565 = vector.extract_strided_slice %543 {offsets = [0, 256], sizes = [8, 128], strides = [1, 1]} : vector<8x384xf32> to vector<8x128xf32>
    %566 = vector.broadcast %336 : vector<1x128xf32> to vector<8x128xf32>
    %567 = arith.addf %565, %566 : vector<8x128xf32>
    %568 = arith.mulf %555, %567 : vector<8x128xf32>
    %569 = arith.addf %564, %568 : vector<8x128xf32>
    %570 = math.tanh %569 : vector<8x128xf32>
    %cst_142 = arith.constant 1.000000e+00 : f32
    %571 = vector.broadcast %cst_142 : f32 to vector<8x128xf32>
    %572 = arith.subf %571, %563 : vector<8x128xf32>
    %573 = arith.mulf %572, %570 : vector<8x128xf32>
    %574 = arith.mulf %563, %541 : vector<8x128xf32>
    %575 = arith.addf %573, %574 : vector<8x128xf32>
    %c7_i32_143 = arith.constant 7 : i32
    %576 = arith.truncf %575 : vector<8x128xf32> to vector<8x128xbf16>
    %cst_144 = arith.constant dense<0.000000e+00> : vector<8x384xf32>
    %577 = tpu.matmul %576, %335, %cst_144 {dimension_numbers = #tpu.dot_dimension_numbers<[1], [0], [0], [1], [0, 0, 1, 1], [], []>} : vector<8x128xbf16>, vector<128x384xbf16>, vector<8x384xf32> -> vector<8x384xf32>
    %578 = arith.index_cast %c7_i32_143 : i32 to index
    %c0_145 = arith.constant 0 : index
    %c0_146 = arith.constant 0 : index
    %579 = vector.load %arg12[%578, %c0_145, %c0_146] : memref<8x8x384xbf16, #tpu.memory_space<vmem>>, vector<1x8x384xbf16>
    %580 = vector.shape_cast %579 : vector<1x8x384xbf16> to vector<8x384xbf16>
    %581 = arith.extf %580 : vector<8x384xbf16> to vector<8x384xf32>
    %582 = vector.extract_strided_slice %581 {offsets = [0, 0], sizes = [8, 128], strides = [1, 1]} : vector<8x384xf32> to vector<8x128xf32>
    %583 = vector.extract_strided_slice %577 {offsets = [0, 0], sizes = [8, 128], strides = [1, 1]} : vector<8x384xf32> to vector<8x128xf32>
    %584 = arith.addf %582, %583 : vector<8x128xf32>
    %585 = arith.negf %584 : vector<8x128xf32>
    %586 = math.exp %585 : vector<8x128xf32>
    %cst_147 = arith.constant 1.000000e+00 : f32
    %587 = vector.broadcast %cst_147 : f32 to vector<8x128xf32>
    %588 = arith.addf %587, %586 : vector<8x128xf32>
    %589 = arith.divf %587, %588 : vector<8x128xf32>
    %590 = vector.extract_strided_slice %581 {offsets = [0, 128], sizes = [8, 128], strides = [1, 1]} : vector<8x384xf32> to vector<8x128xf32>
    %591 = vector.extract_strided_slice %577 {offsets = [0, 128], sizes = [8, 128], strides = [1, 1]} : vector<8x384xf32> to vector<8x128xf32>
    %592 = arith.addf %590, %591 : vector<8x128xf32>
    %593 = arith.negf %592 : vector<8x128xf32>
    %594 = math.exp %593 : vector<8x128xf32>
    %cst_148 = arith.constant 1.000000e+00 : f32
    %595 = vector.broadcast %cst_148 : f32 to vector<8x128xf32>
    %596 = arith.addf %595, %594 : vector<8x128xf32>
    %597 = arith.divf %595, %596 : vector<8x128xf32>
    %598 = vector.extract_strided_slice %581 {offsets = [0, 256], sizes = [8, 128], strides = [1, 1]} : vector<8x384xf32> to vector<8x128xf32>
    %599 = vector.extract_strided_slice %577 {offsets = [0, 256], sizes = [8, 128], strides = [1, 1]} : vector<8x384xf32> to vector<8x128xf32>
    %600 = vector.broadcast %336 : vector<1x128xf32> to vector<8x128xf32>
    %601 = arith.addf %599, %600 : vector<8x128xf32>
    %602 = arith.mulf %589, %601 : vector<8x128xf32>
    %603 = arith.addf %598, %602 : vector<8x128xf32>
    %604 = math.tanh %603 : vector<8x128xf32>
    %cst_149 = arith.constant 1.000000e+00 : f32
    %605 = vector.broadcast %cst_149 : f32 to vector<8x128xf32>
    %606 = arith.subf %605, %597 : vector<8x128xf32>
    %607 = arith.mulf %606, %604 : vector<8x128xf32>
    %608 = arith.mulf %597, %575 : vector<8x128xf32>
    %609 = arith.addf %607, %608 : vector<8x128xf32>
    %c8_i32_150 = arith.constant 8 : i32
    %cst_151 = arith.constant 0.000000e+00 : f32
    %610 = vector.broadcast %cst_151 : f32 to vector<8x128xf32>
    %611 = arith.maximumf %609, %610 : vector<8x128xf32>
    %612 = arith.truncf %611 : vector<8x128xf32> to vector<8x128xbf16>
    %c0_152 = arith.constant 0 : index
    %c0_153 = arith.constant 0 : index
    %613 = vector.load %arg9[%c0_152, %c0_153] : memref<128x4xbf16, #tpu.memory_space<vmem>>, vector<128x4xbf16>
    %cst_154 = arith.constant dense<0.000000e+00> : vector<8x4xf32>
    %614 = tpu.matmul %612, %613, %cst_154 {dimension_numbers = #tpu.dot_dimension_numbers<[1], [0], [0], [1], [0, 0, 1, 1], [], []>} : vector<8x128xbf16>, vector<128x4xbf16>, vector<8x4xf32> -> vector<8x4xf32>
    %c0_155 = arith.constant 0 : index
    %c0_156 = arith.constant 0 : index
    %615 = vector.load %arg10[%c0_155, %c0_156] : memref<1x4xf32, #tpu.memory_space<vmem>>, vector<1x4xf32>
    %616 = vector.broadcast %615 : vector<1x4xf32> to vector<8x4xf32>
    %617 = arith.addf %614, %616 : vector<8x4xf32>
    %c0_157 = arith.constant 0 : index
    %c0_158 = arith.constant 0 : index
    %618 = vector.load %arg11[%c0_157, %c0_158] : memref<8x4xf32, #tpu.memory_space<vmem>>, vector<8x4xf32>
    tpu.vector_store %arg11[%c0_157, %c0_158], %617 {strides = array<i32>} : memref<8x4xf32, #tpu.memory_space<vmem>>, vector<8x4xf32>,
    return
  }
}

</mosaic_0001>

<llo_original>
// kernel: gru_model_forward.1
$region0: #{gru_model_forward.1}
  #allocation0 [shape = 'u32[]', space=smem, size = 0x4, offset = 0x4, fixed_abs, tag = 'smem constant byte address 0x4 - core index']
  #allocation1 [shape = 'u32[144,128]{1,0:T(1,128)}', space=vmem, size = 0x12000, scoped, tag = 'internal scratch']
  #allocation2 [shape = 'bf16[8,8,384]{2,1,0:T(8,128)(2,1)}', space=vmem, size = 0xc000, scoped, tag = 'scratch operand']
  #allocation3 [shape = 'bf16[8,8,128]{2,1,0:T(8,128)(2,1)}', space=vmem, size = 0x4000, scoped, tag = 'scratch operand']
  %s0 = inlined_call_operand.vmem [shape: bf16[8,8,16], index: 0, kind: input, shape index: {}]
  %s1 = inlined_call_operand.vmem [shape: bf16[16,384], index: 1, kind: input, shape index: {}]
  %s2 = inlined_call_operand.hbm [shape: bf16[128,384], index: 2, kind: input, shape index: {}]
  %s3 = inlined_call_operand.vmem [shape: f32[1,384], index: 3, kind: input, shape index: {}]
  %s4 = inlined_call_operand.vmem [shape: f32[1,128], index: 4, kind: input, shape index: {}]
  %s5 = inlined_call_operand.hbm [shape: bf16[128,384], index: 5, kind: input, shape index: {}]
  %s6 = inlined_call_operand.hbm [shape: bf16[128,384], index: 6, kind: input, shape index: {}]
  %s7 = inlined_call_operand.vmem [shape: f32[1,384], index: 7, kind: input, shape index: {}]
  %s8 = inlined_call_operand.vmem [shape: f32[1,128], index: 8, kind: input, shape index: {}]
  %s9 = inlined_call_operand.vmem [shape: bf16[128,4], index: 9, kind: input, shape index: {}]
  %s10 = inlined_call_operand.vmem [shape: f32[1,4], index: 10, kind: input, shape index: {}]
  %s11 = inlined_call_operand.vmem [shape: f32[8,4], index: 11, kind: output, shape index: {}]
  %s12 = sld [smem:[#allocation0]]
  $region66: #{gru_model_forward.1} parent=0
    _
  %s14 = ssub.s32 1, %s12
  %s15 = scalar_select 0, %s14, %s12
  $region1: #{gru_model_forward.1} parent=0
    #allocation4 [shape = 'u8[98304]{0}', space=vmem, size = 0x18000, scoped, tag = 'input window, operand 2, single buffered']
    #allocation5 [shape = 's32[1]{0}', space=sflag, size = 0x4, scoped, tag = 'scoped memory for gru_model_forward.1']
    #allocation6 [shape = 'u8[98304]{0}', space=vmem, size = 0x18000, scoped, tag = 'input window, operand 5, single buffered']
    #allocation7 [shape = 's32[1]{0}', space=sflag, size = 0x4, scoped, tag = 'scoped memory for gru_model_forward.1']
    #allocation8 [shape = 'u8[98304]{0}', space=vmem, size = 0x18000, scoped, tag = 'input window, operand 6, single buffered']
    %16 = vsyncpa [#allocation5], 0
    %17 = vsyncpa [#allocation7], 0
    // Predicated region
    $region2: #{gru_model_forward.1} parent=1 // pred_check
      _
    $region3: #{gru_model_forward.1} parent=1 // pred_check_branch
      %19 = sbr.rel (0) target = $region5
    $region4: #{gru_model_forward.1} parent=1 // pred_region
      _
    $region5: #{gru_model_forward.1} parent=1 // pred_fallthru
      _
    // Predicated region
    $region6: #{gru_model_forward.1} parent=1 // pred_check
      _
    $region7: #{gru_model_forward.1} parent=1 // pred_check_branch
      %21 = sbr.rel (0) target = $region9
    $region8: #{gru_model_forward.1} parent=1 // pred_region
      _
    $region9: #{gru_model_forward.1} parent=1 // pred_fallthru
      _
    // Predicated region
    $region10: #{gru_model_forward.1} parent=1 // pred_check
      _
    $region11: #{gru_model_forward.1} parent=1 // pred_check_branch
      %23 = sbr.rel (0) target = $region13
    $region12: #{gru_model_forward.1} parent=1 // pred_region
      %s25 = ssub.s32 3072, 3072
      %26 = vsyncadd [#allocation5], %s25
      %s27 = sshll.u32 [#allocation4], 4
      %s28 = int_to_ptr.vmem [resolvable:$true] %s27
      %33 = dma.hbm_to_vmem [thread:$0]  %s2, 3072, %s28, [#allocation5], 192, 192, 12
    $region13: #{gru_model_forward.1} parent=1 // pred_fallthru
      _
    // Predicated region
    $region14: #{gru_model_forward.1} parent=1 // pred_check
      _
    $region15: #{gru_model_forward.1} parent=1 // pred_check_branch
      %35 = sbr.rel (0) target = $region17
    $region16: #{gru_model_forward.1} parent=1 // pred_region
      _
    $region17: #{gru_model_forward.1} parent=1 // pred_fallthru
      _
    // Predicated region
    $region18: #{gru_model_forward.1} parent=1 // pred_check
      _
    $region19: #{gru_model_forward.1} parent=1 // pred_check_branch
      %37 = sbr.rel (0) target = $region21
    $region20: #{gru_model_forward.1} parent=1 // pred_region
      _
    $region21: #{gru_model_forward.1} parent=1 // pred_fallthru
      _
    // Predicated region
    $region22: #{gru_model_forward.1} parent=1 // pred_check
      _
    $region23: #{gru_model_forward.1} parent=1 // pred_check_branch
      %39 = sbr.rel (0) target = $region25
    $region24: #{gru_model_forward.1} parent=1 // pred_region
      %s41 = ssub.s32 3072, 3072
      %42 = vsyncadd [#allocation7], %s41
      %s43 = sshll.u32 [#allocation6], 4
      %s44 = int_to_ptr.vmem [resolvable:$true] %s43
      %49 = dma.hbm_to_vmem [thread:$0]  %s5, 3072, %s44, [#allocation7], 192, 192, 12
    $region25: #{gru_model_forward.1} parent=1 // pred_fallthru
      _
    // Predicated region
    $region26: #{gru_model_forward.1} parent=1 // pred_check
      _
    $region27: #{gru_model_forward.1} parent=1 // pred_check_branch
      %51 = sbr.rel (0) target = $region29
    $region28: #{gru_model_forward.1} parent=1 // pred_region
      %s53 = ssub.s32 3072, 3072
      %54 = vsyncadd [#allocation7], %s53
      %s55 = sshll.u32 [#allocation8], 4
      %s56 = int_to_ptr.vmem [resolvable:$true] %s55
      %61 = dma.hbm_to_vmem [thread:$0]  %s6, 3072, %s56, [#allocation7], 192, 192, 12
    $region29: #{gru_model_forward.1} parent=1 // pred_fallthru
      _
    // Predicated region
    $region30: #{gru_model_forward.1} parent=1 // pred_check
      _
    $region31: #{gru_model_forward.1} parent=1 // pred_check_branch
      %63 = sbr.rel (0) target = $region33
    $region32: #{gru_model_forward.1} parent=1 // pred_region
      _
    $region33: #{gru_model_forward.1} parent=1 // pred_fallthru
      _
    // Predicated region
    $region34: #{gru_model_forward.1} parent=1 // pred_check
      _
    $region35: #{gru_model_forward.1} parent=1 // pred_check_branch
      %65 = sbr.rel (0) target = $region37
    $region36: #{gru_model_forward.1} parent=1 // pred_region
      _
    $region37: #{gru_model_forward.1} parent=1 // pred_fallthru
      _
    // Predicated region
    $region38: #{gru_model_forward.1} parent=1 // pred_check
      _
    $region39: #{gru_model_forward.1} parent=1 // pred_check_branch
      %67 = sbr.rel (0) target = $region41
    $region40: #{gru_model_forward.1} parent=1 // pred_region
      _
    $region41: #{gru_model_forward.1} parent=1 // pred_fallthru
      _
    // Predicated region
    $region42: #{gru_model_forward.1} parent=1 // pred_check
      _
    $region43: #{gru_model_forward.1} parent=1 // pred_check_branch
      %69 = sbr.rel (0) target = $region45
    $region44: #{gru_model_forward.1} parent=1 // pred_region
      _
    $region45: #{gru_model_forward.1} parent=1 // pred_fallthru
      _
    // Predicated region
    $region46: #{gru_model_forward.1} parent=1 // pred_check
      _
    $region47: #{gru_model_forward.1} parent=1 // pred_check_branch
      %71 = sbr.rel (0) target = $region49
    $region48: #{gru_model_forward.1} parent=1 // pred_region
      %72 = dma.done [#allocation5], 3072
    $region49: #{gru_model_forward.1} parent=1 // pred_fallthru
      _
    // Predicated region
    $region50: #{gru_model_forward.1} parent=1 // pred_check
      _
    $region51: #{gru_model_forward.1} parent=1 // pred_check_branch
      %74 = sbr.rel (0) target = $region53
    $region52: #{gru_model_forward.1} parent=1 // pred_region
      %75 = dma.done [#allocation7], 3072
    $region53: #{gru_model_forward.1} parent=1 // pred_fallthru
      _
    // Predicated region
    $region54: #{gru_model_forward.1} parent=1 // pred_check
      _
    $region55: #{gru_model_forward.1} parent=1 // pred_check_branch
      %77 = sbr.rel (0) target = $region57
    $region56: #{gru_model_forward.1} parent=1 // pred_region
      %78 = dma.done [#allocation7], 3072
    $region57: #{gru_model_forward.1} parent=1 // pred_fallthru
      _
    %v80 = vld [vmem:[%s0] sm:$0xf]
    %v81 = vld [vmem:[%s0 + $0x4] sm:$0xf]
    %v82 = vld [vmem:[%s0 + $0x8] sm:$0xf]
    %v83 = vld [vmem:[%s0 + $0xc] sm:$0xf]
    %v84 = vld [vmem:[%s0 + $0x10] sm:$0xf]
    %v85 = vld [vmem:[%s0 + $0x14] sm:$0xf]
    %v86 = vld [vmem:[%s0 + $0x18] sm:$0xf]
    %v87 = vld [vmem:[%s0 + $0x1c] sm:$0xf]
    %v88 = vld [vmem:[%s1] sm:$0xff]
    %v89 = vld [vmem:[%s1 + $0x8] sm:$0xf]
    %v90 = vld [vmem:[%s1 + $0xc] sm:$0xff]
    %v91 = vld [vmem:[%s1 + $0x14] sm:$0xf]
    %v92 = vld [vmem:[%s3] sm:$0x7]
    %v94 = vlaneseq
    %v95 = vshrl.u32 %v94, 7
    %v96 = vsub.s32 0, %v95
    %v97 = vrot.slane %v92, %v96
    %v98 = vlaneseq
    %v99 = vshrl.u32 %v98, 7
    %v100 = vsub.s32 1, %v99
    %v101 = vrot.slane %v92, %v100
    %v102 = vlaneseq
    %v103 = vshrl.u32 %v102, 7
    %v104 = vsub.s32 2, %v103
    %v105 = vrot.slane %v92, %v104
    %v117 = vunpack.c.l.b16 %v80
    %v118 = vunpack.c.l.b16 %v81
    %v119 = vunpack.c.l.b16 %v82
    %v120 = vunpack.c.l.b16 %v83
    %v121 = vunpack.c.l.b16 %v84
    %v122 = vunpack.c.l.b16 %v85
    %v123 = vunpack.c.l.b16 %v86
    %v124 = vunpack.c.l.b16 %v87
    %v125 = vpack.c.b16 %v118, %v117
    %v126 = vpack.c.b16 %v120, %v119
    %v127 = vpack.c.b16 %v122, %v121
    %v128 = vpack.c.b16 %v124, %v123
    %v133 = vunpack.c.l.b16 %v88
    %v134 = vunpack.c.h.b16 %v88
    %v135 = vunpack.c.l.b16 %v89
    %v136 = vunpack.c.l.b16 %v90
    %v137 = vunpack.c.h.b16 %v90
    %v138 = vunpack.c.l.b16 %v91
    %v139 = vpack.c.b16 %v136, %v133
    %v140 = vpack.c.b16 %v137, %v134
    %v141 = vpack.c.b16 %v138, %v135
    %vm145 = vcmask 130048
    %v147 = vsel %vm145, %v125, 0
    %v150 = vsel %vm145, %v126, 0
    %v153 = vsel %vm145, %v127, 0
    %v156 = vsel %vm145, %v128, 0
    %158 = vmatprep.subr.bf16.mxu0 %v140
    %159 = vmatpush1.bf16.msra.mxu0 %v139
    %160 = vmatprep.subr.bf16.mxu0 0
    %161 = vmatpush1.bf16.msra.mxu0 0
    %162 = vmatprep.subr.bf16.mxu0 0
    %163 = vmatpush1.bf16.msra.mxu0 0
    %164 = vmatprep.subr.bf16.mxu0 0
    %165 = vmatpush1.bf16.msra.mxu0 0
    %166 = vmatprep.subr.bf16.mxu0 0
    %167 = vmatpush1.bf16.msra.mxu0 0
    %168 = vmatprep.subr.bf16.mxu0 0
    %169 = vmatpush1.bf16.msra.mxu0 0
    %170 = vmatprep.subr.bf16.mxu0 0
    %171 = vmatpush1.bf16.msra.mxu0 0
    %172 = vmatprep.subr.bf16.mxu0 0
    %173 = vmatpush1.bf16.msra.mxu0 0
    %174 = vmatprep.subr.bf16.mxu0 0
    %175 = vmatpush1.bf16.msra.mxu0 0
    %176 = vmatprep.subr.bf16.mxu0 0
    %177 = vmatpush1.bf16.msra.mxu0 0
    %178 = vmatprep.subr.bf16.mxu0 0
    %179 = vmatpush1.bf16.msra.mxu0 0
    %180 = vmatprep.subr.bf16.mxu0 0
    %181 = vmatpush1.bf16.msra.mxu0 0
    %182 = vmatprep.subr.bf16.mxu0 0
    %183 = vmatpush1.bf16.msra.mxu0 0
    %184 = vmatprep.subr.bf16.mxu0 0
    %185 = vmatpush1.bf16.msra.mxu0 0
    %186 = vmatprep.subr.bf16.mxu0 0
    %187 = vmatpush1.bf16.msra.mxu0 0
    %188 = vmatprep.subr.bf16.mxu0 0
    %189 = vmatpush1.bf16.msra.mxu0 0
    %190 = vmatprep.mubr.bf16.mxu0 0
    %191 = vmatmul.mubr.bf16.gmra.mrb[0].mxu0 %v147
    %v192 = vpop.f32.mrb[0].mxu0
    %v193 = vadd.f32 %v97, %v192
    %v194 = vpop.f32.mrb[0].mxu0
    %v195 = vadd.f32 %v101, %v194
    %v196 = vpop.f32.mrb[0].mxu0
    %v197 = vadd.f32 %v97, %v196
    %v198 = vpop.f32.mrb[0].mxu0
    %v199 = vadd.f32 %v101, %v198
    %200 = vmatprep.mubr.bf16.mxu0 0
    %201 = vmatmul.mubr.bf16.gmra.mrb[0].mxu0 %v150
    %v202 = vpop.f32.mrb[0].mxu0
    %v203 = vadd.f32 %v97, %v202
    %v204 = vpop.f32.mrb[0].mxu0
    %v205 = vadd.f32 %v101, %v204
    %v206 = vpop.f32.mrb[0].mxu0
    %v207 = vadd.f32 %v97, %v206
    %v208 = vpop.f32.mrb[0].mxu0
    %v209 = vadd.f32 %v101, %v208
    %210 = vmatprep.mubr.bf16.mxu0 0
    %211 = vmatmul.mubr.bf16.gmra.mrb[0].mxu0 %v153
    %v212 = vpop.f32.mrb[0].mxu0
    %v213 = vadd.f32 %v97, %v212
    %v214 = vpop.f32.mrb[0].mxu0
    %v215 = vadd.f32 %v101, %v214
    %v216 = vpop.f32.mrb[0].mxu0
    %v217 = vadd.f32 %v97, %v216
    %v218 = vpop.f32.mrb[0].mxu0
    %v219 = vadd.f32 %v101, %v218
    %220 = vmatprep.mubr.bf16.mxu0 0
    %221 = vmatmul.mubr.bf16.gmra.mrb[0].mxu0 %v156
    %v222 = vpop.f32.mrb[0].mxu0
    %v223 = vadd.f32 %v97, %v222
    %v224 = vpop.f32.mrb[0].mxu0
    %v225 = vadd.f32 %v101, %v224
    %v226 = vpop.f32.mrb[0].mxu0
    %v227 = vadd.f32 %v97, %v226
    %v228 = vpop.f32.mrb[0].mxu0
    %v229 = vadd.f32 %v101, %v228
    %230 = vdwg.mxu0
    %231 = vmatprep.subr.bf16.mxu0 0
    %232 = vmatpush1.bf16.msra.mxu0 %v141
    %233 = vmatprep.subr.bf16.mxu0 0
    %234 = vmatpush1.bf16.msra.mxu0 0
    %235 = vmatprep.subr.bf16.mxu0 0
    %236 = vmatpush1.bf16.msra.mxu0 0
    %237 = vmatprep.subr.bf16.mxu0 0
    %238 = vmatpush1.bf16.msra.mxu0 0
    %239 = vmatprep.subr.bf16.mxu0 0
    %240 = vmatpush1.bf16.msra.mxu0 0
    %241 = vmatprep.subr.bf16.mxu0 0
    %242 = vmatpush1.bf16.msra.mxu0 0
    %243 = vmatprep.subr.bf16.mxu0 0
    %244 = vmatpush1.bf16.msra.mxu0 0
    %245 = vmatprep.subr.bf16.mxu0 0
    %246 = vmatpush1.bf16.msra.mxu0 0
    %247 = vmatprep.subr.bf16.mxu0 0
    %248 = vmatpush1.bf16.msra.mxu0 0
    %249 = vmatprep.subr.bf16.mxu0 0
    %250 = vmatpush1.bf16.msra.mxu0 0
    %251 = vmatprep.subr.bf16.mxu0 0
    %252 = vmatpush1.bf16.msra.mxu0 0
    %253 = vmatprep.subr.bf16.mxu0 0
    %254 = vmatpush1.bf16.msra.mxu0 0
    %255 = vmatprep.subr.bf16.mxu0 0
    %256 = vmatpush1.bf16.msra.mxu0 0
    %257 = vmatprep.subr.bf16.mxu0 0
    %258 = vmatpush1.bf16.msra.mxu0 0
    %259 = vmatprep.subr.bf16.mxu0 0
    %260 = vmatpush1.bf16.msra.mxu0 0
    %261 = vmatprep.subr.bf16.mxu0 0
    %262 = vmatpush1.bf16.msra.mxu0 0
    %263 = vmatprep.mubr.bf16.mxu0 0
    %264 = vmatmul.mubr.bf16.gmra.mrb[0].mxu0 %v147
    %v265 = vpop.f32.mrb[0].mxu0
    %v266 = vadd.f32 %v105, %v265
    %v267 = vpop.f32.mrb[0].mxu0
    %v268 = vpop.f32.mrb[0].mxu0
    %v269 = vadd.f32 %v105, %v268
    %v270 = vpop.f32.mrb[0].mxu0
    %271 = vmatprep.mubr.bf16.mxu0 0
    %272 = vmatmul.mubr.bf16.gmra.mrb[0].mxu0 %v150
    %v273 = vpop.f32.mrb[0].mxu0
    %v274 = vadd.f32 %v105, %v273
    %v275 = vpop.f32.mrb[0].mxu0
    %v276 = vpop.f32.mrb[0].mxu0
    %v277 = vadd.f32 %v105, %v276
    %v278 = vpop.f32.mrb[0].mxu0
    %279 = vmatprep.mubr.bf16.mxu0 0
    %280 = vmatmul.mubr.bf16.gmra.mrb[0].mxu0 %v153
    %v281 = vpop.f32.mrb[0].mxu0
    %v282 = vadd.f32 %v105, %v281
    %v283 = vpop.f32.mrb[0].mxu0
    %v284 = vpop.f32.mrb[0].mxu0
    %v285 = vadd.f32 %v105, %v284
    %v286 = vpop.f32.mrb[0].mxu0
    %287 = vmatprep.mubr.bf16.mxu0 0
    %288 = vmatmul.mubr.bf16.gmra.mrb[0].mxu0 %v156
    %v289 = vpop.f32.mrb[0].mxu0
    %v290 = vadd.f32 %v105, %v289
    %v291 = vpop.f32.mrb[0].mxu0
    %v292 = vpop.f32.mrb[0].mxu0
    %v293 = vadd.f32 %v105, %v292
    %v294 = vpop.f32.mrb[0].mxu0
    %295 = vdwg.mxu0
    %v296 = vpack.c.bf16 %v193, %v193
    %v297 = vpack.c.bf16 %v195, %v195
    %v298 = vpack.c.bf16 %v266, %v266
    %v299 = vpack.c.bf16 %v197, %v197
    %v300 = vpack.c.bf16 %v199, %v199
    %v301 = vpack.c.bf16 %v269, %v269
    %v302 = vpack.c.bf16 %v203, %v203
    %v303 = vpack.c.bf16 %v205, %v205
    %v304 = vpack.c.bf16 %v274, %v274
    %v305 = vpack.c.bf16 %v207, %v207
    %v306 = vpack.c.bf16 %v209, %v209
    %v307 = vpack.c.bf16 %v277, %v277
    %v308 = vpack.c.bf16 %v213, %v213
    %v309 = vpack.c.bf16 %v215, %v215
    %v310 = vpack.c.bf16 %v282, %v282
    %v311 = vpack.c.bf16 %v217, %v217
    %v312 = vpack.c.bf16 %v219, %v219
    %v313 = vpack.c.bf16 %v285, %v285
    %v314 = vpack.c.bf16 %v223, %v223
    %v315 = vpack.c.bf16 %v225, %v225
    %v316 = vpack.c.bf16 %v290, %v290
    %v317 = vpack.c.bf16 %v227, %v227
    %v318 = vpack.c.bf16 %v229, %v229
    %v319 = vpack.c.bf16 %v293, %v293
    %v344 = vunpack.c.l.b16 %v296
    %v345 = vunpack.c.l.b16 %v297
    %v346 = vunpack.c.l.b16 %v298
    %v347 = vunpack.c.l.b16 %v299
    %v348 = vunpack.c.l.b16 %v300
    %v349 = vunpack.c.l.b16 %v301
    %v350 = vunpack.c.l.b16 %v302
    %v351 = vunpack.c.l.b16 %v303
    %v352 = vunpack.c.l.b16 %v304
    %v353 = vunpack.c.l.b16 %v305
    %v354 = vunpack.c.l.b16 %v306
    %v355 = vunpack.c.l.b16 %v307
    %v356 = vunpack.c.l.b16 %v308
    %v357 = vunpack.c.l.b16 %v309
    %v358 = vunpack.c.l.b16 %v310
    %v359 = vunpack.c.l.b16 %v311
    %v360 = vunpack.c.l.b16 %v312
    %v361 = vunpack.c.l.b16 %v313
    %v362 = vunpack.c.l.b16 %v314
    %v363 = vunpack.c.l.b16 %v315
    %v364 = vunpack.c.l.b16 %v316
    %v365 = vunpack.c.l.b16 %v317
    %v366 = vunpack.c.l.b16 %v318
    %v367 = vunpack.c.l.b16 %v319
    %v368 = vpack.c.b16 %v345, %v344
    %v369 = vpack.c.b16 %v346, %v346
    %v370 = vpack.c.b16 %v348, %v347
    %v371 = vpack.c.b16 %v349, %v349
    %v372 = vpack.c.b16 %v351, %v350
    %v373 = vpack.c.b16 %v352, %v352
    %v374 = vpack.c.b16 %v354, %v353
    %v375 = vpack.c.b16 %v355, %v355
    %v376 = vpack.c.b16 %v357, %v356
    %v377 = vpack.c.b16 %v358, %v358
    %v378 = vpack.c.b16 %v360, %v359
    %v379 = vpack.c.b16 %v361, %v361
    %v380 = vpack.c.b16 %v363, %v362
    %v381 = vpack.c.b16 %v364, %v364
    %v382 = vpack.c.b16 %v366, %v365
    %v383 = vpack.c.b16 %v367, %v367
    %400 = vst [vmem:[#allocation2] sm:$0xff] %v368
    %401 = vst [vmem:[#allocation2 + $0x8] sm:$0xf] %v369
    %402 = vst [vmem:[#allocation2 + $0xc] sm:$0xff] %v370
    %403 = vst [vmem:[#allocation2 + $0x14] sm:$0xf] %v371
    %404 = vst [vmem:[#allocation2 + $0x18] sm:$0xff] %v372
    %405 = vst [vmem:[#allocation2 + $0x20] sm:$0xf] %v373
    %406 = vst [vmem:[#allocation2 + $0x24] sm:$0xff] %v374
    %407 = vst [vmem:[#allocation2 + $0x2c] sm:$0xf] %v375
    %408 = vst [vmem:[#allocation2 + $0x30] sm:$0xff] %v376
    %409 = vst [vmem:[#allocation2 + $0x38] sm:$0xf] %v377
    %410 = vst [vmem:[#allocation2 + $0x3c] sm:$0xff] %v378
    %411 = vst [vmem:[#allocation2 + $0x44] sm:$0xf] %v379
    %412 = vst [vmem:[#allocation2 + $0x48] sm:$0xff] %v380
    %413 = vst [vmem:[#allocation2 + $0x50] sm:$0xf] %v381
    %414 = vst [vmem:[#allocation2 + $0x54] sm:$0xff] %v382
    %415 = vst [vmem:[#allocation2 + $0x5c] sm:$0xf] %v383
    %v416 = vld [vmem:[#allocation4] sm:$0xff]
    %v417 = vld [vmem:[#allocation4 + $0x8] sm:$0xf]
    %v418 = vld [vmem:[#allocation4 + $0xc] sm:$0xff]
    %v419 = vld [vmem:[#allocation4 + $0x14] sm:$0xf]
    %v420 = vld [vmem:[#allocation4 + $0x18] sm:$0xff]
    %v421 = vld [vmem:[#allocation4 + $0x20] sm:$0xf]
    %v422 = vld [vmem:[#allocation4 + $0x24] sm:$0xff]
    %v423 = vld [vmem:[#allocation4 + $0x2c] sm:$0xf]
    %v424 = vld [vmem:[#allocation4 + $0x30] sm:$0xff]
    %v425 = vld [vmem:[#allocation4 + $0x38] sm:$0xf]
    %v426 = vld [vmem:[#allocation4 + $0x3c] sm:$0xff]
    %v427 = vld [vmem:[#allocation4 + $0x44] sm:$0xf]
    %v428 = vld [vmem:[#allocation4 + $0x48] sm:$0xff]
    %v429 = vld [vmem:[#allocation4 + $0x50] sm:$0xf]
    %v430 = vld [vmem:[#allocation4 + $0x54] sm:$0xff]
    %v431 = vld [vmem:[#allocation4 + $0x5c] sm:$0xf]
    %v432 = vld [vmem:[#allocation4 + $0x60] sm:$0xff]
    %v433 = vld [vmem:[#allocation4 + $0x68] sm:$0xf]
    %v434 = vld [vmem:[#allocation4 + $0x6c] sm:$0xff]
    %v435 = vld [vmem:[#allocation4 + $0x74] sm:$0xf]
    %v436 = vld [vmem:[#allocation4 + $0x78] sm:$0xff]
    %v437 = vld [vmem:[#allocation4 + $0x80] sm:$0xf]
    %v438 = vld [vmem:[#allocation4 + $0x84] sm:$0xff]
    %v439 = vld [vmem:[#allocation4 + $0x8c] sm:$0xf]
    %v440 = vld [vmem:[#allocation4 + $0x90] sm:$0xff]
    %v441 = vld [vmem:[#allocation4 + $0x98] sm:$0xf]
    %v442 = vld [vmem:[#allocation4 + $0x9c] sm:$0xff]
    %v443 = vld [vmem:[#allocation4 + $0xa4] sm:$0xf]
    %v444 = vld [vmem:[#allocation4 + $0xa8] sm:$0xff]
    %v445 = vld [vmem:[#allocation4 + $0xb0] sm:$0xf]
    %v446 = vld [vmem:[#allocation4 + $0xb4] sm:$0xff]
    %v447 = vld [vmem:[#allocation4 + $0xbc] sm:$0xf]
    %v448 = vld [vmem:[%s4] sm:$0x1]
    %v481 = vunpack.c.l.b16 %v416
    %v482 = vunpack.c.h.b16 %v416
    %v483 = vunpack.c.l.b16 %v417
    %v484 = vunpack.c.l.b16 %v418
    %v485 = vunpack.c.h.b16 %v418
    %v486 = vunpack.c.l.b16 %v419
    %v487 = vunpack.c.l.b16 %v420
    %v488 = vunpack.c.h.b16 %v420
    %v489 = vunpack.c.l.b16 %v421
    %v490 = vunpack.c.l.b16 %v422
    %v491 = vunpack.c.h.b16 %v422
    %v492 = vunpack.c.l.b16 %v423
    %v493 = vunpack.c.l.b16 %v424
    %v494 = vunpack.c.h.b16 %v424
    %v495 = vunpack.c.l.b16 %v425
    %v496 = vunpack.c.l.b16 %v426
    %v497 = vunpack.c.h.b16 %v426
    %v498 = vunpack.c.l.b16 %v427
    %v499 = vunpack.c.l.b16 %v428
    %v500 = vunpack.c.h.b16 %v428
    %v501 = vunpack.c.l.b16 %v429
    %v502 = vunpack.c.l.b16 %v430
    %v503 = vunpack.c.h.b16 %v430
    %v504 = vunpack.c.l.b16 %v431
    %v505 = vunpack.c.l.b16 %v432
    %v506 = vunpack.c.h.b16 %v432
    %v507 = vunpack.c.l.b16 %v433
    %v508 = vunpack.c.l.b16 %v434
    %v509 = vunpack.c.h.b16 %v434
    %v510 = vunpack.c.l.b16 %v435
    %v511 = vunpack.c.l.b16 %v436
    %v512 = vunpack.c.h.b16 %v436
    %v513 = vunpack.c.l.b16 %v437
    %v514 = vunpack.c.l.b16 %v438
    %v515 = vunpack.c.h.b16 %v438
    %v516 = vunpack.c.l.b16 %v439
    %v517 = vunpack.c.l.b16 %v440
    %v518 = vunpack.c.h.b16 %v440
    %v519 = vunpack.c.l.b16 %v441
    %v520 = vunpack.c.l.b16 %v442
    %v521 = vunpack.c.h.b16 %v442
    %v522 = vunpack.c.l.b16 %v443
    %v523 = vunpack.c.l.b16 %v444
    %v524 = vunpack.c.h.b16 %v444
    %v525 = vunpack.c.l.b16 %v445
    %v526 = vunpack.c.l.b16 %v446
    %v527 = vunpack.c.h.b16 %v446
    %v528 = vunpack.c.l.b16 %v447
    %v529 = vpack.c.b16 %v484, %v481
    %v530 = vpack.c.b16 %v485, %v482
    %v531 = vpack.c.b16 %v486, %v483
    %v532 = vpack.c.b16 %v490, %v487
    %v533 = vpack.c.b16 %v491, %v488
    %v534 = vpack.c.b16 %v492, %v489
    %v535 = vpack.c.b16 %v496, %v493
    %v536 = vpack.c.b16 %v497, %v494
    %v537 = vpack.c.b16 %v498, %v495
    %v538 = vpack.c.b16 %v502, %v499
    %v539 = vpack.c.b16 %v503, %v500
    %v540 = vpack.c.b16 %v504, %v501
    %v541 = vpack.c.b16 %v508, %v505
    %v542 = vpack.c.b16 %v509, %v506
    %v543 = vpack.c.b16 %v510, %v507
    %v544 = vpack.c.b16 %v514, %v511
    %v545 = vpack.c.b16 %v515, %v512
    %v546 = vpack.c.b16 %v516, %v513
    %v547 = vpack.c.b16 %v520, %v517
    %v548 = vpack.c.b16 %v521, %v518
    %v549 = vpack.c.b16 %v522, %v519
    %v550 = vpack.c.b16 %v526, %v523
    %v551 = vpack.c.b16 %v527, %v524
    %v552 = vpack.c.b16 %v528, %v525
    %577 = vmatprep.subr.bf16.mxu0 %v530
    %578 = vmatpush1.bf16.msra.mxu0 %v529
    %579 = vmatprep.subr.bf16.mxu0 %v533
    %580 = vmatpush1.bf16.msra.mxu0 %v532
    %581 = vmatprep.subr.bf16.mxu0 %v536
    %582 = vmatpush1.bf16.msra.mxu0 %v535
    %583 = vmatprep.subr.bf16.mxu0 %v539
    %584 = vmatpush1.bf16.msra.mxu0 %v538
    %585 = vmatprep.subr.bf16.mxu0 %v542
    %586 = vmatpush1.bf16.msra.mxu0 %v541
    %587 = vmatprep.subr.bf16.mxu0 %v545
    %588 = vmatpush1.bf16.msra.mxu0 %v544
    %589 = vmatprep.subr.bf16.mxu0 %v548
    %590 = vmatpush1.bf16.msra.mxu0 %v547
    %591 = vmatprep.subr.bf16.mxu0 %v551
    %592 = vmatpush1.bf16.msra.mxu0 %v550
    %593 = vmatprep.subr.bf16.mxu0 0
    %594 = vmatpush1.bf16.msra.mxu0 0
    %595 = vmatprep.subr.bf16.mxu0 0
    %596 = vmatpush1.bf16.msra.mxu0 0
    %597 = vmatprep.subr.bf16.mxu0 0
    %598 = vmatpush1.bf16.msra.mxu0 0
    %599 = vmatprep.subr.bf16.mxu0 0
    %600 = vmatpush1.bf16.msra.mxu0 0
    %601 = vmatprep.subr.bf16.mxu0 0
    %602 = vmatpush1.bf16.msra.mxu0 0
    %603 = vmatprep.subr.bf16.mxu0 0
    %604 = vmatpush1.bf16.msra.mxu0 0
    %605 = vmatprep.subr.bf16.mxu0 0
    %606 = vmatpush1.bf16.msra.mxu0 0
    %607 = vmatprep.subr.bf16.mxu0 0
    %608 = vmatpush1.bf16.msra.mxu0 0
    %609 = vmatprep.mubr.bf16.mxu0 0
    %610 = vmatmul.mubr.bf16.gmra.mrb[0].mxu0 0
    %v611 = vpop.f32.mrb[0].mxu0
    %v612 = vadd.f32 0.0, %v611
    %v613 = vpop.f32.mrb[0].mxu0
    %v614 = vadd.f32 0.0, %v613
    %v615 = vpop.f32.mrb[0].mxu0
    %v616 = vpop.f32.mrb[0].mxu0
    %617 = vdwg.mxu0
    %618 = vmatprep.subr.bf16.mxu0 0
    %619 = vmatpush1.bf16.msra.mxu0 %v531
    %620 = vmatprep.subr.bf16.mxu0 0
    %621 = vmatpush1.bf16.msra.mxu0 %v534
    %622 = vmatprep.subr.bf16.mxu0 0
    %623 = vmatpush1.bf16.msra.mxu0 %v537
    %624 = vmatprep.subr.bf16.mxu0 0
    %625 = vmatpush1.bf16.msra.mxu0 %v540
    %626 = vmatprep.subr.bf16.mxu0 0
    %627 = vmatpush1.bf16.msra.mxu0 %v543
    %628 = vmatprep.subr.bf16.mxu0 0
    %629 = vmatpush1.bf16.msra.mxu0 %v546
    %630 = vmatprep.subr.bf16.mxu0 0
    %631 = vmatpush1.bf16.msra.mxu0 %v549
    %632 = vmatprep.subr.bf16.mxu0 0
    %633 = vmatpush1.bf16.msra.mxu0 %v552
    %634 = vmatprep.subr.bf16.mxu0 0
    %635 = vmatpush1.bf16.msra.mxu0 0
    %636 = vmatprep.subr.bf16.mxu0 0
    %637 = vmatpush1.bf16.msra.mxu0 0
    %638 = vmatprep.subr.bf16.mxu0 0
    %639 = vmatpush1.bf16.msra.mxu0 0
    %640 = vmatprep.subr.bf16.mxu0 0
    %641 = vmatpush1.bf16.msra.mxu0 0
    %642 = vmatprep.subr.bf16.mxu0 0
    %643 = vmatpush1.bf16.msra.mxu0 0
    %644 = vmatprep.subr.bf16.mxu0 0
    %645 = vmatpush1.bf16.msra.mxu0 0
    %646 = vmatprep.subr.bf16.mxu0 0
    %647 = vmatpush1.bf16.msra.mxu0 0
    %648 = vmatprep.subr.bf16.mxu0 0
    %649 = vmatpush1.bf16.msra.mxu0 0
    %650 = vmatprep.mubr.bf16.mxu0 0
    %651 = vmatmul.mubr.bf16.gmra.mrb[0].mxu0 0
    %v652 = vpop.f32.mrb[0].mxu0
    %v653 = vadd.f32 0.0, %v652
    %v654 = vpop.f32.mrb[0].mxu0
    %v655 = vpop.f32.mrb[0].mxu0
    %v656 = vpop.f32.mrb[0].mxu0
    %657 = vdwg.mxu0
    %v658 = vld [vmem:[#allocation2] sm:$0xff]
    %v659 = vld [vmem:[#allocation2 + $0x8] sm:$0xf]
    %v660 = vunpack.c.l.bf16 %v658
    %v661 = vunpack.c.h.bf16 %v658
    %v662 = vunpack.c.l.bf16 %v659
    %v663 = vadd.f32 %v660, %v612
    %v664 = vxor.u32 %v663, 2147483648
    %v665 = vmul.f32 %v664, 1.442695
    %v666 = vpow.pop %v665
    %v667 = vadd.f32 %v666, 1.0
    %v668 = vrcp.pop %v667
    %v669 = vmul.f32 1.0, %v668
    %v670 = vadd.f32 %v661, %v614
    %v671 = vxor.u32 %v670, 2147483648
    %v672 = vmul.f32 %v671, 1.442695
    %v673 = vpow.pop %v672
    %v674 = vadd.f32 %v673, 1.0
    %v675 = vrcp.pop %v674
    %v676 = vmul.f32 1.0, %v675
    %v678 = vlaneseq
    %v679 = vshrl.u32 %v678, 7
    %v680 = vsub.s32 0, %v679
    %v681 = vrot.slane %v448, %v680
    %v683 = vadd.f32 %v653, %v681
    %v684 = vmul.f32 %v669, %v683
    %v685 = vadd.f32 %v662, %v684
    %v686 = vtanh.pop %v685
    %v687 = vsub.f32 1.0, %v676
    %v688 = vmul.f32 %v687, %v686
    %v689 = vmul.f32 %v676, 0.0
    %v690 = vadd.f32 %v688, %v689
    %v691 = vpack.c.bf16 %v690, %v690
    %692 = vst [vmem:[#allocation3] sm:$0xf] %v691
    %693 = vmatprep.subr.bf16.mxu0 %v530
    %694 = vmatpush1.bf16.msra.mxu0 %v529
    %695 = vmatprep.subr.bf16.mxu0 %v533
    %696 = vmatpush1.bf16.msra.mxu0 %v532
    %697 = vmatprep.subr.bf16.mxu0 %v536
    %698 = vmatpush1.bf16.msra.mxu0 %v535
    %699 = vmatprep.subr.bf16.mxu0 %v539
    %700 = vmatpush1.bf16.msra.mxu0 %v538
    %701 = vmatprep.subr.bf16.mxu0 %v542
    %702 = vmatpush1.bf16.msra.mxu0 %v541
    %703 = vmatprep.subr.bf16.mxu0 %v545
    %704 = vmatpush1.bf16.msra.mxu0 %v544
    %705 = vmatprep.subr.bf16.mxu0 %v548
    %706 = vmatpush1.bf16.msra.mxu0 %v547
    %707 = vmatprep.subr.bf16.mxu0 %v551
    %708 = vmatpush1.bf16.msra.mxu0 %v550
    %709 = vmatprep.subr.bf16.mxu0 0
    %710 = vmatpush1.bf16.msra.mxu0 0
    %711 = vmatprep.subr.bf16.mxu0 0
    %712 = vmatpush1.bf16.msra.mxu0 0
    %713 = vmatprep.subr.bf16.mxu0 0
    %714 = vmatpush1.bf16.msra.mxu0 0
    %715 = vmatprep.subr.bf16.mxu0 0
    %716 = vmatpush1.bf16.msra.mxu0 0
    %717 = vmatprep.subr.bf16.mxu0 0
    %718 = vmatpush1.bf16.msra.mxu0 0
    %719 = vmatprep.subr.bf16.mxu0 0
    %720 = vmatpush1.bf16.msra.mxu0 0
    %721 = vmatprep.subr.bf16.mxu0 0
    %722 = vmatpush1.bf16.msra.mxu0 0
    %723 = vmatprep.subr.bf16.mxu0 0
    %724 = vmatpush1.bf16.msra.mxu0 0
    %725 = vmatprep.mubr.bf16.mxu0 0
    %726 = vmatmul.mubr.bf16.gmra.mrb[0].mxu0 %v691
    %v727 = vpop.f32.mrb[0].mxu0
    %v728 = vadd.f32 0.0, %v727
    %v729 = vpop.f32.mrb[0].mxu0
    %v730 = vadd.f32 0.0, %v729
    %v731 = vpop.f32.mrb[0].mxu0
    %v732 = vpop.f32.mrb[0].mxu0
    %733 = vdwg.mxu0
    %734 = vmatprep.subr.bf16.mxu0 0
    %735 = vmatpush1.bf16.msra.mxu0 %v531
    %736 = vmatprep.subr.bf16.mxu0 0
    %737 = vmatpush1.bf16.msra.mxu0 %v534
    %738 = vmatprep.subr.bf16.mxu0 0
    %739 = vmatpush1.bf16.msra.mxu0 %v537
    %740 = vmatprep.subr.bf16.mxu0 0
    %741 = vmatpush1.bf16.msra.mxu0 %v540
    %742 = vmatprep.subr.bf16.mxu0 0
    %743 = vmatpush1.bf16.msra.mxu0 %v543
    %744 = vmatprep.subr.bf16.mxu0 0
    %745 = vmatpush1.bf16.msra.mxu0 %v546
    %746 = vmatprep.subr.bf16.mxu0 0
    %747 = vmatpush1.bf16.msra.mxu0 %v549
    %748 = vmatprep.subr.bf16.mxu0 0
    %749 = vmatpush1.bf16.msra.mxu0 %v552
    %750 = vmatprep.subr.bf16.mxu0 0
    %751 = vmatpush1.bf16.msra.mxu0 0
    %752 = vmatprep.subr.bf16.mxu0 0
    %753 = vmatpush1.bf16.msra.mxu0 0
    %754 = vmatprep.subr.bf16.mxu0 0
    %755 = vmatpush1.bf16.msra.mxu0 0
    %756 = vmatprep.subr.bf16.mxu0 0
    %757 = vmatpush1.bf16.msra.mxu0 0
    %758 = vmatprep.subr.bf16.mxu0 0
    %759 = vmatpush1.bf16.msra.mxu0 0
    %760 = vmatprep.subr.bf16.mxu0 0
    %761 = vmatpush1.bf16.msra.mxu0 0
    %762 = vmatprep.subr.bf16.mxu0 0
    %763 = vmatpush1.bf16.msra.mxu0 0
    %764 = vmatprep.subr.bf16.mxu0 0
    %765 = vmatpush1.bf16.msra.mxu0 0
    %766 = vmatprep.mubr.bf16.mxu0 0
    %767 = vmatmul.mubr.bf16.gmra.mrb[0].mxu0 %v691
    %v768 = vpop.f32.mrb[0].mxu0
    %v769 = vadd.f32 0.0, %v768
    %v770 = vpop.f32.mrb[0].mxu0
    %v771 = vpop.f32.mrb[0].mxu0
    %v772 = vpop.f32.mrb[0].mxu0
    %773 = vdwg.mxu0
    %s774 = scalar_lea.vmem [#allocation2], 12
    %v775 = vld [vmem:[%s774] sm:$0xff]
    %v776 = vld [vmem:[%s774 + $0x8] sm:$0xf]
    %v777 = vunpack.c.l.bf16 %v775
    %v778 = vunpack.c.h.bf16 %v775
    %v779 = vunpack.c.l.bf16 %v776
    %v780 = vadd.f32 %v777, %v728
    %v781 = vxor.u32 %v780, 2147483648
    %v782 = vmul.f32 %v781, 1.442695
    %v783 = vpow.pop %v782
    %v784 = vadd.f32 %v783, 1.0
    %v785 = vrcp.pop %v784
    %v786 = vmul.f32 1.0, %v785
    %v787 = vadd.f32 %v778, %v730
    %v788 = vxor.u32 %v787, 2147483648
    %v789 = vmul.f32 %v788, 1.442695
    %v790 = vpow.pop %v789
    %v791 = vadd.f32 %v790, 1.0
    %v792 = vrcp.pop %v791
    %v793 = vmul.f32 1.0, %v792
    %v794 = vadd.f32 %v769, %v681
    %v795 = vmul.f32 %v786, %v794
    %v796 = vadd.f32 %v779, %v795
    %v797 = vtanh.pop %v796
    %v798 = vsub.f32 1.0, %v793
    %v799 = vmul.f32 %v798, %v797
    %v800 = vmul.f32 %v793, %v690
    %v801 = vadd.f32 %v799, %v800
    %v802 = vpack.c.bf16 %v801, %v801
    %s803 = scalar_lea.vmem [#allocation3], 4
    %804 = vst [vmem:[%s803] sm:$0xf] %v802
    %805 = vmatprep.subr.bf16.mxu0 %v530
    %806 = vmatpush1.bf16.msra.mxu0 %v529
    %807 = vmatprep.subr.bf16.mxu0 %v533
    %808 = vmatpush1.bf16.msra.mxu0 %v532
    %809 = vmatprep.subr.bf16.mxu0 %v536
    %810 = vmatpush1.bf16.msra.mxu0 %v535
    %811 = vmatprep.subr.bf16.mxu0 %v539
    %812 = vmatpush1.bf16.msra.mxu0 %v538
    %813 = vmatprep.subr.bf16.mxu0 %v542
    %814 = vmatpush1.bf16.msra.mxu0 %v541
    %815 = vmatprep.subr.bf16.mxu0 %v545
    %816 = vmatpush1.bf16.msra.mxu0 %v544
    %817 = vmatprep.subr.bf16.mxu0 %v548
    %818 = vmatpush1.bf16.msra.mxu0 %v547
    %819 = vmatprep.subr.bf16.mxu0 %v551
    %820 = vmatpush1.bf16.msra.mxu0 %v550
    %821 = vmatprep.subr.bf16.mxu0 0
    %822 = vmatpush1.bf16.msra.mxu0 0
    %823 = vmatprep.subr.bf16.mxu0 0
    %824 = vmatpush1.bf16.msra.mxu0 0
    %825 = vmatprep.subr.bf16.mxu0 0
    %826 = vmatpush1.bf16.msra.mxu0 0
    %827 = vmatprep.subr.bf16.mxu0 0
    %828 = vmatpush1.bf16.msra.mxu0 0
    %829 = vmatprep.subr.bf16.mxu0 0
    %830 = vmatpush1.bf16.msra.mxu0 0
    %831 = vmatprep.subr.bf16.mxu0 0
    %832 = vmatpush1.bf16.msra.mxu0 0
    %833 = vmatprep.subr.bf16.mxu0 0
    %834 = vmatpush1.bf16.msra.mxu0 0
    %835 = vmatprep.subr.bf16.mxu0 0
    %836 = vmatpush1.bf16.msra.mxu0 0
    %837 = vmatprep.mubr.bf16.mxu0 0
    %838 = vmatmul.mubr.bf16.gmra.mrb[0].mxu0 %v802
    %v839 = vpop.f32.mrb[0].mxu0
    %v840 = vadd.f32 0.0, %v839
    %v841 = vpop.f32.mrb[0].mxu0
    %v842 = vadd.f32 0.0, %v841
    %v843 = vpop.f32.mrb[0].mxu0
    %v844 = vpop.f32.mrb[0].mxu0
    %845 = vdwg.mxu0
    %846 = vmatprep.subr.bf16.mxu0 0
    %847 = vmatpush1.bf16.msra.mxu0 %v531
    %848 = vmatprep.subr.bf16.mxu0 0
    %849 = vmatpush1.bf16.msra.mxu0 %v534
    %850 = vmatprep.subr.bf16.mxu0 0
    %851 = vmatpush1.bf16.msra.mxu0 %v537
    %852 = vmatprep.subr.bf16.mxu0 0
    %853 = vmatpush1.bf16.msra.mxu0 %v540
    %854 = vmatprep.subr.bf16.mxu0 0
    %855 = vmatpush1.bf16.msra.mxu0 %v543
    %856 = vmatprep.subr.bf16.mxu0 0
    %857 = vmatpush1.bf16.msra.mxu0 %v546
    %858 = vmatprep.subr.bf16.mxu0 0
    %859 = vmatpush1.bf16.msra.mxu0 %v549
    %860 = vmatprep.subr.bf16.mxu0 0
    %861 = vmatpush1.bf16.msra.mxu0 %v552
    %862 = vmatprep.subr.bf16.mxu0 0
    %863 = vmatpush1.bf16.msra.mxu0 0
    %864 = vmatprep.subr.bf16.mxu0 0
    %865 = vmatpush1.bf16.msra.mxu0 0
    %866 = vmatprep.subr.bf16.mxu0 0
    %867 = vmatpush1.bf16.msra.mxu0 0
    %868 = vmatprep.subr.bf16.mxu0 0
    %869 = vmatpush1.bf16.msra.mxu0 0
    %870 = vmatprep.subr.bf16.mxu0 0
    %871 = vmatpush1.bf16.msra.mxu0 0
    %872 = vmatprep.subr.bf16.mxu0 0
    %873 = vmatpush1.bf16.msra.mxu0 0
    %874 = vmatprep.subr.bf16.mxu0 0
    %875 = vmatpush1.bf16.msra.mxu0 0
    %876 = vmatprep.subr.bf16.mxu0 0
    %877 = vmatpush1.bf16.msra.mxu0 0
    %878 = vmatprep.mubr.bf16.mxu0 0
    %879 = vmatmul.mubr.bf16.gmra.mrb[0].mxu0 %v802
    %v880 = vpop.f32.mrb[0].mxu0
    %v881 = vadd.f32 0.0, %v880
    %v882 = vpop.f32.mrb[0].mxu0
    %v883 = vpop.f32.mrb[0].mxu0
    %v884 = vpop.f32.mrb[0].mxu0
    %885 = vdwg.mxu0
    %s886 = scalar_lea.vmem [#allocation2], 24
    %v887 = vld [vmem:[%s886] sm:$0xff]
    %v888 = vld [vmem:[%s886 + $0x8] sm:$0xf]
    %v889 = vunpack.c.l.bf16 %v887
    %v890 = vunpack.c.h.bf16 %v887
    %v891 = vunpack.c.l.bf16 %v888
    %v892 = vadd.f32 %v889, %v840
    %v893 = vxor.u32 %v892, 2147483648
    %v894 = vmul.f32 %v893, 1.442695
    %v895 = vpow.pop %v894
    %v896 = vadd.f32 %v895, 1.0
    %v897 = vrcp.pop %v896
    %v898 = vmul.f32 1.0, %v897
    %v899 = vadd.f32 %v890, %v842
    %v900 = vxor.u32 %v899, 2147483648
    %v901 = vmul.f32 %v900, 1.442695
    %v902 = vpow.pop %v901
    %v903 = vadd.f32 %v902, 1.0
    %v904 = vrcp.pop %v903
    %v905 = vmul.f32 1.0, %v904
    %v906 = vadd.f32 %v881, %v681
    %v907 = vmul.f32 %v898, %v906
    %v908 = vadd.f32 %v891, %v907
    %v909 = vtanh.pop %v908
    %v910 = vsub.f32 1.0, %v905
    %v911 = vmul.f32 %v910, %v909
    %v912 = vmul.f32 %v905, %v801
    %v913 = vadd.f32 %v911, %v912
    %v914 = vpack.c.bf16 %v913, %v913
    %s915 = scalar_lea.vmem [#allocation3], 8
    %916 = vst [vmem:[%s915] sm:$0xf] %v914
    %917 = vmatprep.subr.bf16.mxu0 %v530
    %918 = vmatpush1.bf16.msra.mxu0 %v529
    %919 = vmatprep.subr.bf16.mxu0 %v533
    %920 = vmatpush1.bf16.msra.mxu0 %v532
    %921 = vmatprep.subr.bf16.mxu0 %v536
    %922 = vmatpush1.bf16.msra.mxu0 %v535
    %923 = vmatprep.subr.bf16.mxu0 %v539
    %924 = vmatpush1.bf16.msra.mxu0 %v538
    %925 = vmatprep.subr.bf16.mxu0 %v542
    %926 = vmatpush1.bf16.msra.mxu0 %v541
    %927 = vmatprep.subr.bf16.mxu0 %v545
    %928 = vmatpush1.bf16.msra.mxu0 %v544
    %929 = vmatprep.subr.bf16.mxu0 %v548
    %930 = vmatpush1.bf16.msra.mxu0 %v547
    %931 = vmatprep.subr.bf16.mxu0 %v551
    %932 = vmatpush1.bf16.msra.mxu0 %v550
    %933 = vmatprep.subr.bf16.mxu0 0
    %934 = vmatpush1.bf16.msra.mxu0 0
    %935 = vmatprep.subr.bf16.mxu0 0
    %936 = vmatpush1.bf16.msra.mxu0 0
    %937 = vmatprep.subr.bf16.mxu0 0
    %938 = vmatpush1.bf16.msra.mxu0 0
    %939 = vmatprep.subr.bf16.mxu0 0
    %940 = vmatpush1.bf16.msra.mxu0 0
    %941 = vmatprep.subr.bf16.mxu0 0
    %942 = vmatpush1.bf16.msra.mxu0 0
    %943 = vmatprep.subr.bf16.mxu0 0
    %944 = vmatpush1.bf16.msra.mxu0 0
    %945 = vmatprep.subr.bf16.mxu0 0
    %946 = vmatpush1.bf16.msra.mxu0 0
    %947 = vmatprep.subr.bf16.mxu0 0
    %948 = vmatpush1.bf16.msra.mxu0 0
    %949 = vmatprep.mubr.bf16.mxu0 0
    %950 = vmatmul.mubr.bf16.gmra.mrb[0].mxu0 %v914
    %v951 = vpop.f32.mrb[0].mxu0
    %v952 = vadd.f32 0.0, %v951
    %v953 = vpop.f32.mrb[0].mxu0
    %v954 = vadd.f32 0.0, %v953
    %v955 = vpop.f32.mrb[0].mxu0
    %v956 = vpop.f32.mrb[0].mxu0
    %957 = vdwg.mxu0
    %958 = vmatprep.subr.bf16.mxu0 0
    %959 = vmatpush1.bf16.msra.mxu0 %v531
    %960 = vmatprep.subr.bf16.mxu0 0
    %961 = vmatpush1.bf16.msra.mxu0 %v534
    %962 = vmatprep.subr.bf16.mxu0 0
    %963 = vmatpush1.bf16.msra.mxu0 %v537
    %964 = vmatprep.subr.bf16.mxu0 0
    %965 = vmatpush1.bf16.msra.mxu0 %v540
    %966 = vmatprep.subr.bf16.mxu0 0
    %967 = vmatpush1.bf16.msra.mxu0 %v543
    %968 = vmatprep.subr.bf16.mxu0 0
    %969 = vmatpush1.bf16.msra.mxu0 %v546
    %970 = vmatprep.subr.bf16.mxu0 0
    %971 = vmatpush1.bf16.msra.mxu0 %v549
    %972 = vmatprep.subr.bf16.mxu0 0
    %973 = vmatpush1.bf16.msra.mxu0 %v552
    %974 = vmatprep.subr.bf16.mxu0 0
    %975 = vmatpush1.bf16.msra.mxu0 0
    %976 = vmatprep.subr.bf16.mxu0 0
    %977 = vmatpush1.bf16.msra.mxu0 0
    %978 = vmatprep.subr.bf16.mxu0 0
    %979 = vmatpush1.bf16.msra.mxu0 0
    %980 = vmatprep.subr.bf16.mxu0 0
    %981 = vmatpush1.bf16.msra.mxu0 0
    %982 = vmatprep.subr.bf16.mxu0 0
    %983 = vmatpush1.bf16.msra.mxu0 0
    %984 = vmatprep.subr.bf16.mxu0 0
    %985 = vmatpush1.bf16.msra.mxu0 0
    %986 = vmatprep.subr.bf16.mxu0 0
    %987 = vmatpush1.bf16.msra.mxu0 0
    %988 = vmatprep.subr.bf16.mxu0 0
    %989 = vmatpush1.bf16.msra.mxu0 0
    %990 = vmatprep.mubr.bf16.mxu0 0
    %991 = vmatmul.mubr.bf16.gmra.mrb[0].mxu0 %v914
    %v992 = vpop.f32.mrb[0].mxu0
    %v993 = vadd.f32 0.0, %v992
    %v994 = vpop.f32.mrb[0].mxu0
    %v995 = vpop.f32.mrb[0].mxu0
    %v996 = vpop.f32.mrb[0].mxu0
    %997 = vdwg.mxu0
    %s998 = scalar_lea.vmem [#allocation2], 36
    %v999 = vld [vmem:[%s998] sm:$0xff]
    %v1000 = vld [vmem:[%s998 + $0x8] sm:$0xf]
    %v1001 = vunpack.c.l.bf16 %v999
    %v1002 = vunpack.c.h.bf16 %v999
    %v1003 = vunpack.c.l.bf16 %v1000
    %v1004 = vadd.f32 %v1001, %v952
    %v1005 = vxor.u32 %v1004, 2147483648
    %v1006 = vmul.f32 %v1005, 1.442695
    %v1007 = vpow.pop %v1006
    %v1008 = vadd.f32 %v1007, 1.0
    %v1009 = vrcp.pop %v1008
    %v1010 = vmul.f32 1.0, %v1009
    %v1011 = vadd.f32 %v1002, %v954
    %v1012 = vxor.u32 %v1011, 2147483648
    %v1013 = vmul.f32 %v1012, 1.442695
    %v1014 = vpow.pop %v1013
    %v1015 = vadd.f32 %v1014, 1.0
    %v1016 = vrcp.pop %v1015
    %v1017 = vmul.f32 1.0, %v1016
    %v1018 = vadd.f32 %v993, %v681
    %v1019 = vmul.f32 %v1010, %v1018
    %v1020 = vadd.f32 %v1003, %v1019
    %v1021 = vtanh.pop %v1020
    %v1022 = vsub.f32 1.0, %v1017
    %v1023 = vmul.f32 %v1022, %v1021
    %v1024 = vmul.f32 %v1017, %v913
    %v1025 = vadd.f32 %v1023, %v1024
    %v1026 = vpack.c.bf16 %v1025, %v1025
    %s1027 = scalar_lea.vmem [#allocation3], 12
    %1028 = vst [vmem:[%s1027] sm:$0xf] %v1026
    %1029 = vmatprep.subr.bf16.mxu0 %v530
    %1030 = vmatpush1.bf16.msra.mxu0 %v529
    %1031 = vmatprep.subr.bf16.mxu0 %v533
    %1032 = vmatpush1.bf16.msra.mxu0 %v532
    %1033 = vmatprep.subr.bf16.mxu0 %v536
    %1034 = vmatpush1.bf16.msra.mxu0 %v535
    %1035 = vmatprep.subr.bf16.mxu0 %v539
    %1036 = vmatpush1.bf16.msra.mxu0 %v538
    %1037 = vmatprep.subr.bf16.mxu0 %v542
    %1038 = vmatpush1.bf16.msra.mxu0 %v541
    %1039 = vmatprep.subr.bf16.mxu0 %v545
    %1040 = vmatpush1.bf16.msra.mxu0 %v544
    %1041 = vmatprep.subr.bf16.mxu0 %v548
    %1042 = vmatpush1.bf16.msra.mxu0 %v547
    %1043 = vmatprep.subr.bf16.mxu0 %v551
    %1044 = vmatpush1.bf16.msra.mxu0 %v550
    %1045 = vmatprep.subr.bf16.mxu0 0
    %1046 = vmatpush1.bf16.msra.mxu0 0
    %1047 = vmatprep.subr.bf16.mxu0 0
    %1048 = vmatpush1.bf16.msra.mxu0 0
    %1049 = vmatprep.subr.bf16.mxu0 0
    %1050 = vmatpush1.bf16.msra.mxu0 0
    %1051 = vmatprep.subr.bf16.mxu0 0
    %1052 = vmatpush1.bf16.msra.mxu0 0
    %1053 = vmatprep.subr.bf16.mxu0 0
    %1054 = vmatpush1.bf16.msra.mxu0 0
    %1055 = vmatprep.subr.bf16.mxu0 0
    %1056 = vmatpush1.bf16.msra.mxu0 0
    %1057 = vmatprep.subr.bf16.mxu0 0
    %1058 = vmatpush1.bf16.msra.mxu0 0
    %1059 = vmatprep.subr.bf16.mxu0 0
    %1060 = vmatpush1.bf16.msra.mxu0 0
    %1061 = vmatprep.mubr.bf16.mxu0 0
    %1062 = vmatmul.mubr.bf16.gmra.mrb[0].mxu0 %v1026
    %v1063 = vpop.f32.mrb[0].mxu0
    %v1064 = vadd.f32 0.0, %v1063
    %v1065 = vpop.f32.mrb[0].mxu0
    %v1066 = vadd.f32 0.0, %v1065
    %v1067 = vpop.f32.mrb[0].mxu0
    %v1068 = vpop.f32.mrb[0].mxu0
    %1069 = vdwg.mxu0
    %1070 = vmatprep.subr.bf16.mxu0 0
    %1071 = vmatpush1.bf16.msra.mxu0 %v531
    %1072 = vmatprep.subr.bf16.mxu0 0
    %1073 = vmatpush1.bf16.msra.mxu0 %v534
    %1074 = vmatprep.subr.bf16.mxu0 0
    %1075 = vmatpush1.bf16.msra.mxu0 %v537
    %1076 = vmatprep.subr.bf16.mxu0 0
    %1077 = vmatpush1.bf16.msra.mxu0 %v540
    %1078 = vmatprep.subr.bf16.mxu0 0
    %1079 = vmatpush1.bf16.msra.mxu0 %v543
    %1080 = vmatprep.subr.bf16.mxu0 0
    %1081 = vmatpush1.bf16.msra.mxu0 %v546
    %1082 = vmatprep.subr.bf16.mxu0 0
    %1083 = vmatpush1.bf16.msra.mxu0 %v549
    %1084 = vmatprep.subr.bf16.mxu0 0
    %1085 = vmatpush1.bf16.msra.mxu0 %v552
    %1086 = vmatprep.subr.bf16.mxu0 0
    %1087 = vmatpush1.bf16.msra.mxu0 0
    %1088 = vmatprep.subr.bf16.mxu0 0
    %1089 = vmatpush1.bf16.msra.mxu0 0
    %1090 = vmatprep.subr.bf16.mxu0 0
    %1091 = vmatpush1.bf16.msra.mxu0 0
    %1092 = vmatprep.subr.bf16.mxu0 0
    %1093 = vmatpush1.bf16.msra.mxu0 0
    %1094 = vmatprep.subr.bf16.mxu0 0
    %1095 = vmatpush1.bf16.msra.mxu0 0
    %1096 = vmatprep.subr.bf16.mxu0 0
    %1097 = vmatpush1.bf16.msra.mxu0 0
    %1098 = vmatprep.subr.bf16.mxu0 0
    %1099 = vmatpush1.bf16.msra.mxu0 0
    %1100 = vmatprep.subr.bf16.mxu0 0
    %1101 = vmatpush1.bf16.msra.mxu0 0
    %1102 = vmatprep.mubr.bf16.mxu0 0
    %1103 = vmatmul.mubr.bf16.gmra.mrb[0].mxu0 %v1026
    %v1104 = vpop.f32.mrb[0].mxu0
    %v1105 = vadd.f32 0.0, %v1104
    %v1106 = vpop.f32.mrb[0].mxu0
    %v1107 = vpop.f32.mrb[0].mxu0
    %v1108 = vpop.f32.mrb[0].mxu0
    %1109 = vdwg.mxu0
    %s1110 = scalar_lea.vmem [#allocation2], 48
    %v1111 = vld [vmem:[%s1110] sm:$0xff]
    %v1112 = vld [vmem:[%s1110 + $0x8] sm:$0xf]
    %v1113 = vunpack.c.l.bf16 %v1111
    %v1114 = vunpack.c.h.bf16 %v1111
    %v1115 = vunpack.c.l.bf16 %v1112
    %v1116 = vadd.f32 %v1113, %v1064
    %v1117 = vxor.u32 %v1116, 2147483648
    %v1118 = vmul.f32 %v1117, 1.442695
    %v1119 = vpow.pop %v1118
    %v1120 = vadd.f32 %v1119, 1.0
    %v1121 = vrcp.pop %v1120
    %v1122 = vmul.f32 1.0, %v1121
    %v1123 = vadd.f32 %v1114, %v1066
    %v1124 = vxor.u32 %v1123, 2147483648
    %v1125 = vmul.f32 %v1124, 1.442695
    %v1126 = vpow.pop %v1125
    %v1127 = vadd.f32 %v1126, 1.0
    %v1128 = vrcp.pop %v1127
    %v1129 = vmul.f32 1.0, %v1128
    %v1130 = vadd.f32 %v1105, %v681
    %v1131 = vmul.f32 %v1122, %v1130
    %v1132 = vadd.f32 %v1115, %v1131
    %v1133 = vtanh.pop %v1132
    %v1134 = vsub.f32 1.0, %v1129
    %v1135 = vmul.f32 %v1134, %v1133
    %v1136 = vmul.f32 %v1129, %v1025
    %v1137 = vadd.f32 %v1135, %v1136
    %v1138 = vpack.c.bf16 %v1137, %v1137
    %s1139 = scalar_lea.vmem [#allocation3], 16
    %1140 = vst [vmem:[%s1139] sm:$0xf] %v1138
    %1141 = vmatprep.subr.bf16.mxu0 %v530
    %1142 = vmatpush1.bf16.msra.mxu0 %v529
    %1143 = vmatprep.subr.bf16.mxu0 %v533
    %1144 = vmatpush1.bf16.msra.mxu0 %v532
    %1145 = vmatprep.subr.bf16.mxu0 %v536
    %1146 = vmatpush1.bf16.msra.mxu0 %v535
    %1147 = vmatprep.subr.bf16.mxu0 %v539
    %1148 = vmatpush1.bf16.msra.mxu0 %v538
    %1149 = vmatprep.subr.bf16.mxu0 %v542
    %1150 = vmatpush1.bf16.msra.mxu0 %v541
    %1151 = vmatprep.subr.bf16.mxu0 %v545
    %1152 = vmatpush1.bf16.msra.mxu0 %v544
    %1153 = vmatprep.subr.bf16.mxu0 %v548
    %1154 = vmatpush1.bf16.msra.mxu0 %v547
    %1155 = vmatprep.subr.bf16.mxu0 %v551
    %1156 = vmatpush1.bf16.msra.mxu0 %v550
    %1157 = vmatprep.subr.bf16.mxu0 0
    %1158 = vmatpush1.bf16.msra.mxu0 0
    %1159 = vmatprep.subr.bf16.mxu0 0
    %1160 = vmatpush1.bf16.msra.mxu0 0
    %1161 = vmatprep.subr.bf16.mxu0 0
    %1162 = vmatpush1.bf16.msra.mxu0 0
    %1163 = vmatprep.subr.bf16.mxu0 0
    %1164 = vmatpush1.bf16.msra.mxu0 0
    %1165 = vmatprep.subr.bf16.mxu0 0
    %1166 = vmatpush1.bf16.msra.mxu0 0
    %1167 = vmatprep.subr.bf16.mxu0 0
    %1168 = vmatpush1.bf16.msra.mxu0 0
    %1169 = vmatprep.subr.bf16.mxu0 0
    %1170 = vmatpush1.bf16.msra.mxu0 0
    %1171 = vmatprep.subr.bf16.mxu0 0
    %1172 = vmatpush1.bf16.msra.mxu0 0
    %1173 = vmatprep.mubr.bf16.mxu0 0
    %1174 = vmatmul.mubr.bf16.gmra.mrb[0].mxu0 %v1138
    %v1175 = vpop.f32.mrb[0].mxu0
    %v1176 = vadd.f32 0.0, %v1175
    %v1177 = vpop.f32.mrb[0].mxu0
    %v1178 = vadd.f32 0.0, %v1177
    %v1179 = vpop.f32.mrb[0].mxu0
    %v1180 = vpop.f32.mrb[0].mxu0
    %1181 = vdwg.mxu0
    %1182 = vmatprep.subr.bf16.mxu0 0
    %1183 = vmatpush1.bf16.msra.mxu0 %v531
    %1184 = vmatprep.subr.bf16.mxu0 0
    %1185 = vmatpush1.bf16.msra.mxu0 %v534
    %1186 = vmatprep.subr.bf16.mxu0 0
    %1187 = vmatpush1.bf16.msra.mxu0 %v537
    %1188 = vmatprep.subr.bf16.mxu0 0
    %1189 = vmatpush1.bf16.msra.mxu0 %v540
    %1190 = vmatprep.subr.bf16.mxu0 0
    %1191 = vmatpush1.bf16.msra.mxu0 %v543
    %1192 = vmatprep.subr.bf16.mxu0 0
    %1193 = vmatpush1.bf16.msra.mxu0 %v546
    %1194 = vmatprep.subr.bf16.mxu0 0
    %1195 = vmatpush1.bf16.msra.mxu0 %v549
    %1196 = vmatprep.subr.bf16.mxu0 0
    %1197 = vmatpush1.bf16.msra.mxu0 %v552
    %1198 = vmatprep.subr.bf16.mxu0 0
    %1199 = vmatpush1.bf16.msra.mxu0 0
    %1200 = vmatprep.subr.bf16.mxu0 0
    %1201 = vmatpush1.bf16.msra.mxu0 0
    %1202 = vmatprep.subr.bf16.mxu0 0
    %1203 = vmatpush1.bf16.msra.mxu0 0
    %1204 = vmatprep.subr.bf16.mxu0 0
    %1205 = vmatpush1.bf16.msra.mxu0 0
    %1206 = vmatprep.subr.bf16.mxu0 0
    %1207 = vmatpush1.bf16.msra.mxu0 0
    %1208 = vmatprep.subr.bf16.mxu0 0
    %1209 = vmatpush1.bf16.msra.mxu0 0
    %1210 = vmatprep.subr.bf16.mxu0 0
    %1211 = vmatpush1.bf16.msra.mxu0 0
    %1212 = vmatprep.subr.bf16.mxu0 0
    %1213 = vmatpush1.bf16.msra.mxu0 0
    %1214 = vmatprep.mubr.bf16.mxu0 0
    %1215 = vmatmul.mubr.bf16.gmra.mrb[0].mxu0 %v1138
    %v1216 = vpop.f32.mrb[0].mxu0
    %v1217 = vadd.f32 0.0, %v1216
    %v1218 = vpop.f32.mrb[0].mxu0
    %v1219 = vpop.f32.mrb[0].mxu0
    %v1220 = vpop.f32.mrb[0].mxu0
    %1221 = vdwg.mxu0
    %s1222 = scalar_lea.vmem [#allocation2], 60
    %v1223 = vld [vmem:[%s1222] sm:$0xff]
    %v1224 = vld [vmem:[%s1222 + $0x8] sm:$0xf]
    %v1225 = vunpack.c.l.bf16 %v1223
    %v1226 = vunpack.c.h.bf16 %v1223
    %v1227 = vunpack.c.l.bf16 %v1224
    %v1228 = vadd.f32 %v1225, %v1176
    %v1229 = vxor.u32 %v1228, 2147483648
    %v1230 = vmul.f32 %v1229, 1.442695
    %v1231 = vpow.pop %v1230
    %v1232 = vadd.f32 %v1231, 1.0
    %v1233 = vrcp.pop %v1232
    %v1234 = vmul.f32 1.0, %v1233
    %v1235 = vadd.f32 %v1226, %v1178
    %v1236 = vxor.u32 %v1235, 2147483648
    %v1237 = vmul.f32 %v1236, 1.442695
    %v1238 = vpow.pop %v1237
    %v1239 = vadd.f32 %v1238, 1.0
    %v1240 = vrcp.pop %v1239
    %v1241 = vmul.f32 1.0, %v1240
    %v1242 = vadd.f32 %v1217, %v681
    %v1243 = vmul.f32 %v1234, %v1242
    %v1244 = vadd.f32 %v1227, %v1243
    %v1245 = vtanh.pop %v1244
    %v1246 = vsub.f32 1.0, %v1241
    %v1247 = vmul.f32 %v1246, %v1245
    %v1248 = vmul.f32 %v1241, %v1137
    %v1249 = vadd.f32 %v1247, %v1248
    %v1250 = vpack.c.bf16 %v1249, %v1249
    %s1251 = scalar_lea.vmem [#allocation3], 20
    %1252 = vst [vmem:[%s1251] sm:$0xf] %v1250
    %1253 = vmatprep.subr.bf16.mxu0 %v530
    %1254 = vmatpush1.bf16.msra.mxu0 %v529
    %1255 = vmatprep.subr.bf16.mxu0 %v533
    %1256 = vmatpush1.bf16.msra.mxu0 %v532
    %1257 = vmatprep.subr.bf16.mxu0 %v536
    %1258 = vmatpush1.bf16.msra.mxu0 %v535
    %1259 = vmatprep.subr.bf16.mxu0 %v539
    %1260 = vmatpush1.bf16.msra.mxu0 %v538
    %1261 = vmatprep.subr.bf16.mxu0 %v542
    %1262 = vmatpush1.bf16.msra.mxu0 %v541
    %1263 = vmatprep.subr.bf16.mxu0 %v545
    %1264 = vmatpush1.bf16.msra.mxu0 %v544
    %1265 = vmatprep.subr.bf16.mxu0 %v548
    %1266 = vmatpush1.bf16.msra.mxu0 %v547
    %1267 = vmatprep.subr.bf16.mxu0 %v551
    %1268 = vmatpush1.bf16.msra.mxu0 %v550
    %1269 = vmatprep.subr.bf16.mxu0 0
    %1270 = vmatpush1.bf16.msra.mxu0 0
    %1271 = vmatprep.subr.bf16.mxu0 0
    %1272 = vmatpush1.bf16.msra.mxu0 0
    %1273 = vmatprep.subr.bf16.mxu0 0
    %1274 = vmatpush1.bf16.msra.mxu0 0
    %1275 = vmatprep.subr.bf16.mxu0 0
    %1276 = vmatpush1.bf16.msra.mxu0 0
    %1277 = vmatprep.subr.bf16.mxu0 0
    %1278 = vmatpush1.bf16.msra.mxu0 0
    %1279 = vmatprep.subr.bf16.mxu0 0
    %1280 = vmatpush1.bf16.msra.mxu0 0
    %1281 = vmatprep.subr.bf16.mxu0 0
    %1282 = vmatpush1.bf16.msra.mxu0 0
    %1283 = vmatprep.subr.bf16.mxu0 0
    %1284 = vmatpush1.bf16.msra.mxu0 0
    %1285 = vmatprep.mubr.bf16.mxu0 0
    %1286 = vmatmul.mubr.bf16.gmra.mrb[0].mxu0 %v1250
    %v1287 = vpop.f32.mrb[0].mxu0
    %v1288 = vadd.f32 0.0, %v1287
    %v1289 = vpop.f32.mrb[0].mxu0
    %v1290 = vadd.f32 0.0, %v1289
    %v1291 = vpop.f32.mrb[0].mxu0
    %v1292 = vpop.f32.mrb[0].mxu0
    %1293 = vdwg.mxu0
    %1294 = vmatprep.subr.bf16.mxu0 0
    %1295 = vmatpush1.bf16.msra.mxu0 %v531
    %1296 = vmatprep.subr.bf16.mxu0 0
    %1297 = vmatpush1.bf16.msra.mxu0 %v534
    %1298 = vmatprep.subr.bf16.mxu0 0
    %1299 = vmatpush1.bf16.msra.mxu0 %v537
    %1300 = vmatprep.subr.bf16.mxu0 0
    %1301 = vmatpush1.bf16.msra.mxu0 %v540
    %1302 = vmatprep.subr.bf16.mxu0 0
    %1303 = vmatpush1.bf16.msra.mxu0 %v543
    %1304 = vmatprep.subr.bf16.mxu0 0
    %1305 = vmatpush1.bf16.msra.mxu0 %v546
    %1306 = vmatprep.subr.bf16.mxu0 0
    %1307 = vmatpush1.bf16.msra.mxu0 %v549
    %1308 = vmatprep.subr.bf16.mxu0 0
    %1309 = vmatpush1.bf16.msra.mxu0 %v552
    %1310 = vmatprep.subr.bf16.mxu0 0
    %1311 = vmatpush1.bf16.msra.mxu0 0
    %1312 = vmatprep.subr.bf16.mxu0 0
    %1313 = vmatpush1.bf16.msra.mxu0 0
    %1314 = vmatprep.subr.bf16.mxu0 0
    %1315 = vmatpush1.bf16.msra.mxu0 0
    %1316 = vmatprep.subr.bf16.mxu0 0
    %1317 = vmatpush1.bf16.msra.mxu0 0
    %1318 = vmatprep.subr.bf16.mxu0 0
    %1319 = vmatpush1.bf16.msra.mxu0 0
    %1320 = vmatprep.subr.bf16.mxu0 0
    %1321 = vmatpush1.bf16.msra.mxu0 0
    %1322 = vmatprep.subr.bf16.mxu0 0
    %1323 = vmatpush1.bf16.msra.mxu0 0
    %1324 = vmatprep.subr.bf16.mxu0 0
    %1325 = vmatpush1.bf16.msra.mxu0 0
    %1326 = vmatprep.mubr.bf16.mxu0 0
    %1327 = vmatmul.mubr.bf16.gmra.mrb[0].mxu0 %v1250
    %v1328 = vpop.f32.mrb[0].mxu0
    %v1329 = vadd.f32 0.0, %v1328
    %v1330 = vpop.f32.mrb[0].mxu0
    %v1331 = vpop.f32.mrb[0].mxu0
    %v1332 = vpop.f32.mrb[0].mxu0
    %1333 = vdwg.mxu0
    %s1334 = scalar_lea.vmem [#allocation2], 72
    %v1335 = vld [vmem:[%s1334] sm:$0xff]
    %v1336 = vld [vmem:[%s1334 + $0x8] sm:$0xf]
    %v1337 = vunpack.c.l.bf16 %v1335
    %v1338 = vunpack.c.h.bf16 %v1335
    %v1339 = vunpack.c.l.bf16 %v1336
    %v1340 = vadd.f32 %v1337, %v1288
    %v1341 = vxor.u32 %v1340, 2147483648
    %v1342 = vmul.f32 %v1341, 1.442695
    %v1343 = vpow.pop %v1342
    %v1344 = vadd.f32 %v1343, 1.0
    %v1345 = vrcp.pop %v1344
    %v1346 = vmul.f32 1.0, %v1345
    %v1347 = vadd.f32 %v1338, %v1290
    %v1348 = vxor.u32 %v1347, 2147483648
    %v1349 = vmul.f32 %v1348, 1.442695
    %v1350 = vpow.pop %v1349
    %v1351 = vadd.f32 %v1350, 1.0
    %v1352 = vrcp.pop %v1351
    %v1353 = vmul.f32 1.0, %v1352
    %v1354 = vadd.f32 %v1329, %v681
    %v1355 = vmul.f32 %v1346, %v1354
    %v1356 = vadd.f32 %v1339, %v1355
    %v1357 = vtanh.pop %v1356
    %v1358 = vsub.f32 1.0, %v1353
    %v1359 = vmul.f32 %v1358, %v1357
    %v1360 = vmul.f32 %v1353, %v1249
    %v1361 = vadd.f32 %v1359, %v1360
    %v1362 = vpack.c.bf16 %v1361, %v1361
    %s1363 = scalar_lea.vmem [#allocation3], 24
    %1364 = vst [vmem:[%s1363] sm:$0xf] %v1362
    %1365 = vmatprep.subr.bf16.mxu0 %v530
    %1366 = vmatpush1.bf16.msra.mxu0 %v529
    %1367 = vmatprep.subr.bf16.mxu0 %v533
    %1368 = vmatpush1.bf16.msra.mxu0 %v532
    %1369 = vmatprep.subr.bf16.mxu0 %v536
    %1370 = vmatpush1.bf16.msra.mxu0 %v535
    %1371 = vmatprep.subr.bf16.mxu0 %v539
    %1372 = vmatpush1.bf16.msra.mxu0 %v538
    %1373 = vmatprep.subr.bf16.mxu0 %v542
    %1374 = vmatpush1.bf16.msra.mxu0 %v541
    %1375 = vmatprep.subr.bf16.mxu0 %v545
    %1376 = vmatpush1.bf16.msra.mxu0 %v544
    %1377 = vmatprep.subr.bf16.mxu0 %v548
    %1378 = vmatpush1.bf16.msra.mxu0 %v547
    %1379 = vmatprep.subr.bf16.mxu0 %v551
    %1380 = vmatpush1.bf16.msra.mxu0 %v550
    %1381 = vmatprep.subr.bf16.mxu0 0
    %1382 = vmatpush1.bf16.msra.mxu0 0
    %1383 = vmatprep.subr.bf16.mxu0 0
    %1384 = vmatpush1.bf16.msra.mxu0 0
    %1385 = vmatprep.subr.bf16.mxu0 0
    %1386 = vmatpush1.bf16.msra.mxu0 0
    %1387 = vmatprep.subr.bf16.mxu0 0
    %1388 = vmatpush1.bf16.msra.mxu0 0
    %1389 = vmatprep.subr.bf16.mxu0 0
    %1390 = vmatpush1.bf16.msra.mxu0 0
    %1391 = vmatprep.subr.bf16.mxu0 0
    %1392 = vmatpush1.bf16.msra.mxu0 0
    %1393 = vmatprep.subr.bf16.mxu0 0
    %1394 = vmatpush1.bf16.msra.mxu0 0
    %1395 = vmatprep.subr.bf16.mxu0 0
    %1396 = vmatpush1.bf16.msra.mxu0 0
    %1397 = vmatprep.mubr.bf16.mxu0 0
    %1398 = vmatmul.mubr.bf16.gmra.mrb[0].mxu0 %v1362
    %v1399 = vpop.f32.mrb[0].mxu0
    %v1400 = vadd.f32 0.0, %v1399
    %v1401 = vpop.f32.mrb[0].mxu0
    %v1402 = vadd.f32 0.0, %v1401
    %v1403 = vpop.f32.mrb[0].mxu0
    %v1404 = vpop.f32.mrb[0].mxu0
    %1405 = vdwg.mxu0
    %1406 = vmatprep.subr.bf16.mxu0 0
    %1407 = vmatpush1.bf16.msra.mxu0 %v531
    %1408 = vmatprep.subr.bf16.mxu0 0
    %1409 = vmatpush1.bf16.msra.mxu0 %v534
    %1410 = vmatprep.subr.bf16.mxu0 0
    %1411 = vmatpush1.bf16.msra.mxu0 %v537
    %1412 = vmatprep.subr.bf16.mxu0 0
    %1413 = vmatpush1.bf16.msra.mxu0 %v540
    %1414 = vmatprep.subr.bf16.mxu0 0
    %1415 = vmatpush1.bf16.msra.mxu0 %v543
    %1416 = vmatprep.subr.bf16.mxu0 0
    %1417 = vmatpush1.bf16.msra.mxu0 %v546
    %1418 = vmatprep.subr.bf16.mxu0 0
    %1419 = vmatpush1.bf16.msra.mxu0 %v549
    %1420 = vmatprep.subr.bf16.mxu0 0
    %1421 = vmatpush1.bf16.msra.mxu0 %v552
    %1422 = vmatprep.subr.bf16.mxu0 0
    %1423 = vmatpush1.bf16.msra.mxu0 0
    %1424 = vmatprep.subr.bf16.mxu0 0
    %1425 = vmatpush1.bf16.msra.mxu0 0
    %1426 = vmatprep.subr.bf16.mxu0 0
    %1427 = vmatpush1.bf16.msra.mxu0 0
    %1428 = vmatprep.subr.bf16.mxu0 0
    %1429 = vmatpush1.bf16.msra.mxu0 0
    %1430 = vmatprep.subr.bf16.mxu0 0
    %1431 = vmatpush1.bf16.msra.mxu0 0
    %1432 = vmatprep.subr.bf16.mxu0 0
    %1433 = vmatpush1.bf16.msra.mxu0 0
    %1434 = vmatprep.subr.bf16.mxu0 0
    %1435 = vmatpush1.bf16.msra.mxu0 0
    %1436 = vmatprep.subr.bf16.mxu0 0
    %1437 = vmatpush1.bf16.msra.mxu0 0
    %1438 = vmatprep.mubr.bf16.mxu0 0
    %1439 = vmatmul.mubr.bf16.gmra.mrb[0].mxu0 %v1362
    %v1440 = vpop.f32.mrb[0].mxu0
    %v1441 = vadd.f32 0.0, %v1440
    %v1442 = vpop.f32.mrb[0].mxu0
    %v1443 = vpop.f32.mrb[0].mxu0
    %v1444 = vpop.f32.mrb[0].mxu0
    %1445 = vdwg.mxu0
    %s1446 = scalar_lea.vmem [#allocation2], 84
    %v1447 = vld [vmem:[%s1446] sm:$0xff]
    %v1448 = vld [vmem:[%s1446 + $0x8] sm:$0xf]
    %v1449 = vunpack.c.l.bf16 %v1447
    %v1450 = vunpack.c.h.bf16 %v1447
    %v1451 = vunpack.c.l.bf16 %v1448
    %v1452 = vadd.f32 %v1449, %v1400
    %v1453 = vxor.u32 %v1452, 2147483648
    %v1454 = vmul.f32 %v1453, 1.442695
    %v1455 = vpow.pop %v1454
    %v1456 = vadd.f32 %v1455, 1.0
    %v1457 = vrcp.pop %v1456
    %v1458 = vmul.f32 1.0, %v1457
    %v1459 = vadd.f32 %v1450, %v1402
    %v1460 = vxor.u32 %v1459, 2147483648
    %v1461 = vmul.f32 %v1460, 1.442695
    %v1462 = vpow.pop %v1461
    %v1463 = vadd.f32 %v1462, 1.0
    %v1464 = vrcp.pop %v1463
    %v1465 = vmul.f32 1.0, %v1464
    %v1466 = vadd.f32 %v1441, %v681
    %v1467 = vmul.f32 %v1458, %v1466
    %v1468 = vadd.f32 %v1451, %v1467
    %v1469 = vtanh.pop %v1468
    %v1470 = vsub.f32 1.0, %v1465
    %v1471 = vmul.f32 %v1470, %v1469
    %v1472 = vmul.f32 %v1465, %v1361
    %v1473 = vadd.f32 %v1471, %v1472
    %v1474 = vpack.c.bf16 %v1473, %v1473
    %s1475 = scalar_lea.vmem [#allocation3], 28
    %1476 = vst [vmem:[%s1475] sm:$0xf] %v1474
    %v1477 = vld [vmem:[#allocation3] sm:$0xf]
    %v1478 = vld [vmem:[#allocation3 + $0x4] sm:$0xf]
    %v1479 = vld [vmem:[#allocation3 + $0x8] sm:$0xf]
    %v1480 = vld [vmem:[#allocation3 + $0xc] sm:$0xf]
    %v1481 = vld [vmem:[#allocation3 + $0x10] sm:$0xf]
    %v1482 = vld [vmem:[#allocation3 + $0x14] sm:$0xf]
    %v1483 = vld [vmem:[#allocation3 + $0x18] sm:$0xf]
    %v1484 = vld [vmem:[#allocation3 + $0x1c] sm:$0xf]
    %v1485 = vld [vmem:[#allocation6] sm:$0xff]
    %v1486 = vld [vmem:[#allocation6 + $0x8] sm:$0xf]
    %v1487 = vld [vmem:[#allocation6 + $0xc] sm:$0xff]
    %v1488 = vld [vmem:[#allocation6 + $0x14] sm:$0xf]
    %v1489 = vld [vmem:[#allocation6 + $0x18] sm:$0xff]
    %v1490 = vld [vmem:[#allocation6 + $0x20] sm:$0xf]
    %v1491 = vld [vmem:[#allocation6 + $0x24] sm:$0xff]
    %v1492 = vld [vmem:[#allocation6 + $0x2c] sm:$0xf]
    %v1493 = vld [vmem:[#allocation6 + $0x30] sm:$0xff]
    %v1494 = vld [vmem:[#allocation6 + $0x38] sm:$0xf]
    %v1495 = vld [vmem:[#allocation6 + $0x3c] sm:$0xff]
    %v1496 = vld [vmem:[#allocation6 + $0x44] sm:$0xf]
    %v1497 = vld [vmem:[#allocation6 + $0x48] sm:$0xff]
    %v1498 = vld [vmem:[#allocation6 + $0x50] sm:$0xf]
    %v1499 = vld [vmem:[#allocation6 + $0x54] sm:$0xff]
    %v1500 = vld [vmem:[#allocation6 + $0x5c] sm:$0xf]
    %v1501 = vld [vmem:[#allocation6 + $0x60] sm:$0xff]
    %v1502 = vld [vmem:[#allocation6 + $0x68] sm:$0xf]
    %v1503 = vld [vmem:[#allocation6 + $0x6c] sm:$0xff]
    %v1504 = vld [vmem:[#allocation6 + $0x74] sm:$0xf]
    %v1505 = vld [vmem:[#allocation6 + $0x78] sm:$0xff]
    %v1506 = vld [vmem:[#allocation6 + $0x80] sm:$0xf]
    %v1507 = vld [vmem:[#allocation6 + $0x84] sm:$0xff]
    %v1508 = vld [vmem:[#allocation6 + $0x8c] sm:$0xf]
    %v1509 = vld [vmem:[#allocation6 + $0x90] sm:$0xff]
    %v1510 = vld [vmem:[#allocation6 + $0x98] sm:$0xf]
    %v1511 = vld [vmem:[#allocation6 + $0x9c] sm:$0xff]
    %v1512 = vld [vmem:[#allocation6 + $0xa4] sm:$0xf]
    %v1513 = vld [vmem:[#allocation6 + $0xa8] sm:$0xff]
    %v1514 = vld [vmem:[#allocation6 + $0xb0] sm:$0xf]
    %v1515 = vld [vmem:[#allocation6 + $0xb4] sm:$0xff]
    %v1516 = vld [vmem:[#allocation6 + $0xbc] sm:$0xf]
    %v1517 = vld [vmem:[%s7] sm:$0x7]
    %v1519 = vlaneseq
    %v1520 = vshrl.u32 %v1519, 7
    %v1521 = vsub.s32 0, %v1520
    %v1522 = vrot.slane %v1517, %v1521
    %v1523 = vlaneseq
    %v1524 = vshrl.u32 %v1523, 7
    %v1525 = vsub.s32 1, %v1524
    %v1526 = vrot.slane %v1517, %v1525
    %v1527 = vlaneseq
    %v1528 = vshrl.u32 %v1527, 7
    %v1529 = vsub.s32 2, %v1528
    %v1530 = vrot.slane %v1517, %v1529
    %v1542 = vunpack.c.l.b16 %v1477
    %v1543 = vunpack.c.l.b16 %v1478
    %v1544 = vunpack.c.l.b16 %v1479
    %v1545 = vunpack.c.l.b16 %v1480
    %v1546 = vunpack.c.l.b16 %v1481
    %v1547 = vunpack.c.l.b16 %v1482
    %v1548 = vunpack.c.l.b16 %v1483
    %v1549 = vunpack.c.l.b16 %v1484
    %v1550 = vpack.c.b16 %v1543, %v1542
    %v1551 = vpack.c.b16 %v1545, %v1544
    %v1552 = vpack.c.b16 %v1547, %v1546
    %v1553 = vpack.c.b16 %v1549, %v1548
    %v1590 = vunpack.c.l.b16 %v1485
    %v1591 = vunpack.c.h.b16 %v1485
    %v1592 = vunpack.c.l.b16 %v1486
    %v1593 = vunpack.c.l.b16 %v1487
    %v1594 = vunpack.c.h.b16 %v1487
    %v1595 = vunpack.c.l.b16 %v1488
    %v1596 = vunpack.c.l.b16 %v1489
    %v1597 = vunpack.c.h.b16 %v1489
    %v1598 = vunpack.c.l.b16 %v1490
    %v1599 = vunpack.c.l.b16 %v1491
    %v1600 = vunpack.c.h.b16 %v1491
    %v1601 = vunpack.c.l.b16 %v1492
    %v1602 = vunpack.c.l.b16 %v1493
    %v1603 = vunpack.c.h.b16 %v1493
    %v1604 = vunpack.c.l.b16 %v1494
    %v1605 = vunpack.c.l.b16 %v1495
    %v1606 = vunpack.c.h.b16 %v1495
    %v1607 = vunpack.c.l.b16 %v1496
    %v1608 = vunpack.c.l.b16 %v1497
    %v1609 = vunpack.c.h.b16 %v1497
    %v1610 = vunpack.c.l.b16 %v1498
    %v1611 = vunpack.c.l.b16 %v1499
    %v1612 = vunpack.c.h.b16 %v1499
    %v1613 = vunpack.c.l.b16 %v1500
    %v1614 = vunpack.c.l.b16 %v1501
    %v1615 = vunpack.c.h.b16 %v1501
    %v1616 = vunpack.c.l.b16 %v1502
    %v1617 = vunpack.c.l.b16 %v1503
    %v1618 = vunpack.c.h.b16 %v1503
    %v1619 = vunpack.c.l.b16 %v1504
    %v1620 = vunpack.c.l.b16 %v1505
    %v1621 = vunpack.c.h.b16 %v1505
    %v1622 = vunpack.c.l.b16 %v1506
    %v1623 = vunpack.c.l.b16 %v1507
    %v1624 = vunpack.c.h.b16 %v1507
    %v1625 = vunpack.c.l.b16 %v1508
    %v1626 = vunpack.c.l.b16 %v1509
    %v1627 = vunpack.c.h.b16 %v1509
    %v1628 = vunpack.c.l.b16 %v1510
    %v1629 = vunpack.c.l.b16 %v1511
    %v1630 = vunpack.c.h.b16 %v1511
    %v1631 = vunpack.c.l.b16 %v1512
    %v1632 = vunpack.c.l.b16 %v1513
    %v1633 = vunpack.c.h.b16 %v1513
    %v1634 = vunpack.c.l.b16 %v1514
    %v1635 = vunpack.c.l.b16 %v1515
    %v1636 = vunpack.c.h.b16 %v1515
    %v1637 = vunpack.c.l.b16 %v1516
    %v1638 = vpack.c.b16 %v1593, %v1590
    %v1639 = vpack.c.b16 %v1594, %v1591
    %v1640 = vpack.c.b16 %v1595, %v1592
    %v1641 = vpack.c.b16 %v1599, %v1596
    %v1642 = vpack.c.b16 %v1600, %v1597
    %v1643 = vpack.c.b16 %v1601, %v1598
    %v1644 = vpack.c.b16 %v1605, %v1602
    %v1645 = vpack.c.b16 %v1606, %v1603
    %v1646 = vpack.c.b16 %v1607, %v1604
    %v1647 = vpack.c.b16 %v1611, %v1608
    %v1648 = vpack.c.b16 %v1612, %v1609
    %v1649 = vpack.c.b16 %v1613, %v1610
    %v1650 = vpack.c.b16 %v1617, %v1614
    %v1651 = vpack.c.b16 %v1618, %v1615
    %v1652 = vpack.c.b16 %v1619, %v1616
    %v1653 = vpack.c.b16 %v1623, %v1620
    %v1654 = vpack.c.b16 %v1624, %v1621
    %v1655 = vpack.c.b16 %v1625, %v1622
    %v1656 = vpack.c.b16 %v1629, %v1626
    %v1657 = vpack.c.b16 %v1630, %v1627
    %v1658 = vpack.c.b16 %v1631, %v1628
    %v1659 = vpack.c.b16 %v1635, %v1632
    %v1660 = vpack.c.b16 %v1636, %v1633
    %v1661 = vpack.c.b16 %v1637, %v1634
    %1686 = vmatprep.subr.bf16.mxu0 %v1639
    %1687 = vmatpush1.bf16.msra.mxu0 %v1638
    %1688 = vmatprep.subr.bf16.mxu0 %v1642
    %1689 = vmatpush1.bf16.msra.mxu0 %v1641
    %1690 = vmatprep.subr.bf16.mxu0 %v1645
    %1691 = vmatpush1.bf16.msra.mxu0 %v1644
    %1692 = vmatprep.subr.bf16.mxu0 %v1648
    %1693 = vmatpush1.bf16.msra.mxu0 %v1647
    %1694 = vmatprep.subr.bf16.mxu0 %v1651
    %1695 = vmatpush1.bf16.msra.mxu0 %v1650
    %1696 = vmatprep.subr.bf16.mxu0 %v1654
    %1697 = vmatpush1.bf16.msra.mxu0 %v1653
    %1698 = vmatprep.subr.bf16.mxu0 %v1657
    %1699 = vmatpush1.bf16.msra.mxu0 %v1656
    %1700 = vmatprep.subr.bf16.mxu0 %v1660
    %1701 = vmatpush1.bf16.msra.mxu0 %v1659
    %1702 = vmatprep.subr.bf16.mxu0 0
    %1703 = vmatpush1.bf16.msra.mxu0 0
    %1704 = vmatprep.subr.bf16.mxu0 0
    %1705 = vmatpush1.bf16.msra.mxu0 0
    %1706 = vmatprep.subr.bf16.mxu0 0
    %1707 = vmatpush1.bf16.msra.mxu0 0
    %1708 = vmatprep.subr.bf16.mxu0 0
    %1709 = vmatpush1.bf16.msra.mxu0 0
    %1710 = vmatprep.subr.bf16.mxu0 0
    %1711 = vmatpush1.bf16.msra.mxu0 0
    %1712 = vmatprep.subr.bf16.mxu0 0
    %1713 = vmatpush1.bf16.msra.mxu0 0
    %1714 = vmatprep.subr.bf16.mxu0 0
    %1715 = vmatpush1.bf16.msra.mxu0 0
    %1716 = vmatprep.subr.bf16.mxu0 0
    %1717 = vmatpush1.bf16.msra.mxu0 0
    %1718 = vmatprep.mubr.bf16.mxu0 0
    %1719 = vmatmul.mubr.bf16.gmra.mrb[0].mxu0 %v1550
    %v1720 = vpop.f32.mrb[0].mxu0
    %v1721 = vadd.f32 %v1522, %v1720
    %v1722 = vpop.f32.mrb[0].mxu0
    %v1723 = vadd.f32 %v1526, %v1722
    %v1724 = vpop.f32.mrb[0].mxu0
    %v1725 = vadd.f32 %v1522, %v1724
    %v1726 = vpop.f32.mrb[0].mxu0
    %v1727 = vadd.f32 %v1526, %v1726
    %1728 = vmatprep.mubr.bf16.mxu0 0
    %1729 = vmatmul.mubr.bf16.gmra.mrb[0].mxu0 %v1551
    %v1730 = vpop.f32.mrb[0].mxu0
    %v1731 = vadd.f32 %v1522, %v1730
    %v1732 = vpop.f32.mrb[0].mxu0
    %v1733 = vadd.f32 %v1526, %v1732
    %v1734 = vpop.f32.mrb[0].mxu0
    %v1735 = vadd.f32 %v1522, %v1734
    %v1736 = vpop.f32.mrb[0].mxu0
    %v1737 = vadd.f32 %v1526, %v1736
    %1738 = vmatprep.mubr.bf16.mxu0 0
    %1739 = vmatmul.mubr.bf16.gmra.mrb[0].mxu0 %v1552
    %v1740 = vpop.f32.mrb[0].mxu0
    %v1741 = vadd.f32 %v1522, %v1740
    %v1742 = vpop.f32.mrb[0].mxu0
    %v1743 = vadd.f32 %v1526, %v1742
    %v1744 = vpop.f32.mrb[0].mxu0
    %v1745 = vadd.f32 %v1522, %v1744
    %v1746 = vpop.f32.mrb[0].mxu0
    %v1747 = vadd.f32 %v1526, %v1746
    %1748 = vmatprep.mubr.bf16.mxu0 0
    %1749 = vmatmul.mubr.bf16.gmra.mrb[0].mxu0 %v1553
    %v1750 = vpop.f32.mrb[0].mxu0
    %v1751 = vadd.f32 %v1522, %v1750
    %v1752 = vpop.f32.mrb[0].mxu0
    %v1753 = vadd.f32 %v1526, %v1752
    %v1754 = vpop.f32.mrb[0].mxu0
    %v1755 = vadd.f32 %v1522, %v1754
    %v1756 = vpop.f32.mrb[0].mxu0
    %v1757 = vadd.f32 %v1526, %v1756
    %1758 = vdwg.mxu0
    %1759 = vmatprep.subr.bf16.mxu0 0
    %1760 = vmatpush1.bf16.msra.mxu0 %v1640
    %1761 = vmatprep.subr.bf16.mxu0 0
    %1762 = vmatpush1.bf16.msra.mxu0 %v1643
    %1763 = vmatprep.subr.bf16.mxu0 0
    %1764 = vmatpush1.bf16.msra.mxu0 %v1646
    %1765 = vmatprep.subr.bf16.mxu0 0
    %1766 = vmatpush1.bf16.msra.mxu0 %v1649
    %1767 = vmatprep.subr.bf16.mxu0 0
    %1768 = vmatpush1.bf16.msra.mxu0 %v1652
    %1769 = vmatprep.subr.bf16.mxu0 0
    %1770 = vmatpush1.bf16.msra.mxu0 %v1655
    %1771 = vmatprep.subr.bf16.mxu0 0
    %1772 = vmatpush1.bf16.msra.mxu0 %v1658
    %1773 = vmatprep.subr.bf16.mxu0 0
    %1774 = vmatpush1.bf16.msra.mxu0 %v1661
    %1775 = vmatprep.subr.bf16.mxu0 0
    %1776 = vmatpush1.bf16.msra.mxu0 0
    %1777 = vmatprep.subr.bf16.mxu0 0
    %1778 = vmatpush1.bf16.msra.mxu0 0
    %1779 = vmatprep.subr.bf16.mxu0 0
    %1780 = vmatpush1.bf16.msra.mxu0 0
    %1781 = vmatprep.subr.bf16.mxu0 0
    %1782 = vmatpush1.bf16.msra.mxu0 0
    %1783 = vmatprep.subr.bf16.mxu0 0
    %1784 = vmatpush1.bf16.msra.mxu0 0
    %1785 = vmatprep.subr.bf16.mxu0 0
    %1786 = vmatpush1.bf16.msra.mxu0 0
    %1787 = vmatprep.subr.bf16.mxu0 0
    %1788 = vmatpush1.bf16.msra.mxu0 0
    %1789 = vmatprep.subr.bf16.mxu0 0
    %1790 = vmatpush1.bf16.msra.mxu0 0
    %1791 = vmatprep.mubr.bf16.mxu0 0
    %1792 = vmatmul.mubr.bf16.gmra.mrb[0].mxu0 %v1550
    %v1793 = vpop.f32.mrb[0].mxu0
    %v1794 = vadd.f32 %v1530, %v1793
    %v1795 = vpop.f32.mrb[0].mxu0
    %v1796 = vpop.f32.mrb[0].mxu0
    %v1797 = vadd.f32 %v1530, %v1796
    %v1798 = vpop.f32.mrb[0].mxu0
    %1799 = vmatprep.mubr.bf16.mxu0 0
    %1800 = vmatmul.mubr.bf16.gmra.mrb[0].mxu0 %v1551
    %v1801 = vpop.f32.mrb[0].mxu0
    %v1802 = vadd.f32 %v1530, %v1801
    %v1803 = vpop.f32.mrb[0].mxu0
    %v1804 = vpop.f32.mrb[0].mxu0
    %v1805 = vadd.f32 %v1530, %v1804
    %v1806 = vpop.f32.mrb[0].mxu0
    %1807 = vmatprep.mubr.bf16.mxu0 0
    %1808 = vmatmul.mubr.bf16.gmra.mrb[0].mxu0 %v1552
    %v1809 = vpop.f32.mrb[0].mxu0
    %v1810 = vadd.f32 %v1530, %v1809
    %v1811 = vpop.f32.mrb[0].mxu0
    %v1812 = vpop.f32.mrb[0].mxu0
    %v1813 = vadd.f32 %v1530, %v1812
    %v1814 = vpop.f32.mrb[0].mxu0
    %1815 = vmatprep.mubr.bf16.mxu0 0
    %1816 = vmatmul.mubr.bf16.gmra.mrb[0].mxu0 %v1553
    %v1817 = vpop.f32.mrb[0].mxu0
    %v1818 = vadd.f32 %v1530, %v1817
    %v1819 = vpop.f32.mrb[0].mxu0
    %v1820 = vpop.f32.mrb[0].mxu0
    %v1821 = vadd.f32 %v1530, %v1820
    %v1822 = vpop.f32.mrb[0].mxu0
    %1823 = vdwg.mxu0
    %v1824 = vpack.c.bf16 %v1721, %v1721
    %v1825 = vpack.c.bf16 %v1723, %v1723
    %v1826 = vpack.c.bf16 %v1794, %v1794
    %v1827 = vpack.c.bf16 %v1725, %v1725
    %v1828 = vpack.c.bf16 %v1727, %v1727
    %v1829 = vpack.c.bf16 %v1797, %v1797
    %v1830 = vpack.c.bf16 %v1731, %v1731
    %v1831 = vpack.c.bf16 %v1733, %v1733
    %v1832 = vpack.c.bf16 %v1802, %v1802
    %v1833 = vpack.c.bf16 %v1735, %v1735
    %v1834 = vpack.c.bf16 %v1737, %v1737
    %v1835 = vpack.c.bf16 %v1805, %v1805
    %v1836 = vpack.c.bf16 %v1741, %v1741
    %v1837 = vpack.c.bf16 %v1743, %v1743
    %v1838 = vpack.c.bf16 %v1810, %v1810
    %v1839 = vpack.c.bf16 %v1745, %v1745
    %v1840 = vpack.c.bf16 %v1747, %v1747
    %v1841 = vpack.c.bf16 %v1813, %v1813
    %v1842 = vpack.c.bf16 %v1751, %v1751
    %v1843 = vpack.c.bf16 %v1753, %v1753
    %v1844 = vpack.c.bf16 %v1818, %v1818
    %v1845 = vpack.c.bf16 %v1755, %v1755
    %v1846 = vpack.c.bf16 %v1757, %v1757
    %v1847 = vpack.c.bf16 %v1821, %v1821
    %v1872 = vunpack.c.l.b16 %v1824
    %v1873 = vunpack.c.l.b16 %v1825
    %v1874 = vunpack.c.l.b16 %v1826
    %v1875 = vunpack.c.l.b16 %v1827
    %v1876 = vunpack.c.l.b16 %v1828
    %v1877 = vunpack.c.l.b16 %v1829
    %v1878 = vunpack.c.l.b16 %v1830
    %v1879 = vunpack.c.l.b16 %v1831
    %v1880 = vunpack.c.l.b16 %v1832
    %v1881 = vunpack.c.l.b16 %v1833
    %v1882 = vunpack.c.l.b16 %v1834
    %v1883 = vunpack.c.l.b16 %v1835
    %v1884 = vunpack.c.l.b16 %v1836
    %v1885 = vunpack.c.l.b16 %v1837
    %v1886 = vunpack.c.l.b16 %v1838
    %v1887 = vunpack.c.l.b16 %v1839
    %v1888 = vunpack.c.l.b16 %v1840
    %v1889 = vunpack.c.l.b16 %v1841
    %v1890 = vunpack.c.l.b16 %v1842
    %v1891 = vunpack.c.l.b16 %v1843
    %v1892 = vunpack.c.l.b16 %v1844
    %v1893 = vunpack.c.l.b16 %v1845
    %v1894 = vunpack.c.l.b16 %v1846
    %v1895 = vunpack.c.l.b16 %v1847
    %v1896 = vpack.c.b16 %v1873, %v1872
    %v1897 = vpack.c.b16 %v1874, %v1874
    %v1898 = vpack.c.b16 %v1876, %v1875
    %v1899 = vpack.c.b16 %v1877, %v1877
    %v1900 = vpack.c.b16 %v1879, %v1878
    %v1901 = vpack.c.b16 %v1880, %v1880
    %v1902 = vpack.c.b16 %v1882, %v1881
    %v1903 = vpack.c.b16 %v1883, %v1883
    %v1904 = vpack.c.b16 %v1885, %v1884
    %v1905 = vpack.c.b16 %v1886, %v1886
    %v1906 = vpack.c.b16 %v1888, %v1887
    %v1907 = vpack.c.b16 %v1889, %v1889
    %v1908 = vpack.c.b16 %v1891, %v1890
    %v1909 = vpack.c.b16 %v1892, %v1892
    %v1910 = vpack.c.b16 %v1894, %v1893
    %v1911 = vpack.c.b16 %v1895, %v1895
    %1928 = vst [vmem:[#allocation2] sm:$0xff] %v1896
    %1929 = vst [vmem:[#allocation2 + $0x8] sm:$0xf] %v1897
    %1930 = vst [vmem:[#allocation2 + $0xc] sm:$0xff] %v1898
    %1931 = vst [vmem:[#allocation2 + $0x14] sm:$0xf] %v1899
    %1932 = vst [vmem:[#allocation2 + $0x18] sm:$0xff] %v1900
    %1933 = vst [vmem:[#allocation2 + $0x20] sm:$0xf] %v1901
    %1934 = vst [vmem:[#allocation2 + $0x24] sm:$0xff] %v1902
    %1935 = vst [vmem:[#allocation2 + $0x2c] sm:$0xf] %v1903
    %1936 = vst [vmem:[#allocation2 + $0x30] sm:$0xff] %v1904
    %1937 = vst [vmem:[#allocation2 + $0x38] sm:$0xf] %v1905
    %1938 = vst [vmem:[#allocation2 + $0x3c] sm:$0xff] %v1906
    %1939 = vst [vmem:[#allocation2 + $0x44] sm:$0xf] %v1907
    %1940 = vst [vmem:[#allocation2 + $0x48] sm:$0xff] %v1908
    %1941 = vst [vmem:[#allocation2 + $0x50] sm:$0xf] %v1909
    %1942 = vst [vmem:[#allocation2 + $0x54] sm:$0xff] %v1910
    %1943 = vst [vmem:[#allocation2 + $0x5c] sm:$0xf] %v1911
    %v1944 = vld [vmem:[#allocation8] sm:$0xff]
    %v1945 = vld [vmem:[#allocation8 + $0x8] sm:$0xf]
    %v1946 = vld [vmem:[#allocation8 + $0xc] sm:$0xff]
    %v1947 = vld [vmem:[#allocation8 + $0x14] sm:$0xf]
    %v1948 = vld [vmem:[#allocation8 + $0x18] sm:$0xff]
    %v1949 = vld [vmem:[#allocation8 + $0x20] sm:$0xf]
    %v1950 = vld [vmem:[#allocation8 + $0x24] sm:$0xff]
    %v1951 = vld [vmem:[#allocation8 + $0x2c] sm:$0xf]
    %v1952 = vld [vmem:[#allocation8 + $0x30] sm:$0xff]
    %v1953 = vld [vmem:[#allocation8 + $0x38] sm:$0xf]
    %v1954 = vld [vmem:[#allocation8 + $0x3c] sm:$0xff]
    %v1955 = vld [vmem:[#allocation8 + $0x44] sm:$0xf]
    %v1956 = vld [vmem:[#allocation8 + $0x48] sm:$0xff]
    %v1957 = vld [vmem:[#allocation8 + $0x50] sm:$0xf]
    %v1958 = vld [vmem:[#allocation8 + $0x54] sm:$0xff]
    %v1959 = vld [vmem:[#allocation8 + $0x5c] sm:$0xf]
    %v1960 = vld [vmem:[#allocation8 + $0x60] sm:$0xff]
    %v1961 = vld [vmem:[#allocation8 + $0x68] sm:$0xf]
    %v1962 = vld [vmem:[#allocation8 + $0x6c] sm:$0xff]
    %v1963 = vld [vmem:[#allocation8 + $0x74] sm:$0xf]
    %v1964 = vld [vmem:[#allocation8 + $0x78] sm:$0xff]
    %v1965 = vld [vmem:[#allocation8 + $0x80] sm:$0xf]
    %v1966 = vld [vmem:[#allocation8 + $0x84] sm:$0xff]
    %v1967 = vld [vmem:[#allocation8 + $0x8c] sm:$0xf]
    %v1968 = vld [vmem:[#allocation8 + $0x90] sm:$0xff]
    %v1969 = vld [vmem:[#allocation8 + $0x98] sm:$0xf]
    %v1970 = vld [vmem:[#allocation8 + $0x9c] sm:$0xff]
    %v1971 = vld [vmem:[#allocation8 + $0xa4] sm:$0xf]
    %v1972 = vld [vmem:[#allocation8 + $0xa8] sm:$0xff]
    %v1973 = vld [vmem:[#allocation8 + $0xb0] sm:$0xf]
    %v1974 = vld [vmem:[#allocation8 + $0xb4] sm:$0xff]
    %v1975 = vld [vmem:[#allocation8 + $0xbc] sm:$0xf]
    %v1976 = vld [vmem:[%s8] sm:$0x1]
    %v2009 = vunpack.c.l.b16 %v1944
    %v2010 = vunpack.c.h.b16 %v1944
    %v2011 = vunpack.c.l.b16 %v1945
    %v2012 = vunpack.c.l.b16 %v1946
    %v2013 = vunpack.c.h.b16 %v1946
    %v2014 = vunpack.c.l.b16 %v1947
    %v2015 = vunpack.c.l.b16 %v1948
    %v2016 = vunpack.c.h.b16 %v1948
    %v2017 = vunpack.c.l.b16 %v1949
    %v2018 = vunpack.c.l.b16 %v1950
    %v2019 = vunpack.c.h.b16 %v1950
    %v2020 = vunpack.c.l.b16 %v1951
    %v2021 = vunpack.c.l.b16 %v1952
    %v2022 = vunpack.c.h.b16 %v1952
    %v2023 = vunpack.c.l.b16 %v1953
    %v2024 = vunpack.c.l.b16 %v1954
    %v2025 = vunpack.c.h.b16 %v1954
    %v2026 = vunpack.c.l.b16 %v1955
    %v2027 = vunpack.c.l.b16 %v1956
    %v2028 = vunpack.c.h.b16 %v1956
    %v2029 = vunpack.c.l.b16 %v1957
    %v2030 = vunpack.c.l.b16 %v1958
    %v2031 = vunpack.c.h.b16 %v1958
    %v2032 = vunpack.c.l.b16 %v1959
    %v2033 = vunpack.c.l.b16 %v1960
    %v2034 = vunpack.c.h.b16 %v1960
    %v2035 = vunpack.c.l.b16 %v1961
    %v2036 = vunpack.c.l.b16 %v1962
    %v2037 = vunpack.c.h.b16 %v1962
    %v2038 = vunpack.c.l.b16 %v1963
    %v2039 = vunpack.c.l.b16 %v1964
    %v2040 = vunpack.c.h.b16 %v1964
    %v2041 = vunpack.c.l.b16 %v1965
    %v2042 = vunpack.c.l.b16 %v1966
    %v2043 = vunpack.c.h.b16 %v1966
    %v2044 = vunpack.c.l.b16 %v1967
    %v2045 = vunpack.c.l.b16 %v1968
    %v2046 = vunpack.c.h.b16 %v1968
    %v2047 = vunpack.c.l.b16 %v1969
    %v2048 = vunpack.c.l.b16 %v1970
    %v2049 = vunpack.c.h.b16 %v1970
    %v2050 = vunpack.c.l.b16 %v1971
    %v2051 = vunpack.c.l.b16 %v1972
    %v2052 = vunpack.c.h.b16 %v1972
    %v2053 = vunpack.c.l.b16 %v1973
    %v2054 = vunpack.c.l.b16 %v1974
    %v2055 = vunpack.c.h.b16 %v1974
    %v2056 = vunpack.c.l.b16 %v1975
    %v2057 = vpack.c.b16 %v2012, %v2009
    %v2058 = vpack.c.b16 %v2013, %v2010
    %v2059 = vpack.c.b16 %v2014, %v2011
    %v2060 = vpack.c.b16 %v2018, %v2015
    %v2061 = vpack.c.b16 %v2019, %v2016
    %v2062 = vpack.c.b16 %v2020, %v2017
    %v2063 = vpack.c.b16 %v2024, %v2021
    %v2064 = vpack.c.b16 %v2025, %v2022
    %v2065 = vpack.c.b16 %v2026, %v2023
    %v2066 = vpack.c.b16 %v2030, %v2027
    %v2067 = vpack.c.b16 %v2031, %v2028
    %v2068 = vpack.c.b16 %v2032, %v2029
    %v2069 = vpack.c.b16 %v2036, %v2033
    %v2070 = vpack.c.b16 %v2037, %v2034
    %v2071 = vpack.c.b16 %v2038, %v2035
    %v2072 = vpack.c.b16 %v2042, %v2039
    %v2073 = vpack.c.b16 %v2043, %v2040
    %v2074 = vpack.c.b16 %v2044, %v2041
    %v2075 = vpack.c.b16 %v2048, %v2045
    %v2076 = vpack.c.b16 %v2049, %v2046
    %v2077 = vpack.c.b16 %v2050, %v2047
    %v2078 = vpack.c.b16 %v2054, %v2051
    %v2079 = vpack.c.b16 %v2055, %v2052
    %v2080 = vpack.c.b16 %v2056, %v2053
    %2105 = vmatprep.subr.bf16.mxu0 %v2058
    %2106 = vmatpush1.bf16.msra.mxu0 %v2057
    %2107 = vmatprep.subr.bf16.mxu0 %v2061
    %2108 = vmatpush1.bf16.msra.mxu0 %v2060
    %2109 = vmatprep.subr.bf16.mxu0 %v2064
    %2110 = vmatpush1.bf16.msra.mxu0 %v2063
    %2111 = vmatprep.subr.bf16.mxu0 %v2067
    %2112 = vmatpush1.bf16.msra.mxu0 %v2066
    %2113 = vmatprep.subr.bf16.mxu0 %v2070
    %2114 = vmatpush1.bf16.msra.mxu0 %v2069
    %2115 = vmatprep.subr.bf16.mxu0 %v2073
    %2116 = vmatpush1.bf16.msra.mxu0 %v2072
    %2117 = vmatprep.subr.bf16.mxu0 %v2076
    %2118 = vmatpush1.bf16.msra.mxu0 %v2075
    %2119 = vmatprep.subr.bf16.mxu0 %v2079
    %2120 = vmatpush1.bf16.msra.mxu0 %v2078
    %2121 = vmatprep.subr.bf16.mxu0 0
    %2122 = vmatpush1.bf16.msra.mxu0 0
    %2123 = vmatprep.subr.bf16.mxu0 0
    %2124 = vmatpush1.bf16.msra.mxu0 0
    %2125 = vmatprep.subr.bf16.mxu0 0
    %2126 = vmatpush1.bf16.msra.mxu0 0
    %2127 = vmatprep.subr.bf16.mxu0 0
    %2128 = vmatpush1.bf16.msra.mxu0 0
    %2129 = vmatprep.subr.bf16.mxu0 0
    %2130 = vmatpush1.bf16.msra.mxu0 0
    %2131 = vmatprep.subr.bf16.mxu0 0
    %2132 = vmatpush1.bf16.msra.mxu0 0
    %2133 = vmatprep.subr.bf16.mxu0 0
    %2134 = vmatpush1.bf16.msra.mxu0 0
    %2135 = vmatprep.subr.bf16.mxu0 0
    %2136 = vmatpush1.bf16.msra.mxu0 0
    %2137 = vmatprep.mubr.bf16.mxu0 0
    %2138 = vmatmul.mubr.bf16.gmra.mrb[0].mxu0 0
    %v2139 = vpop.f32.mrb[0].mxu0
    %v2140 = vadd.f32 0.0, %v2139
    %v2141 = vpop.f32.mrb[0].mxu0
    %v2142 = vadd.f32 0.0, %v2141
    %v2143 = vpop.f32.mrb[0].mxu0
    %v2144 = vpop.f32.mrb[0].mxu0
    %2145 = vdwg.mxu0
    %2146 = vmatprep.subr.bf16.mxu0 0
    %2147 = vmatpush1.bf16.msra.mxu0 %v2059
    %2148 = vmatprep.subr.bf16.mxu0 0
    %2149 = vmatpush1.bf16.msra.mxu0 %v2062
    %2150 = vmatprep.subr.bf16.mxu0 0
    %2151 = vmatpush1.bf16.msra.mxu0 %v2065
    %2152 = vmatprep.subr.bf16.mxu0 0
    %2153 = vmatpush1.bf16.msra.mxu0 %v2068
    %2154 = vmatprep.subr.bf16.mxu0 0
    %2155 = vmatpush1.bf16.msra.mxu0 %v2071
    %2156 = vmatprep.subr.bf16.mxu0 0
    %2157 = vmatpush1.bf16.msra.mxu0 %v2074
    %2158 = vmatprep.subr.bf16.mxu0 0
    %2159 = vmatpush1.bf16.msra.mxu0 %v2077
    %2160 = vmatprep.subr.bf16.mxu0 0
    %2161 = vmatpush1.bf16.msra.mxu0 %v2080
    %2162 = vmatprep.subr.bf16.mxu0 0
    %2163 = vmatpush1.bf16.msra.mxu0 0
    %2164 = vmatprep.subr.bf16.mxu0 0
    %2165 = vmatpush1.bf16.msra.mxu0 0
    %2166 = vmatprep.subr.bf16.mxu0 0
    %2167 = vmatpush1.bf16.msra.mxu0 0
    %2168 = vmatprep.subr.bf16.mxu0 0
    %2169 = vmatpush1.bf16.msra.mxu0 0
    %2170 = vmatprep.subr.bf16.mxu0 0
    %2171 = vmatpush1.bf16.msra.mxu0 0
    %2172 = vmatprep.subr.bf16.mxu0 0
    %2173 = vmatpush1.bf16.msra.mxu0 0
    %2174 = vmatprep.subr.bf16.mxu0 0
    %2175 = vmatpush1.bf16.msra.mxu0 0
    %2176 = vmatprep.subr.bf16.mxu0 0
    %2177 = vmatpush1.bf16.msra.mxu0 0
    %2178 = vmatprep.mubr.bf16.mxu0 0
    %2179 = vmatmul.mubr.bf16.gmra.mrb[0].mxu0 0
    %v2180 = vpop.f32.mrb[0].mxu0
    %v2181 = vadd.f32 0.0, %v2180
    %v2182 = vpop.f32.mrb[0].mxu0
    %v2183 = vpop.f32.mrb[0].mxu0
    %v2184 = vpop.f32.mrb[0].mxu0
    %2185 = vdwg.mxu0
    %v2186 = vld [vmem:[#allocation2] sm:$0xff]
    %v2187 = vld [vmem:[#allocation2 + $0x8] sm:$0xf]
    %v2188 = vunpack.c.l.bf16 %v2186
    %v2189 = vunpack.c.h.bf16 %v2186
    %v2190 = vunpack.c.l.bf16 %v2187
    %v2191 = vadd.f32 %v2188, %v2140
    %v2192 = vxor.u32 %v2191, 2147483648
    %v2193 = vmul.f32 %v2192, 1.442695
    %v2194 = vpow.pop %v2193
    %v2195 = vadd.f32 %v2194, 1.0
    %v2196 = vrcp.pop %v2195
    %v2197 = vmul.f32 1.0, %v2196
    %v2198 = vadd.f32 %v2189, %v2142
    %v2199 = vxor.u32 %v2198, 2147483648
    %v2200 = vmul.f32 %v2199, 1.442695
    %v2201 = vpow.pop %v2200
    %v2202 = vadd.f32 %v2201, 1.0
    %v2203 = vrcp.pop %v2202
    %v2204 = vmul.f32 1.0, %v2203
    %v2206 = vlaneseq
    %v2207 = vshrl.u32 %v2206, 7
    %v2208 = vsub.s32 0, %v2207
    %v2209 = vrot.slane %v1976, %v2208
    %v2211 = vadd.f32 %v2181, %v2209
    %v2212 = vmul.f32 %v2197, %v2211
    %v2213 = vadd.f32 %v2190, %v2212
    %v2214 = vtanh.pop %v2213
    %v2215 = vsub.f32 1.0, %v2204
    %v2216 = vmul.f32 %v2215, %v2214
    %v2217 = vmul.f32 %v2204, 0.0
    %v2218 = vadd.f32 %v2216, %v2217
    %v2219 = vpack.c.bf16 %v2218, %v2218
    %2220 = vmatprep.subr.bf16.mxu0 %v2058
    %2221 = vmatpush1.bf16.msra.mxu0 %v2057
    %2222 = vmatprep.subr.bf16.mxu0 %v2061
    %2223 = vmatpush1.bf16.msra.mxu0 %v2060
    %2224 = vmatprep.subr.bf16.mxu0 %v2064
    %2225 = vmatpush1.bf16.msra.mxu0 %v2063
    %2226 = vmatprep.subr.bf16.mxu0 %v2067
    %2227 = vmatpush1.bf16.msra.mxu0 %v2066
    %2228 = vmatprep.subr.bf16.mxu0 %v2070
    %2229 = vmatpush1.bf16.msra.mxu0 %v2069
    %2230 = vmatprep.subr.bf16.mxu0 %v2073
    %2231 = vmatpush1.bf16.msra.mxu0 %v2072
    %2232 = vmatprep.subr.bf16.mxu0 %v2076
    %2233 = vmatpush1.bf16.msra.mxu0 %v2075
    %2234 = vmatprep.subr.bf16.mxu0 %v2079
    %2235 = vmatpush1.bf16.msra.mxu0 %v2078
    %2236 = vmatprep.subr.bf16.mxu0 0
    %2237 = vmatpush1.bf16.msra.mxu0 0
    %2238 = vmatprep.subr.bf16.mxu0 0
    %2239 = vmatpush1.bf16.msra.mxu0 0
    %2240 = vmatprep.subr.bf16.mxu0 0
    %2241 = vmatpush1.bf16.msra.mxu0 0
    %2242 = vmatprep.subr.bf16.mxu0 0
    %2243 = vmatpush1.bf16.msra.mxu0 0
    %2244 = vmatprep.subr.bf16.mxu0 0
    %2245 = vmatpush1.bf16.msra.mxu0 0
    %2246 = vmatprep.subr.bf16.mxu0 0
    %2247 = vmatpush1.bf16.msra.mxu0 0
    %2248 = vmatprep.subr.bf16.mxu0 0
    %2249 = vmatpush1.bf16.msra.mxu0 0
    %2250 = vmatprep.subr.bf16.mxu0 0
    %2251 = vmatpush1.bf16.msra.mxu0 0
    %2252 = vmatprep.mubr.bf16.mxu0 0
    %2253 = vmatmul.mubr.bf16.gmra.mrb[0].mxu0 %v2219
    %v2254 = vpop.f32.mrb[0].mxu0
    %v2255 = vadd.f32 0.0, %v2254
    %v2256 = vpop.f32.mrb[0].mxu0
    %v2257 = vadd.f32 0.0, %v2256
    %v2258 = vpop.f32.mrb[0].mxu0
    %v2259 = vpop.f32.mrb[0].mxu0
    %2260 = vdwg.mxu0
    %2261 = vmatprep.subr.bf16.mxu0 0
    %2262 = vmatpush1.bf16.msra.mxu0 %v2059
    %2263 = vmatprep.subr.bf16.mxu0 0
    %2264 = vmatpush1.bf16.msra.mxu0 %v2062
    %2265 = vmatprep.subr.bf16.mxu0 0
    %2266 = vmatpush1.bf16.msra.mxu0 %v2065
    %2267 = vmatprep.subr.bf16.mxu0 0
    %2268 = vmatpush1.bf16.msra.mxu0 %v2068
    %2269 = vmatprep.subr.bf16.mxu0 0
    %2270 = vmatpush1.bf16.msra.mxu0 %v2071
    %2271 = vmatprep.subr.bf16.mxu0 0
    %2272 = vmatpush1.bf16.msra.mxu0 %v2074
    %2273 = vmatprep.subr.bf16.mxu0 0
    %2274 = vmatpush1.bf16.msra.mxu0 %v2077
    %2275 = vmatprep.subr.bf16.mxu0 0
    %2276 = vmatpush1.bf16.msra.mxu0 %v2080
    %2277 = vmatprep.subr.bf16.mxu0 0
    %2278 = vmatpush1.bf16.msra.mxu0 0
    %2279 = vmatprep.subr.bf16.mxu0 0
    %2280 = vmatpush1.bf16.msra.mxu0 0
    %2281 = vmatprep.subr.bf16.mxu0 0
    %2282 = vmatpush1.bf16.msra.mxu0 0
    %2283 = vmatprep.subr.bf16.mxu0 0
    %2284 = vmatpush1.bf16.msra.mxu0 0
    %2285 = vmatprep.subr.bf16.mxu0 0
    %2286 = vmatpush1.bf16.msra.mxu0 0
    %2287 = vmatprep.subr.bf16.mxu0 0
    %2288 = vmatpush1.bf16.msra.mxu0 0
    %2289 = vmatprep.subr.bf16.mxu0 0
    %2290 = vmatpush1.bf16.msra.mxu0 0
    %2291 = vmatprep.subr.bf16.mxu0 0
    %2292 = vmatpush1.bf16.msra.mxu0 0
    %2293 = vmatprep.mubr.bf16.mxu0 0
    %2294 = vmatmul.mubr.bf16.gmra.mrb[0].mxu0 %v2219
    %v2295 = vpop.f32.mrb[0].mxu0
    %v2296 = vadd.f32 0.0, %v2295
    %v2297 = vpop.f32.mrb[0].mxu0
    %v2298 = vpop.f32.mrb[0].mxu0
    %v2299 = vpop.f32.mrb[0].mxu0
    %2300 = vdwg.mxu0
    %v2301 = vld [vmem:[%s774] sm:$0xff]
    %v2302 = vld [vmem:[%s774 + $0x8] sm:$0xf]
    %v2303 = vunpack.c.l.bf16 %v2301
    %v2304 = vunpack.c.h.bf16 %v2301
    %v2305 = vunpack.c.l.bf16 %v2302
    %v2306 = vadd.f32 %v2303, %v2255
    %v2307 = vxor.u32 %v2306, 2147483648
    %v2308 = vmul.f32 %v2307, 1.442695
    %v2309 = vpow.pop %v2308
    %v2310 = vadd.f32 %v2309, 1.0
    %v2311 = vrcp.pop %v2310
    %v2312 = vmul.f32 1.0, %v2311
    %v2313 = vadd.f32 %v2304, %v2257
    %v2314 = vxor.u32 %v2313, 2147483648
    %v2315 = vmul.f32 %v2314, 1.442695
    %v2316 = vpow.pop %v2315
    %v2317 = vadd.f32 %v2316, 1.0
    %v2318 = vrcp.pop %v2317
    %v2319 = vmul.f32 1.0, %v2318
    %v2320 = vadd.f32 %v2296, %v2209
    %v2321 = vmul.f32 %v2312, %v2320
    %v2322 = vadd.f32 %v2305, %v2321
    %v2323 = vtanh.pop %v2322
    %v2324 = vsub.f32 1.0, %v2319
    %v2325 = vmul.f32 %v2324, %v2323
    %v2326 = vmul.f32 %v2319, %v2218
    %v2327 = vadd.f32 %v2325, %v2326
    %v2328 = vpack.c.bf16 %v2327, %v2327
    %2329 = vmatprep.subr.bf16.mxu0 %v2058
    %2330 = vmatpush1.bf16.msra.mxu0 %v2057
    %2331 = vmatprep.subr.bf16.mxu0 %v2061
    %2332 = vmatpush1.bf16.msra.mxu0 %v2060
    %2333 = vmatprep.subr.bf16.mxu0 %v2064
    %2334 = vmatpush1.bf16.msra.mxu0 %v2063
    %2335 = vmatprep.subr.bf16.mxu0 %v2067
    %2336 = vmatpush1.bf16.msra.mxu0 %v2066
    %2337 = vmatprep.subr.bf16.mxu0 %v2070
    %2338 = vmatpush1.bf16.msra.mxu0 %v2069
    %2339 = vmatprep.subr.bf16.mxu0 %v2073
    %2340 = vmatpush1.bf16.msra.mxu0 %v2072
    %2341 = vmatprep.subr.bf16.mxu0 %v2076
    %2342 = vmatpush1.bf16.msra.mxu0 %v2075
    %2343 = vmatprep.subr.bf16.mxu0 %v2079
    %2344 = vmatpush1.bf16.msra.mxu0 %v2078
    %2345 = vmatprep.subr.bf16.mxu0 0
    %2346 = vmatpush1.bf16.msra.mxu0 0
    %2347 = vmatprep.subr.bf16.mxu0 0
    %2348 = vmatpush1.bf16.msra.mxu0 0
    %2349 = vmatprep.subr.bf16.mxu0 0
    %2350 = vmatpush1.bf16.msra.mxu0 0
    %2351 = vmatprep.subr.bf16.mxu0 0
    %2352 = vmatpush1.bf16.msra.mxu0 0
    %2353 = vmatprep.subr.bf16.mxu0 0
    %2354 = vmatpush1.bf16.msra.mxu0 0
    %2355 = vmatprep.subr.bf16.mxu0 0
    %2356 = vmatpush1.bf16.msra.mxu0 0
    %2357 = vmatprep.subr.bf16.mxu0 0
    %2358 = vmatpush1.bf16.msra.mxu0 0
    %2359 = vmatprep.subr.bf16.mxu0 0
    %2360 = vmatpush1.bf16.msra.mxu0 0
    %2361 = vmatprep.mubr.bf16.mxu0 0
    %2362 = vmatmul.mubr.bf16.gmra.mrb[0].mxu0 %v2328
    %v2363 = vpop.f32.mrb[0].mxu0
    %v2364 = vadd.f32 0.0, %v2363
    %v2365 = vpop.f32.mrb[0].mxu0
    %v2366 = vadd.f32 0.0, %v2365
    %v2367 = vpop.f32.mrb[0].mxu0
    %v2368 = vpop.f32.mrb[0].mxu0
    %2369 = vdwg.mxu0
    %2370 = vmatprep.subr.bf16.mxu0 0
    %2371 = vmatpush1.bf16.msra.mxu0 %v2059
    %2372 = vmatprep.subr.bf16.mxu0 0
    %2373 = vmatpush1.bf16.msra.mxu0 %v2062
    %2374 = vmatprep.subr.bf16.mxu0 0
    %2375 = vmatpush1.bf16.msra.mxu0 %v2065
    %2376 = vmatprep.subr.bf16.mxu0 0
    %2377 = vmatpush1.bf16.msra.mxu0 %v2068
    %2378 = vmatprep.subr.bf16.mxu0 0
    %2379 = vmatpush1.bf16.msra.mxu0 %v2071
    %2380 = vmatprep.subr.bf16.mxu0 0
    %2381 = vmatpush1.bf16.msra.mxu0 %v2074
    %2382 = vmatprep.subr.bf16.mxu0 0
    %2383 = vmatpush1.bf16.msra.mxu0 %v2077
    %2384 = vmatprep.subr.bf16.mxu0 0
    %2385 = vmatpush1.bf16.msra.mxu0 %v2080
    %2386 = vmatprep.subr.bf16.mxu0 0
    %2387 = vmatpush1.bf16.msra.mxu0 0
    %2388 = vmatprep.subr.bf16.mxu0 0
    %2389 = vmatpush1.bf16.msra.mxu0 0
    %2390 = vmatprep.subr.bf16.mxu0 0
    %2391 = vmatpush1.bf16.msra.mxu0 0
    %2392 = vmatprep.subr.bf16.mxu0 0
    %2393 = vmatpush1.bf16.msra.mxu0 0
    %2394 = vmatprep.subr.bf16.mxu0 0
    %2395 = vmatpush1.bf16.msra.mxu0 0
    %2396 = vmatprep.subr.bf16.mxu0 0
    %2397 = vmatpush1.bf16.msra.mxu0 0
    %2398 = vmatprep.subr.bf16.mxu0 0
    %2399 = vmatpush1.bf16.msra.mxu0 0
    %2400 = vmatprep.subr.bf16.mxu0 0
    %2401 = vmatpush1.bf16.msra.mxu0 0
    %2402 = vmatprep.mubr.bf16.mxu0 0
    %2403 = vmatmul.mubr.bf16.gmra.mrb[0].mxu0 %v2328
    %v2404 = vpop.f32.mrb[0].mxu0
    %v2405 = vadd.f32 0.0, %v2404
    %v2406 = vpop.f32.mrb[0].mxu0
    %v2407 = vpop.f32.mrb[0].mxu0
    %v2408 = vpop.f32.mrb[0].mxu0
    %2409 = vdwg.mxu0
    %v2410 = vld [vmem:[%s886] sm:$0xff]
    %v2411 = vld [vmem:[%s886 + $0x8] sm:$0xf]
    %v2412 = vunpack.c.l.bf16 %v2410
    %v2413 = vunpack.c.h.bf16 %v2410
    %v2414 = vunpack.c.l.bf16 %v2411
    %v2415 = vadd.f32 %v2412, %v2364
    %v2416 = vxor.u32 %v2415, 2147483648
    %v2417 = vmul.f32 %v2416, 1.442695
    %v2418 = vpow.pop %v2417
    %v2419 = vadd.f32 %v2418, 1.0
    %v2420 = vrcp.pop %v2419
    %v2421 = vmul.f32 1.0, %v2420
    %v2422 = vadd.f32 %v2413, %v2366
    %v2423 = vxor.u32 %v2422, 2147483648
    %v2424 = vmul.f32 %v2423, 1.442695
    %v2425 = vpow.pop %v2424
    %v2426 = vadd.f32 %v2425, 1.0
    %v2427 = vrcp.pop %v2426
    %v2428 = vmul.f32 1.0, %v2427
    %v2429 = vadd.f32 %v2405, %v2209
    %v2430 = vmul.f32 %v2421, %v2429
    %v2431 = vadd.f32 %v2414, %v2430
    %v2432 = vtanh.pop %v2431
    %v2433 = vsub.f32 1.0, %v2428
    %v2434 = vmul.f32 %v2433, %v2432
    %v2435 = vmul.f32 %v2428, %v2327
    %v2436 = vadd.f32 %v2434, %v2435
    %v2437 = vpack.c.bf16 %v2436, %v2436
    %2438 = vmatprep.subr.bf16.mxu0 %v2058
    %2439 = vmatpush1.bf16.msra.mxu0 %v2057
    %2440 = vmatprep.subr.bf16.mxu0 %v2061
    %2441 = vmatpush1.bf16.msra.mxu0 %v2060
    %2442 = vmatprep.subr.bf16.mxu0 %v2064
    %2443 = vmatpush1.bf16.msra.mxu0 %v2063
    %2444 = vmatprep.subr.bf16.mxu0 %v2067
    %2445 = vmatpush1.bf16.msra.mxu0 %v2066
    %2446 = vmatprep.subr.bf16.mxu0 %v2070
    %2447 = vmatpush1.bf16.msra.mxu0 %v2069
    %2448 = vmatprep.subr.bf16.mxu0 %v2073
    %2449 = vmatpush1.bf16.msra.mxu0 %v2072
    %2450 = vmatprep.subr.bf16.mxu0 %v2076
    %2451 = vmatpush1.bf16.msra.mxu0 %v2075
    %2452 = vmatprep.subr.bf16.mxu0 %v2079
    %2453 = vmatpush1.bf16.msra.mxu0 %v2078
    %2454 = vmatprep.subr.bf16.mxu0 0
    %2455 = vmatpush1.bf16.msra.mxu0 0
    %2456 = vmatprep.subr.bf16.mxu0 0
    %2457 = vmatpush1.bf16.msra.mxu0 0
    %2458 = vmatprep.subr.bf16.mxu0 0
    %2459 = vmatpush1.bf16.msra.mxu0 0
    %2460 = vmatprep.subr.bf16.mxu0 0
    %2461 = vmatpush1.bf16.msra.mxu0 0
    %2462 = vmatprep.subr.bf16.mxu0 0
    %2463 = vmatpush1.bf16.msra.mxu0 0
    %2464 = vmatprep.subr.bf16.mxu0 0
    %2465 = vmatpush1.bf16.msra.mxu0 0
    %2466 = vmatprep.subr.bf16.mxu0 0
    %2467 = vmatpush1.bf16.msra.mxu0 0
    %2468 = vmatprep.subr.bf16.mxu0 0
    %2469 = vmatpush1.bf16.msra.mxu0 0
    %2470 = vmatprep.mubr.bf16.mxu0 0
    %2471 = vmatmul.mubr.bf16.gmra.mrb[0].mxu0 %v2437
    %v2472 = vpop.f32.mrb[0].mxu0
    %v2473 = vadd.f32 0.0, %v2472
    %v2474 = vpop.f32.mrb[0].mxu0
    %v2475 = vadd.f32 0.0, %v2474
    %v2476 = vpop.f32.mrb[0].mxu0
    %v2477 = vpop.f32.mrb[0].mxu0
    %2478 = vdwg.mxu0
    %2479 = vmatprep.subr.bf16.mxu0 0
    %2480 = vmatpush1.bf16.msra.mxu0 %v2059
    %2481 = vmatprep.subr.bf16.mxu0 0
    %2482 = vmatpush1.bf16.msra.mxu0 %v2062
    %2483 = vmatprep.subr.bf16.mxu0 0
    %2484 = vmatpush1.bf16.msra.mxu0 %v2065
    %2485 = vmatprep.subr.bf16.mxu0 0
    %2486 = vmatpush1.bf16.msra.mxu0 %v2068
    %2487 = vmatprep.subr.bf16.mxu0 0
    %2488 = vmatpush1.bf16.msra.mxu0 %v2071
    %2489 = vmatprep.subr.bf16.mxu0 0
    %2490 = vmatpush1.bf16.msra.mxu0 %v2074
    %2491 = vmatprep.subr.bf16.mxu0 0
    %2492 = vmatpush1.bf16.msra.mxu0 %v2077
    %2493 = vmatprep.subr.bf16.mxu0 0
    %2494 = vmatpush1.bf16.msra.mxu0 %v2080
    %2495 = vmatprep.subr.bf16.mxu0 0
    %2496 = vmatpush1.bf16.msra.mxu0 0
    %2497 = vmatprep.subr.bf16.mxu0 0
    %2498 = vmatpush1.bf16.msra.mxu0 0
    %2499 = vmatprep.subr.bf16.mxu0 0
    %2500 = vmatpush1.bf16.msra.mxu0 0
    %2501 = vmatprep.subr.bf16.mxu0 0
    %2502 = vmatpush1.bf16.msra.mxu0 0
    %2503 = vmatprep.subr.bf16.mxu0 0
    %2504 = vmatpush1.bf16.msra.mxu0 0
    %2505 = vmatprep.subr.bf16.mxu0 0
    %2506 = vmatpush1.bf16.msra.mxu0 0
    %2507 = vmatprep.subr.bf16.mxu0 0
    %2508 = vmatpush1.bf16.msra.mxu0 0
    %2509 = vmatprep.subr.bf16.mxu0 0
    %2510 = vmatpush1.bf16.msra.mxu0 0
    %2511 = vmatprep.mubr.bf16.mxu0 0
    %2512 = vmatmul.mubr.bf16.gmra.mrb[0].mxu0 %v2437
    %v2513 = vpop.f32.mrb[0].mxu0
    %v2514 = vadd.f32 0.0, %v2513
    %v2515 = vpop.f32.mrb[0].mxu0
    %v2516 = vpop.f32.mrb[0].mxu0
    %v2517 = vpop.f32.mrb[0].mxu0
    %2518 = vdwg.mxu0
    %v2519 = vld [vmem:[%s998] sm:$0xff]
    %v2520 = vld [vmem:[%s998 + $0x8] sm:$0xf]
    %v2521 = vunpack.c.l.bf16 %v2519
    %v2522 = vunpack.c.h.bf16 %v2519
    %v2523 = vunpack.c.l.bf16 %v2520
    %v2524 = vadd.f32 %v2521, %v2473
    %v2525 = vxor.u32 %v2524, 2147483648
    %v2526 = vmul.f32 %v2525, 1.442695
    %v2527 = vpow.pop %v2526
    %v2528 = vadd.f32 %v2527, 1.0
    %v2529 = vrcp.pop %v2528
    %v2530 = vmul.f32 1.0, %v2529
    %v2531 = vadd.f32 %v2522, %v2475
    %v2532 = vxor.u32 %v2531, 2147483648
    %v2533 = vmul.f32 %v2532, 1.442695
    %v2534 = vpow.pop %v2533
    %v2535 = vadd.f32 %v2534, 1.0
    %v2536 = vrcp.pop %v2535
    %v2537 = vmul.f32 1.0, %v2536
    %v2538 = vadd.f32 %v2514, %v2209
    %v2539 = vmul.f32 %v2530, %v2538
    %v2540 = vadd.f32 %v2523, %v2539
    %v2541 = vtanh.pop %v2540
    %v2542 = vsub.f32 1.0, %v2537
    %v2543 = vmul.f32 %v2542, %v2541
    %v2544 = vmul.f32 %v2537, %v2436
    %v2545 = vadd.f32 %v2543, %v2544
    %v2546 = vpack.c.bf16 %v2545, %v2545
    %2547 = vmatprep.subr.bf16.mxu0 %v2058
    %2548 = vmatpush1.bf16.msra.mxu0 %v2057
    %2549 = vmatprep.subr.bf16.mxu0 %v2061
    %2550 = vmatpush1.bf16.msra.mxu0 %v2060
    %2551 = vmatprep.subr.bf16.mxu0 %v2064
    %2552 = vmatpush1.bf16.msra.mxu0 %v2063
    %2553 = vmatprep.subr.bf16.mxu0 %v2067
    %2554 = vmatpush1.bf16.msra.mxu0 %v2066
    %2555 = vmatprep.subr.bf16.mxu0 %v2070
    %2556 = vmatpush1.bf16.msra.mxu0 %v2069
    %2557 = vmatprep.subr.bf16.mxu0 %v2073
    %2558 = vmatpush1.bf16.msra.mxu0 %v2072
    %2559 = vmatprep.subr.bf16.mxu0 %v2076
    %2560 = vmatpush1.bf16.msra.mxu0 %v2075
    %2561 = vmatprep.subr.bf16.mxu0 %v2079
    %2562 = vmatpush1.bf16.msra.mxu0 %v2078
    %2563 = vmatprep.subr.bf16.mxu0 0
    %2564 = vmatpush1.bf16.msra.mxu0 0
    %2565 = vmatprep.subr.bf16.mxu0 0
    %2566 = vmatpush1.bf16.msra.mxu0 0
    %2567 = vmatprep.subr.bf16.mxu0 0
    %2568 = vmatpush1.bf16.msra.mxu0 0
    %2569 = vmatprep.subr.bf16.mxu0 0
    %2570 = vmatpush1.bf16.msra.mxu0 0
    %2571 = vmatprep.subr.bf16.mxu0 0
    %2572 = vmatpush1.bf16.msra.mxu0 0
    %2573 = vmatprep.subr.bf16.mxu0 0
    %2574 = vmatpush1.bf16.msra.mxu0 0
    %2575 = vmatprep.subr.bf16.mxu0 0
    %2576 = vmatpush1.bf16.msra.mxu0 0
    %2577 = vmatprep.subr.bf16.mxu0 0
    %2578 = vmatpush1.bf16.msra.mxu0 0
    %2579 = vmatprep.mubr.bf16.mxu0 0
    %2580 = vmatmul.mubr.bf16.gmra.mrb[0].mxu0 %v2546
    %v2581 = vpop.f32.mrb[0].mxu0
    %v2582 = vadd.f32 0.0, %v2581
    %v2583 = vpop.f32.mrb[0].mxu0
    %v2584 = vadd.f32 0.0, %v2583
    %v2585 = vpop.f32.mrb[0].mxu0
    %v2586 = vpop.f32.mrb[0].mxu0
    %2587 = vdwg.mxu0
    %2588 = vmatprep.subr.bf16.mxu0 0
    %2589 = vmatpush1.bf16.msra.mxu0 %v2059
    %2590 = vmatprep.subr.bf16.mxu0 0
    %2591 = vmatpush1.bf16.msra.mxu0 %v2062
    %2592 = vmatprep.subr.bf16.mxu0 0
    %2593 = vmatpush1.bf16.msra.mxu0 %v2065
    %2594 = vmatprep.subr.bf16.mxu0 0
    %2595 = vmatpush1.bf16.msra.mxu0 %v2068
    %2596 = vmatprep.subr.bf16.mxu0 0
    %2597 = vmatpush1.bf16.msra.mxu0 %v2071
    %2598 = vmatprep.subr.bf16.mxu0 0
    %2599 = vmatpush1.bf16.msra.mxu0 %v2074
    %2600 = vmatprep.subr.bf16.mxu0 0
    %2601 = vmatpush1.bf16.msra.mxu0 %v2077
    %2602 = vmatprep.subr.bf16.mxu0 0
    %2603 = vmatpush1.bf16.msra.mxu0 %v2080
    %2604 = vmatprep.subr.bf16.mxu0 0
    %2605 = vmatpush1.bf16.msra.mxu0 0
    %2606 = vmatprep.subr.bf16.mxu0 0
    %2607 = vmatpush1.bf16.msra.mxu0 0
    %2608 = vmatprep.subr.bf16.mxu0 0
    %2609 = vmatpush1.bf16.msra.mxu0 0
    %2610 = vmatprep.subr.bf16.mxu0 0
    %2611 = vmatpush1.bf16.msra.mxu0 0
    %2612 = vmatprep.subr.bf16.mxu0 0
    %2613 = vmatpush1.bf16.msra.mxu0 0
    %2614 = vmatprep.subr.bf16.mxu0 0
    %2615 = vmatpush1.bf16.msra.mxu0 0
    %2616 = vmatprep.subr.bf16.mxu0 0
    %2617 = vmatpush1.bf16.msra.mxu0 0
    %2618 = vmatprep.subr.bf16.mxu0 0
    %2619 = vmatpush1.bf16.msra.mxu0 0
    %2620 = vmatprep.mubr.bf16.mxu0 0
    %2621 = vmatmul.mubr.bf16.gmra.mrb[0].mxu0 %v2546
    %v2622 = vpop.f32.mrb[0].mxu0
    %v2623 = vadd.f32 0.0, %v2622
    %v2624 = vpop.f32.mrb[0].mxu0
    %v2625 = vpop.f32.mrb[0].mxu0
    %v2626 = vpop.f32.mrb[0].mxu0
    %2627 = vdwg.mxu0
    %v2628 = vld [vmem:[%s1110] sm:$0xff]
    %v2629 = vld [vmem:[%s1110 + $0x8] sm:$0xf]
    %v2630 = vunpack.c.l.bf16 %v2628
    %v2631 = vunpack.c.h.bf16 %v2628
    %v2632 = vunpack.c.l.bf16 %v2629
    %v2633 = vadd.f32 %v2630, %v2582
    %v2634 = vxor.u32 %v2633, 2147483648
    %v2635 = vmul.f32 %v2634, 1.442695
    %v2636 = vpow.pop %v2635
    %v2637 = vadd.f32 %v2636, 1.0
    %v2638 = vrcp.pop %v2637
    %v2639 = vmul.f32 1.0, %v2638
    %v2640 = vadd.f32 %v2631, %v2584
    %v2641 = vxor.u32 %v2640, 2147483648
    %v2642 = vmul.f32 %v2641, 1.442695
    %v2643 = vpow.pop %v2642
    %v2644 = vadd.f32 %v2643, 1.0
    %v2645 = vrcp.pop %v2644
    %v2646 = vmul.f32 1.0, %v2645
    %v2647 = vadd.f32 %v2623, %v2209
    %v2648 = vmul.f32 %v2639, %v2647
    %v2649 = vadd.f32 %v2632, %v2648
    %v2650 = vtanh.pop %v2649
    %v2651 = vsub.f32 1.0, %v2646
    %v2652 = vmul.f32 %v2651, %v2650
    %v2653 = vmul.f32 %v2646, %v2545
    %v2654 = vadd.f32 %v2652, %v2653
    %v2655 = vpack.c.bf16 %v2654, %v2654
    %2656 = vmatprep.subr.bf16.mxu0 %v2058
    %2657 = vmatpush1.bf16.msra.mxu0 %v2057
    %2658 = vmatprep.subr.bf16.mxu0 %v2061
    %2659 = vmatpush1.bf16.msra.mxu0 %v2060
    %2660 = vmatprep.subr.bf16.mxu0 %v2064
    %2661 = vmatpush1.bf16.msra.mxu0 %v2063
    %2662 = vmatprep.subr.bf16.mxu0 %v2067
    %2663 = vmatpush1.bf16.msra.mxu0 %v2066
    %2664 = vmatprep.subr.bf16.mxu0 %v2070
    %2665 = vmatpush1.bf16.msra.mxu0 %v2069
    %2666 = vmatprep.subr.bf16.mxu0 %v2073
    %2667 = vmatpush1.bf16.msra.mxu0 %v2072
    %2668 = vmatprep.subr.bf16.mxu0 %v2076
    %2669 = vmatpush1.bf16.msra.mxu0 %v2075
    %2670 = vmatprep.subr.bf16.mxu0 %v2079
    %2671 = vmatpush1.bf16.msra.mxu0 %v2078
    %2672 = vmatprep.subr.bf16.mxu0 0
    %2673 = vmatpush1.bf16.msra.mxu0 0
    %2674 = vmatprep.subr.bf16.mxu0 0
    %2675 = vmatpush1.bf16.msra.mxu0 0
    %2676 = vmatprep.subr.bf16.mxu0 0
    %2677 = vmatpush1.bf16.msra.mxu0 0
    %2678 = vmatprep.subr.bf16.mxu0 0
    %2679 = vmatpush1.bf16.msra.mxu0 0
    %2680 = vmatprep.subr.bf16.mxu0 0
    %2681 = vmatpush1.bf16.msra.mxu0 0
    %2682 = vmatprep.subr.bf16.mxu0 0
    %2683 = vmatpush1.bf16.msra.mxu0 0
    %2684 = vmatprep.subr.bf16.mxu0 0
    %2685 = vmatpush1.bf16.msra.mxu0 0
    %2686 = vmatprep.subr.bf16.mxu0 0
    %2687 = vmatpush1.bf16.msra.mxu0 0
    %2688 = vmatprep.mubr.bf16.mxu0 0
    %2689 = vmatmul.mubr.bf16.gmra.mrb[0].mxu0 %v2655
    %v2690 = vpop.f32.mrb[0].mxu0
    %v2691 = vadd.f32 0.0, %v2690
    %v2692 = vpop.f32.mrb[0].mxu0
    %v2693 = vadd.f32 0.0, %v2692
    %v2694 = vpop.f32.mrb[0].mxu0
    %v2695 = vpop.f32.mrb[0].mxu0
    %2696 = vdwg.mxu0
    %2697 = vmatprep.subr.bf16.mxu0 0
    %2698 = vmatpush1.bf16.msra.mxu0 %v2059
    %2699 = vmatprep.subr.bf16.mxu0 0
    %2700 = vmatpush1.bf16.msra.mxu0 %v2062
    %2701 = vmatprep.subr.bf16.mxu0 0
    %2702 = vmatpush1.bf16.msra.mxu0 %v2065
    %2703 = vmatprep.subr.bf16.mxu0 0
    %2704 = vmatpush1.bf16.msra.mxu0 %v2068
    %2705 = vmatprep.subr.bf16.mxu0 0
    %2706 = vmatpush1.bf16.msra.mxu0 %v2071
    %2707 = vmatprep.subr.bf16.mxu0 0
    %2708 = vmatpush1.bf16.msra.mxu0 %v2074
    %2709 = vmatprep.subr.bf16.mxu0 0
    %2710 = vmatpush1.bf16.msra.mxu0 %v2077
    %2711 = vmatprep.subr.bf16.mxu0 0
    %2712 = vmatpush1.bf16.msra.mxu0 %v2080
    %2713 = vmatprep.subr.bf16.mxu0 0
    %2714 = vmatpush1.bf16.msra.mxu0 0
    %2715 = vmatprep.subr.bf16.mxu0 0
    %2716 = vmatpush1.bf16.msra.mxu0 0
    %2717 = vmatprep.subr.bf16.mxu0 0
    %2718 = vmatpush1.bf16.msra.mxu0 0
    %2719 = vmatprep.subr.bf16.mxu0 0
    %2720 = vmatpush1.bf16.msra.mxu0 0
    %2721 = vmatprep.subr.bf16.mxu0 0
    %2722 = vmatpush1.bf16.msra.mxu0 0
    %2723 = vmatprep.subr.bf16.mxu0 0
    %2724 = vmatpush1.bf16.msra.mxu0 0
    %2725 = vmatprep.subr.bf16.mxu0 0
    %2726 = vmatpush1.bf16.msra.mxu0 0
    %2727 = vmatprep.subr.bf16.mxu0 0
    %2728 = vmatpush1.bf16.msra.mxu0 0
    %2729 = vmatprep.mubr.bf16.mxu0 0
    %2730 = vmatmul.mubr.bf16.gmra.mrb[0].mxu0 %v2655
    %v2731 = vpop.f32.mrb[0].mxu0
    %v2732 = vadd.f32 0.0, %v2731
    %v2733 = vpop.f32.mrb[0].mxu0
    %v2734 = vpop.f32.mrb[0].mxu0
    %v2735 = vpop.f32.mrb[0].mxu0
    %2736 = vdwg.mxu0
    %v2737 = vld [vmem:[%s1222] sm:$0xff]
    %v2738 = vld [vmem:[%s1222 + $0x8] sm:$0xf]
    %v2739 = vunpack.c.l.bf16 %v2737
    %v2740 = vunpack.c.h.bf16 %v2737
    %v2741 = vunpack.c.l.bf16 %v2738
    %v2742 = vadd.f32 %v2739, %v2691
    %v2743 = vxor.u32 %v2742, 2147483648
    %v2744 = vmul.f32 %v2743, 1.442695
    %v2745 = vpow.pop %v2744
    %v2746 = vadd.f32 %v2745, 1.0
    %v2747 = vrcp.pop %v2746
    %v2748 = vmul.f32 1.0, %v2747
    %v2749 = vadd.f32 %v2740, %v2693
    %v2750 = vxor.u32 %v2749, 2147483648
    %v2751 = vmul.f32 %v2750, 1.442695
    %v2752 = vpow.pop %v2751
    %v2753 = vadd.f32 %v2752, 1.0
    %v2754 = vrcp.pop %v2753
    %v2755 = vmul.f32 1.0, %v2754
    %v2756 = vadd.f32 %v2732, %v2209
    %v2757 = vmul.f32 %v2748, %v2756
    %v2758 = vadd.f32 %v2741, %v2757
    %v2759 = vtanh.pop %v2758
    %v2760 = vsub.f32 1.0, %v2755
    %v2761 = vmul.f32 %v2760, %v2759
    %v2762 = vmul.f32 %v2755, %v2654
    %v2763 = vadd.f32 %v2761, %v2762
    %v2764 = vpack.c.bf16 %v2763, %v2763
    %2765 = vmatprep.subr.bf16.mxu0 %v2058
    %2766 = vmatpush1.bf16.msra.mxu0 %v2057
    %2767 = vmatprep.subr.bf16.mxu0 %v2061
    %2768 = vmatpush1.bf16.msra.mxu0 %v2060
    %2769 = vmatprep.subr.bf16.mxu0 %v2064
    %2770 = vmatpush1.bf16.msra.mxu0 %v2063
    %2771 = vmatprep.subr.bf16.mxu0 %v2067
    %2772 = vmatpush1.bf16.msra.mxu0 %v2066
    %2773 = vmatprep.subr.bf16.mxu0 %v2070
    %2774 = vmatpush1.bf16.msra.mxu0 %v2069
    %2775 = vmatprep.subr.bf16.mxu0 %v2073
    %2776 = vmatpush1.bf16.msra.mxu0 %v2072
    %2777 = vmatprep.subr.bf16.mxu0 %v2076
    %2778 = vmatpush1.bf16.msra.mxu0 %v2075
    %2779 = vmatprep.subr.bf16.mxu0 %v2079
    %2780 = vmatpush1.bf16.msra.mxu0 %v2078
    %2781 = vmatprep.subr.bf16.mxu0 0
    %2782 = vmatpush1.bf16.msra.mxu0 0
    %2783 = vmatprep.subr.bf16.mxu0 0
    %2784 = vmatpush1.bf16.msra.mxu0 0
    %2785 = vmatprep.subr.bf16.mxu0 0
    %2786 = vmatpush1.bf16.msra.mxu0 0
    %2787 = vmatprep.subr.bf16.mxu0 0
    %2788 = vmatpush1.bf16.msra.mxu0 0
    %2789 = vmatprep.subr.bf16.mxu0 0
    %2790 = vmatpush1.bf16.msra.mxu0 0
    %2791 = vmatprep.subr.bf16.mxu0 0
    %2792 = vmatpush1.bf16.msra.mxu0 0
    %2793 = vmatprep.subr.bf16.mxu0 0
    %2794 = vmatpush1.bf16.msra.mxu0 0
    %2795 = vmatprep.subr.bf16.mxu0 0
    %2796 = vmatpush1.bf16.msra.mxu0 0
    %2797 = vmatprep.mubr.bf16.mxu0 0
    %2798 = vmatmul.mubr.bf16.gmra.mrb[0].mxu0 %v2764
    %v2799 = vpop.f32.mrb[0].mxu0
    %v2800 = vadd.f32 0.0, %v2799
    %v2801 = vpop.f32.mrb[0].mxu0
    %v2802 = vadd.f32 0.0, %v2801
    %v2803 = vpop.f32.mrb[0].mxu0
    %v2804 = vpop.f32.mrb[0].mxu0
    %2805 = vdwg.mxu0
    %2806 = vmatprep.subr.bf16.mxu0 0
    %2807 = vmatpush1.bf16.msra.mxu0 %v2059
    %2808 = vmatprep.subr.bf16.mxu0 0
    %2809 = vmatpush1.bf16.msra.mxu0 %v2062
    %2810 = vmatprep.subr.bf16.mxu0 0
    %2811 = vmatpush1.bf16.msra.mxu0 %v2065
    %2812 = vmatprep.subr.bf16.mxu0 0
    %2813 = vmatpush1.bf16.msra.mxu0 %v2068
    %2814 = vmatprep.subr.bf16.mxu0 0
    %2815 = vmatpush1.bf16.msra.mxu0 %v2071
    %2816 = vmatprep.subr.bf16.mxu0 0
    %2817 = vmatpush1.bf16.msra.mxu0 %v2074
    %2818 = vmatprep.subr.bf16.mxu0 0
    %2819 = vmatpush1.bf16.msra.mxu0 %v2077
    %2820 = vmatprep.subr.bf16.mxu0 0
    %2821 = vmatpush1.bf16.msra.mxu0 %v2080
    %2822 = vmatprep.subr.bf16.mxu0 0
    %2823 = vmatpush1.bf16.msra.mxu0 0
    %2824 = vmatprep.subr.bf16.mxu0 0
    %2825 = vmatpush1.bf16.msra.mxu0 0
    %2826 = vmatprep.subr.bf16.mxu0 0
    %2827 = vmatpush1.bf16.msra.mxu0 0
    %2828 = vmatprep.subr.bf16.mxu0 0
    %2829 = vmatpush1.bf16.msra.mxu0 0
    %2830 = vmatprep.subr.bf16.mxu0 0
    %2831 = vmatpush1.bf16.msra.mxu0 0
    %2832 = vmatprep.subr.bf16.mxu0 0
    %2833 = vmatpush1.bf16.msra.mxu0 0
    %2834 = vmatprep.subr.bf16.mxu0 0
    %2835 = vmatpush1.bf16.msra.mxu0 0
    %2836 = vmatprep.subr.bf16.mxu0 0
    %2837 = vmatpush1.bf16.msra.mxu0 0
    %2838 = vmatprep.mubr.bf16.mxu0 0
    %2839 = vmatmul.mubr.bf16.gmra.mrb[0].mxu0 %v2764
    %v2840 = vpop.f32.mrb[0].mxu0
    %v2841 = vadd.f32 0.0, %v2840
    %v2842 = vpop.f32.mrb[0].mxu0
    %v2843 = vpop.f32.mrb[0].mxu0
    %v2844 = vpop.f32.mrb[0].mxu0
    %2845 = vdwg.mxu0
    %v2846 = vld [vmem:[%s1334] sm:$0xff]
    %v2847 = vld [vmem:[%s1334 + $0x8] sm:$0xf]
    %v2848 = vunpack.c.l.bf16 %v2846
    %v2849 = vunpack.c.h.bf16 %v2846
    %v2850 = vunpack.c.l.bf16 %v2847
    %v2851 = vadd.f32 %v2848, %v2800
    %v2852 = vxor.u32 %v2851, 2147483648
    %v2853 = vmul.f32 %v2852, 1.442695
    %v2854 = vpow.pop %v2853
    %v2855 = vadd.f32 %v2854, 1.0
    %v2856 = vrcp.pop %v2855
    %v2857 = vmul.f32 1.0, %v2856
    %v2858 = vadd.f32 %v2849, %v2802
    %v2859 = vxor.u32 %v2858, 2147483648
    %v2860 = vmul.f32 %v2859, 1.442695
    %v2861 = vpow.pop %v2860
    %v2862 = vadd.f32 %v2861, 1.0
    %v2863 = vrcp.pop %v2862
    %v2864 = vmul.f32 1.0, %v2863
    %v2865 = vadd.f32 %v2841, %v2209
    %v2866 = vmul.f32 %v2857, %v2865
    %v2867 = vadd.f32 %v2850, %v2866
    %v2868 = vtanh.pop %v2867
    %v2869 = vsub.f32 1.0, %v2864
    %v2870 = vmul.f32 %v2869, %v2868
    %v2871 = vmul.f32 %v2864, %v2763
    %v2872 = vadd.f32 %v2870, %v2871
    %v2873 = vpack.c.bf16 %v2872, %v2872
    %2874 = vmatprep.subr.bf16.mxu0 %v2058
    %2875 = vmatpush1.bf16.msra.mxu0 %v2057
    %2876 = vmatprep.subr.bf16.mxu0 %v2061
    %2877 = vmatpush1.bf16.msra.mxu0 %v2060
    %2878 = vmatprep.subr.bf16.mxu0 %v2064
    %2879 = vmatpush1.bf16.msra.mxu0 %v2063
    %2880 = vmatprep.subr.bf16.mxu0 %v2067
    %2881 = vmatpush1.bf16.msra.mxu0 %v2066
    %2882 = vmatprep.subr.bf16.mxu0 %v2070
    %2883 = vmatpush1.bf16.msra.mxu0 %v2069
    %2884 = vmatprep.subr.bf16.mxu0 %v2073
    %2885 = vmatpush1.bf16.msra.mxu0 %v2072
    %2886 = vmatprep.subr.bf16.mxu0 %v2076
    %2887 = vmatpush1.bf16.msra.mxu0 %v2075
    %2888 = vmatprep.subr.bf16.mxu0 %v2079
    %2889 = vmatpush1.bf16.msra.mxu0 %v2078
    %2890 = vmatprep.subr.bf16.mxu0 0
    %2891 = vmatpush1.bf16.msra.mxu0 0
    %2892 = vmatprep.subr.bf16.mxu0 0
    %2893 = vmatpush1.bf16.msra.mxu0 0
    %2894 = vmatprep.subr.bf16.mxu0 0
    %2895 = vmatpush1.bf16.msra.mxu0 0
    %2896 = vmatprep.subr.bf16.mxu0 0
    %2897 = vmatpush1.bf16.msra.mxu0 0
    %2898 = vmatprep.subr.bf16.mxu0 0
    %2899 = vmatpush1.bf16.msra.mxu0 0
    %2900 = vmatprep.subr.bf16.mxu0 0
    %2901 = vmatpush1.bf16.msra.mxu0 0
    %2902 = vmatprep.subr.bf16.mxu0 0
    %2903 = vmatpush1.bf16.msra.mxu0 0
    %2904 = vmatprep.subr.bf16.mxu0 0
    %2905 = vmatpush1.bf16.msra.mxu0 0
    %2906 = vmatprep.mubr.bf16.mxu0 0
    %2907 = vmatmul.mubr.bf16.gmra.mrb[0].mxu0 %v2873
    %v2908 = vpop.f32.mrb[0].mxu0
    %v2909 = vadd.f32 0.0, %v2908
    %v2910 = vpop.f32.mrb[0].mxu0
    %v2911 = vadd.f32 0.0, %v2910
    %v2912 = vpop.f32.mrb[0].mxu0
    %v2913 = vpop.f32.mrb[0].mxu0
    %2914 = vdwg.mxu0
    %2915 = vmatprep.subr.bf16.mxu0 0
    %2916 = vmatpush1.bf16.msra.mxu0 %v2059
    %2917 = vmatprep.subr.bf16.mxu0 0
    %2918 = vmatpush1.bf16.msra.mxu0 %v2062
    %2919 = vmatprep.subr.bf16.mxu0 0
    %2920 = vmatpush1.bf16.msra.mxu0 %v2065
    %2921 = vmatprep.subr.bf16.mxu0 0
    %2922 = vmatpush1.bf16.msra.mxu0 %v2068
    %2923 = vmatprep.subr.bf16.mxu0 0
    %2924 = vmatpush1.bf16.msra.mxu0 %v2071
    %2925 = vmatprep.subr.bf16.mxu0 0
    %2926 = vmatpush1.bf16.msra.mxu0 %v2074
    %2927 = vmatprep.subr.bf16.mxu0 0
    %2928 = vmatpush1.bf16.msra.mxu0 %v2077
    %2929 = vmatprep.subr.bf16.mxu0 0
    %2930 = vmatpush1.bf16.msra.mxu0 %v2080
    %2931 = vmatprep.subr.bf16.mxu0 0
    %2932 = vmatpush1.bf16.msra.mxu0 0
    %2933 = vmatprep.subr.bf16.mxu0 0
    %2934 = vmatpush1.bf16.msra.mxu0 0
    %2935 = vmatprep.subr.bf16.mxu0 0
    %2936 = vmatpush1.bf16.msra.mxu0 0
    %2937 = vmatprep.subr.bf16.mxu0 0
    %2938 = vmatpush1.bf16.msra.mxu0 0
    %2939 = vmatprep.subr.bf16.mxu0 0
    %2940 = vmatpush1.bf16.msra.mxu0 0
    %2941 = vmatprep.subr.bf16.mxu0 0
    %2942 = vmatpush1.bf16.msra.mxu0 0
    %2943 = vmatprep.subr.bf16.mxu0 0
    %2944 = vmatpush1.bf16.msra.mxu0 0
    %2945 = vmatprep.subr.bf16.mxu0 0
    %2946 = vmatpush1.bf16.msra.mxu0 0
    %2947 = vmatprep.mubr.bf16.mxu0 0
    %2948 = vmatmul.mubr.bf16.gmra.mrb[0].mxu0 %v2873
    %v2949 = vpop.f32.mrb[0].mxu0
    %v2950 = vadd.f32 0.0, %v2949
    %v2951 = vpop.f32.mrb[0].mxu0
    %v2952 = vpop.f32.mrb[0].mxu0
    %v2953 = vpop.f32.mrb[0].mxu0
    %2954 = vdwg.mxu0
    %v2955 = vld [vmem:[%s1446] sm:$0xff]
    %v2956 = vld [vmem:[%s1446 + $0x8] sm:$0xf]
    %v2957 = vunpack.c.l.bf16 %v2955
    %v2958 = vunpack.c.h.bf16 %v2955
    %v2959 = vunpack.c.l.bf16 %v2956
    %v2960 = vadd.f32 %v2957, %v2909
    %v2961 = vxor.u32 %v2960, 2147483648
    %v2962 = vmul.f32 %v2961, 1.442695
    %v2963 = vpow.pop %v2962
    %v2964 = vadd.f32 %v2963, 1.0
    %v2965 = vrcp.pop %v2964
    %v2966 = vmul.f32 1.0, %v2965
    %v2967 = vadd.f32 %v2958, %v2911
    %v2968 = vxor.u32 %v2967, 2147483648
    %v2969 = vmul.f32 %v2968, 1.442695
    %v2970 = vpow.pop %v2969
    %v2971 = vadd.f32 %v2970, 1.0
    %v2972 = vrcp.pop %v2971
    %v2973 = vmul.f32 1.0, %v2972
    %v2974 = vadd.f32 %v2950, %v2209
    %v2975 = vmul.f32 %v2966, %v2974
    %v2976 = vadd.f32 %v2959, %v2975
    %v2977 = vtanh.pop %v2976
    %v2978 = vsub.f32 1.0, %v2973
    %v2979 = vmul.f32 %v2978, %v2977
    %v2980 = vmul.f32 %v2973, %v2872
    %v2981 = vadd.f32 %v2979, %v2980
    %v2982 = vmax.f32 %v2981, 0.0
    %v2983 = vpack.c.bf16 %v2982, %v2982
    %v2984 = vld [vmem:[%s9] sm:$0xf]
    %v2985 = vld [vmem:[%s9 + $0x4] sm:$0xf]
    %v2986 = vld [vmem:[%s9 + $0x8] sm:$0xf]
    %v2987 = vld [vmem:[%s9 + $0xc] sm:$0xf]
    %v2988 = vld [vmem:[%s9 + $0x10] sm:$0xf]
    %v2989 = vld [vmem:[%s9 + $0x14] sm:$0xf]
    %v2990 = vld [vmem:[%s9 + $0x18] sm:$0xf]
    %v2991 = vld [vmem:[%s9 + $0x1c] sm:$0xf]
    %v2992 = vld [vmem:[%s9 + $0x20] sm:$0xf]
    %v2993 = vld [vmem:[%s9 + $0x24] sm:$0xf]
    %v2994 = vld [vmem:[%s9 + $0x28] sm:$0xf]
    %v2995 = vld [vmem:[%s9 + $0x2c] sm:$0xf]
    %v2996 = vld [vmem:[%s9 + $0x30] sm:$0xf]
    %v2997 = vld [vmem:[%s9 + $0x34] sm:$0xf]
    %v2998 = vld [vmem:[%s9 + $0x38] sm:$0xf]
    %v2999 = vld [vmem:[%s9 + $0x3c] sm:$0xf]
    %v3000 = vld [vmem:[%s10] sm:$0x1]
    %v3002 = vlaneseq
    %v3003 = vshrl.u32 %v3002, 7
    %v3004 = vsub.s32 0, %v3003
    %v3005 = vrot.slane %v3000, %v3004
    %v3023 = vunpack.c.l.b16 %v2984
    %v3024 = vunpack.c.l.b16 %v2985
    %v3025 = vunpack.c.l.b16 %v2986
    %v3026 = vunpack.c.l.b16 %v2987
    %v3027 = vunpack.c.l.b16 %v2988
    %v3028 = vunpack.c.l.b16 %v2989
    %v3029 = vunpack.c.l.b16 %v2990
    %v3030 = vunpack.c.l.b16 %v2991
    %v3031 = vunpack.c.l.b16 %v2992
    %v3032 = vunpack.c.l.b16 %v2993
    %v3033 = vunpack.c.l.b16 %v2994
    %v3034 = vunpack.c.l.b16 %v2995
    %v3035 = vunpack.c.l.b16 %v2996
    %v3036 = vunpack.c.l.b16 %v2997
    %v3037 = vunpack.c.l.b16 %v2998
    %v3038 = vunpack.c.l.b16 %v2999
    %v3039 = vpack.c.b16 %v3024, %v3023
    %v3040 = vpack.c.b16 %v3026, %v3025
    %v3041 = vpack.c.b16 %v3028, %v3027
    %v3042 = vpack.c.b16 %v3030, %v3029
    %v3043 = vpack.c.b16 %v3032, %v3031
    %v3044 = vpack.c.b16 %v3034, %v3033
    %v3045 = vpack.c.b16 %v3036, %v3035
    %v3046 = vpack.c.b16 %v3038, %v3037
    %3055 = vmatprep.subr.bf16.mxu0 0
    %3056 = vmatpush1.bf16.msra.mxu0 %v3039
    %3057 = vmatprep.subr.bf16.mxu0 0
    %3058 = vmatpush1.bf16.msra.mxu0 %v3040
    %3059 = vmatprep.subr.bf16.mxu0 0
    %3060 = vmatpush1.bf16.msra.mxu0 %v3041
    %3061 = vmatprep.subr.bf16.mxu0 0
    %3062 = vmatpush1.bf16.msra.mxu0 %v3042
    %3063 = vmatprep.subr.bf16.mxu0 0
    %3064 = vmatpush1.bf16.msra.mxu0 %v3043
    %3065 = vmatprep.subr.bf16.mxu0 0
    %3066 = vmatpush1.bf16.msra.mxu0 %v3044
    %3067 = vmatprep.subr.bf16.mxu0 0
    %3068 = vmatpush1.bf16.msra.mxu0 %v3045
    %3069 = vmatprep.subr.bf16.mxu0 0
    %3070 = vmatpush1.bf16.msra.mxu0 %v3046
    %3071 = vmatprep.subr.bf16.mxu0 0
    %3072 = vmatpush1.bf16.msra.mxu0 0
    %3073 = vmatprep.subr.bf16.mxu0 0
    %3074 = vmatpush1.bf16.msra.mxu0 0
    %3075 = vmatprep.subr.bf16.mxu0 0
    %3076 = vmatpush1.bf16.msra.mxu0 0
    %3077 = vmatprep.subr.bf16.mxu0 0
    %3078 = vmatpush1.bf16.msra.mxu0 0
    %3079 = vmatprep.subr.bf16.mxu0 0
    %3080 = vmatpush1.bf16.msra.mxu0 0
    %3081 = vmatprep.subr.bf16.mxu0 0
    %3082 = vmatpush1.bf16.msra.mxu0 0
    %3083 = vmatprep.subr.bf16.mxu0 0
    %3084 = vmatpush1.bf16.msra.mxu0 0
    %3085 = vmatprep.subr.bf16.mxu0 0
    %3086 = vmatpush1.bf16.msra.mxu0 0
    %3087 = vmatprep.mubr.bf16.mxu0 0
    %3088 = vmatmul.mubr.bf16.gmra.mrb[0].mxu0 %v2983
    %v3089 = vpop.f32.mrb[0].mxu0
    %v3090 = vadd.f32 %v3005, %v3089
    %v3091 = vpop.f32.mrb[0].mxu0
    %v3092 = vpop.f32.mrb[0].mxu0
    %v3093 = vpop.f32.mrb[0].mxu0
    %3094 = vdwg.mxu0
    %vm3095 = vcmask 31744
    %3096 = vst.msk [vmem:[%s11] sm:$0xff] %vm3095, %v3090
    // Predicated region
    $region58: #{gru_model_forward.1} parent=1 // pred_check
      _
    $region59: #{gru_model_forward.1} parent=1 // pred_check_branch
      %3098 = sbr.rel (0) target = $region61
    $region60: #{gru_model_forward.1} parent=1 // pred_region
      _
    $region61: #{gru_model_forward.1} parent=1 // pred_fallthru
      _
    // Predicated region
    $region62: #{gru_model_forward.1} parent=1 // pred_check
      _
    $region63: #{gru_model_forward.1} parent=1 // pred_check_branch
      %3100 = sbr.rel (0) target = $region65
    $region64: #{gru_model_forward.1} parent=1 // pred_region
      _
    $region65: #{gru_model_forward.1} parent=1 // pred_fallthru
      _
    %3101 = vsyncpa [#allocation5], 1
    %3102 = vsyncpa [#allocation7], 1

</llo_original>
